<compile_context>
chip_gen: v7x
topology: tpu7x:2x2x1
jax: 0.10.0
libtpu: 0.0.40
codegen_flags: <defaults>
</compile_context>

<pallas_src>
import functools

import jax
import jax.numpy as jnp
from jax import lax
from jax.experimental import pallas as pl
from jax.experimental.pallas import tpu as pltpu


def _encoder_kernel(x_ref, w1_ref, b1_ref, w2_ref, b2_ref, w3_ref, b3_ref,
                    w4_ref, b4_ref, o_ref, acc_ref, *, H, W, pad):
    """Fused DenseFuse encoder for one batch element (kn2row formulation).

    x_ref:   (1, 1, H*W)            input tile (flattened NCHW, 1 channel)
    w*_ref:  (144, cin)             kn2row-packed weights (9 taps x 16 cout)
    b*_ref:  (16, 1)                bias
    o_ref:   (1, 64, H*W)           fused output, already channel-major (NCHW)
    acc_ref: (16, H*W + 2*pad) VMEM flat-padded per-layer tap accumulator
    """
    HW = H * W

    # Column index of every flattened pixel; masks the horizontally shifted
    # taps that would otherwise wrap across row boundaries in the flat layout.
    col = jax.lax.broadcasted_iota(jnp.int32, (1, HW), 1) % W
    not_first_col = col != 0          # valid source pixels for dw == 2 taps
    not_last_col = col != (W - 1)     # valid source pixels for dw == 0 taps

    def accumulate_taps(y_all, b_ref, relu, c_off):
        """Shift-add the 9 tap slices of y_all (144, HW) into o_ref[c_off:+16]."""
        # Center tap (dh=1, dw=1) first, with a plain assignment: no zero-init
        # of acc_ref is ever needed.  The flat pads absorb out-of-image row
        # contributions and are never read back.
        acc_ref[:, pad:pad + HW] = y_all[4 * 16:5 * 16, :]
        for k in (0, 1, 2, 3, 5, 6, 7, 8):
            dh, dw = k // 3, k % 3
            shift = -(dh - 1) * W - (dw - 1)
            yk = y_all[k * 16:(k + 1) * 16, :]
            if dw == 0:                                  # would wrap past col W-1
                yk = jnp.where(not_last_col, yk, 0.0)
            elif dw == 2:                                # would wrap past col 0
                yk = jnp.where(not_first_col, yk, 0.0)
            acc_ref[:, pad + shift:pad + shift + HW] += yk
        out = acc_ref[:, pad:pad + HW] + b_ref[...]      # (16, HW) + (16, 1)
        if relu:
            out = jnp.maximum(out, 0.0)
        # torch.cat([x, out], 1) == append 16 channels at the next channel
        # offset of the VMEM-resident, already-NCHW output block.
        o_ref[0, c_off:c_off + 16, :] = out

    # Conv1 (1 -> 16, ReLU). K == 1, so an exact f32 VPU broadcast-multiply
    # replaces the degenerate (144, 1) x (1, HW) matmul.
    y1 = w1_ref[...] * x_ref[0]                          # (144, 1) * (1, HW)
    accumulate_taps(y1, b1_ref, relu=True, c_off=0)

    # DenseConv1..3 (cin -> 16, no ReLU): one wide MXU matmul per layer.
    for w_ref, b_ref, cin, c_off in ((w2_ref, b2_ref, 16, 16),
                                     (w3_ref, b3_ref, 32, 32),
                                     (w4_ref, b4_ref, 48, 48)):
        xin = o_ref[0, 0:cin, :].astype(w_ref.dtype)     # (cin, HW)
        y = jnp.dot(w_ref[...], xin, preferred_element_type=jnp.float32)
        accumulate_taps(y, b_ref, relu=False, c_off=c_off)


def init_encoder_params(key):
    """Deterministic synthetic parameters matching Encoder.__init__ shapes."""
    shapes = {
        "conv1": (16, 1, 3, 3),
        "dense1": (16, 16, 3, 3),
        "dense2": (16, 32, 3, 3),
        "dense3": (16, 48, 3, 3),
    }
    params = {}
    keys = jax.random.split(key, len(shapes) * 2)
    for i, (name, wshape) in enumerate(shapes.items()):
        params[f"{name}_w"] = (
            0.1 * jax.random.normal(keys[2 * i], wshape, dtype=jnp.float32))
        params[f"{name}_b"] = (
            0.05 * jax.random.normal(keys[2 * i + 1], (wshape[0],),
                                     dtype=jnp.float32))
    return params


def pack_encoder_params(params, use_bf16=True):
    """Hoisted one-time kn2row weight packing: (Cout,Cin,3,3) -> (9*Cout, Cin).

    Row index = (dh*3 + dw)*16 + cout, so each 16-row slice of the matmul
    output is one spatial tap. Dense-layer weights are optionally cast to bf16
    (MXU-native); conv1 stays f32 (it is computed on the VPU, exactly).
    """
    packed = {}
    for name in ("conv1", "dense1", "dense2", "dense3"):
        w = params[f"{name}_w"]
        cout, cin = w.shape[0], w.shape[1]
        wp = jnp.transpose(w, (2, 3, 0, 1)).reshape(9 * cout, cin)
        if name != "conv1" and use_bf16:
            wp = wp.astype(jnp.bfloat16)
        else:
            wp = wp.astype(jnp.float32)
        packed[f"{name}_w"] = wp
        packed[f"{name}_b"] = params[f"{name}_b"].reshape(cout, 1).astype(jnp.float32)
    return packed


def encoder_forward(x_nchw, packed):
    """Fused Pallas Encoder. x_nchw: (N, 1, H, W) -> (N, 64, H, W)."""
    N, C, H, W = x_nchw.shape
    assert C == 1, "Encoder expects a single input channel"
    # TODO(synk): row-tile (grid=(N, H//TH), 1-row halo) for larger images;
    # whole-image-per-core residency is only safe up to ~128x128.
    assert H * W <= 128 * 128, "whole-image kernel: add row tiling for larger images"
    HW = H * W
    x = x_nchw.reshape(N, 1, HW).astype(jnp.float32)      # free reshape (row-major)

    # Flat pad of the tap accumulator: >= W+1 on each side, lane-aligned so the
    # center region starts on a 128-lane boundary.
    pad = pl.cdiv(W + 1, 128) * 128
    kernel = functools.partial(_encoder_kernel, H=H, W=W, pad=pad)

    def full_spec(a):
        return pl.BlockSpec(a.shape, lambda n: (0,) * a.ndim)

    y = pl.pallas_call(
        kernel,
        out_shape=jax.ShapeDtypeStruct((N, 64, HW), jnp.float32),
        grid=(N,),
        in_specs=[
            pl.BlockSpec((1, 1, HW), lambda n: (n, 0, 0)),
            full_spec(packed["conv1_w"]), full_spec(packed["conv1_b"]),
            full_spec(packed["dense1_w"]), full_spec(packed["dense1_b"]),
            full_spec(packed["dense2_w"]), full_spec(packed["dense2_b"]),
            full_spec(packed["dense3_w"]), full_spec(packed["dense3_b"]),
        ],
        out_specs=pl.BlockSpec((1, 64, HW), lambda n: (n, 0, 0)),
        scratch_shapes=[
            pltpu.VMEM((16, HW + 2 * pad), jnp.float32),   # flat tap accumulator
        ],
        compiler_params=pltpu.CompilerParams(
            dimension_semantics=("parallel",),
            vmem_limit_bytes=32 * 1024 * 1024),
    )(x,
      packed["conv1_w"], packed["conv1_b"],
      packed["dense1_w"], packed["dense1_b"],
      packed["dense2_w"], packed["dense2_b"],
      packed["dense3_w"], packed["dense3_b"])

    return y.reshape(N, 64, H, W)     # free: row-major metadata reshape (NCHW already)


# ---------------------------------------------------------------------------
# Pure-JAX reference (lax.conv) for a correctness check.
# ---------------------------------------------------------------------------
def _conv_ref(x_nchw, w, b, relu=False):
    out = lax.conv_general_dilated(
        x_nchw, w, window_strides=(1, 1), padding=((1, 1), (1, 1)),
        dimension_numbers=("NCHW", "OIHW", "NCHW"))
    out = out + b.reshape(1, -1, 1, 1)
    if relu:
        out = jnp.maximum(out, 0.0)
    return out


def encoder_ref(x_nchw, params):
    x = _conv_ref(x_nchw, params["conv1_w"], params["conv1_b"], relu=True)
    for i in range(3):
        out = _conv_ref(x, params[f"dense{i + 1}_w"], params[f"dense{i + 1}_b"])
        x = jnp.concatenate([x, out], axis=1)
    return x


if __name__ == "__main__":
    key = jax.random.PRNGKey(0)
    k_param, k_x = jax.random.split(key)

    params = init_encoder_params(k_param)
    x = jax.random.normal(k_x, (2, 1, 16, 16), dtype=jnp.float32)   # NCHW

    y_ref = jax.block_until_ready(encoder_ref(x, params))

    # Exact-precision path (f32 MXU operands): tight tolerance.
    packed_f32 = pack_encoder_params(params, use_bf16=False)
    y_f32 = jax.block_until_ready(jax.jit(encoder_forward)(x, packed_f32))
    assert y_f32.shape == (2, 64, 16, 16), y_f32.shape
    assert jnp.allclose(y_f32, y_ref, atol=1e-4, rtol=1e-4), (
        float(jnp.max(jnp.abs(y_f32 - y_ref))))

    # Fast path (bf16 MXU operands, f32 accumulation): looser tolerance.
    packed_bf16 = pack_encoder_params(params, use_bf16=True)
    y_bf16 = jax.block_until_ready(jax.jit(encoder_forward)(x, packed_bf16))
    assert y_bf16.shape == (2, 64, 16, 16), y_bf16.shape
    assert jnp.allclose(y_bf16, y_ref, atol=1e-1, rtol=5e-2), (
        float(jnp.max(jnp.abs(y_bf16 - y_ref))))

    print("KERNEL_OK")
</pallas_src>

<mosaic_0001>
module attributes {stable_mosaic.version = 11 : i64} {
  func.func @_encoder_kernel(%arg0: i32, %arg1: memref<1x1x256xf32, #tpu.memory_space<vmem>>, %arg2: memref<144x1xf32, #tpu.memory_space<vmem>>, %arg3: memref<16x1xf32, #tpu.memory_space<vmem>>, %arg4: memref<144x16xf32, #tpu.memory_space<vmem>>, %arg5: memref<16x1xf32, #tpu.memory_space<vmem>>, %arg6: memref<144x32xf32, #tpu.memory_space<vmem>>, %arg7: memref<16x1xf32, #tpu.memory_space<vmem>>, %arg8: memref<144x48xf32, #tpu.memory_space<vmem>>, %arg9: memref<16x1xf32, #tpu.memory_space<vmem>>, %arg10: memref<1x64x256xf32, #tpu.memory_space<vmem>>, %arg11: memref<16x512xf32, #tpu.memory_space<vmem>>) attributes {dimension_semantics = [#tpu.dimension_semantics<parallel>], iteration_bounds = array<i64: 2>, scalar_prefetch = 0 : i64, scratch_operands = 1 : i64, tpu.core_type = #tpu.core_type<tc>, window_params = [{transform_indices = @transform_0, window_bounds = array<i64: 1, 1, 256>}, {pipeline_mode = #tpu.pipeline_mode<synchronous>, transform_indices = @transform_1, window_bounds = array<i64: 144, 1>}, {pipeline_mode = #tpu.pipeline_mode<synchronous>, transform_indices = @transform_2, window_bounds = array<i64: 16, 1>}, {pipeline_mode = #tpu.pipeline_mode<synchronous>, transform_indices = @transform_3, window_bounds = array<i64: 144, 16>}, {pipeline_mode = #tpu.pipeline_mode<synchronous>, transform_indices = @transform_4, window_bounds = array<i64: 16, 1>}, {pipeline_mode = #tpu.pipeline_mode<synchronous>, transform_indices = @transform_5, window_bounds = array<i64: 144, 32>}, {pipeline_mode = #tpu.pipeline_mode<synchronous>, transform_indices = @transform_6, window_bounds = array<i64: 16, 1>}, {pipeline_mode = #tpu.pipeline_mode<synchronous>, transform_indices = @transform_7, window_bounds = array<i64: 144, 48>}, {pipeline_mode = #tpu.pipeline_mode<synchronous>, transform_indices = @transform_8, window_bounds = array<i64: 16, 1>}, {transform_indices = @transform_9, window_bounds = array<i64: 1, 64, 256>}]} {
    %0 = tpu.iota {dimensions = array<i32: 1>} : vector<1x256xi32>
    %c16_i32 = arith.constant 16 : i32
    %c0_i32 = arith.constant 0 : i32
    %1 = arith.cmpi eq, %c16_i32, %c0_i32 : i32
    %c1_i32 = arith.constant 1 : i32
    %2 = arith.select %1, %c1_i32, %c16_i32 : i32
    %3 = vector.broadcast %2 : i32 to vector<1x256xi32>
    %4 = arith.remsi %0, %3 : vector<1x256xi32>
    %c0_i32_0 = arith.constant 0 : i32
    %5 = vector.broadcast %c0_i32_0 : i32 to vector<1x256xi32>
    %6 = arith.cmpi ne, %4, %5 : vector<1x256xi32>
    %c0_i32_1 = arith.constant 0 : i32
    %7 = vector.broadcast %c0_i32_1 : i32 to vector<1x256xi32>
    %8 = arith.cmpi slt, %4, %7 : vector<1x256xi32>
    %c0_i32_2 = arith.constant 0 : i32
    %9 = arith.cmpi slt, %2, %c0_i32_2 : i32
    %10 = vector.broadcast %9 : i1 to vector<1x256xi1>
    %11 = vector.broadcast %10 : vector<1x256xi1> to vector<1x256xi1>
    %12 = arith.xori %8, %11 : vector<1x256xi1>
    %13 = arith.andi %12, %6 : vector<1x256xi1>
    %14 = vector.broadcast %2 : i32 to vector<1x256xi32>
    %15 = arith.addi %4, %14 : vector<1x256xi32>
    %16 = arith.select %13, %15, %4 : vector<1x256xi1>, vector<1x256xi32>
    %c0_i32_3 = arith.constant 0 : i32
    %17 = vector.broadcast %c0_i32_3 : i32 to vector<1x256xi32>
    %18 = arith.cmpi ne, %16, %17 : vector<1x256xi32>
    %c15_i32 = arith.constant 15 : i32
    %19 = vector.broadcast %c15_i32 : i32 to vector<1x256xi32>
    %20 = arith.cmpi ne, %16, %19 : vector<1x256xi32>
    %c0 = arith.constant 0 : index
    %c0_4 = arith.constant 0 : index
    %21 = vector.load %arg2[%c0, %c0_4] : memref<144x1xf32, #tpu.memory_space<vmem>>, vector<144x1xf32>
    %c0_5 = arith.constant 0 : index
    %c0_6 = arith.constant 0 : index
    %c0_7 = arith.constant 0 : index
    %22 = vector.load %arg1[%c0_5, %c0_6, %c0_7] : memref<1x1x256xf32, #tpu.memory_space<vmem>>, vector<1x1x256xf32>
    %23 = vector.shape_cast %22 : vector<1x1x256xf32> to vector<1x256xf32>
    %24 = vector.broadcast %21 : vector<144x1xf32> to vector<144x256xf32>
    %25 = vector.broadcast %23 : vector<1x256xf32> to vector<144x256xf32>
    %26 = arith.mulf %24, %25 : vector<144x256xf32>
    %27 = vector.extract_strided_slice %26 {offsets = [64, 0], sizes = [16, 256], strides = [1, 1]} : vector<144x256xf32> to vector<16x256xf32>
    %c0_8 = arith.constant 0 : index
    %c128 = arith.constant 128 : index
    %28 = vector.load %arg11[%c0_8, %c128] : memref<16x512xf32, #tpu.memory_space<vmem>>, vector<16x256xf32>
    tpu.vector_store %arg11[%c0_8, %c128], %27 {strides = array<i32>} : memref<16x512xf32, #tpu.memory_space<vmem>>, vector<16x256xf32>,
    %29 = vector.extract_strided_slice %26 {offsets = [0, 0], sizes = [16, 256], strides = [1, 1]} : vector<144x256xf32> to vector<16x256xf32>
    %cst = arith.constant 0.000000e+00 : f32
    %30 = vector.shape_cast %20 : vector<1x256xi1> to vector<1x256xi1>
    %31 = vector.broadcast %30 : vector<1x256xi1> to vector<16x256xi1>
    %32 = vector.broadcast %cst : f32 to vector<16x256xf32>
    %33 = arith.select %31, %29, %32 : vector<16x256xi1>, vector<16x256xf32>
    %c0_9 = arith.constant 0 : index
    %c145 = arith.constant 145 : index
    %34 = vector.load %arg11[%c0_9, %c145] : memref<16x512xf32, #tpu.memory_space<vmem>>, vector<16x256xf32>
    %35 = arith.addf %34, %33 : vector<16x256xf32>
    %c0_10 = arith.constant 0 : index
    %c145_11 = arith.constant 145 : index
    %36 = vector.load %arg11[%c0_10, %c145_11] : memref<16x512xf32, #tpu.memory_space<vmem>>, vector<16x256xf32>
    tpu.vector_store %arg11[%c0_10, %c145_11], %35 {strides = array<i32>} : memref<16x512xf32, #tpu.memory_space<vmem>>, vector<16x256xf32>,
    %37 = vector.extract_strided_slice %26 {offsets = [16, 0], sizes = [16, 256], strides = [1, 1]} : vector<144x256xf32> to vector<16x256xf32>
    %c0_12 = arith.constant 0 : index
    %c144 = arith.constant 144 : index
    %38 = vector.load %arg11[%c0_12, %c144] : memref<16x512xf32, #tpu.memory_space<vmem>>, vector<16x256xf32>
    %39 = arith.addf %38, %37 : vector<16x256xf32>
    %c0_13 = arith.constant 0 : index
    %c144_14 = arith.constant 144 : index
    %40 = vector.load %arg11[%c0_13, %c144_14] : memref<16x512xf32, #tpu.memory_space<vmem>>, vector<16x256xf32>
    tpu.vector_store %arg11[%c0_13, %c144_14], %39 {strides = array<i32>} : memref<16x512xf32, #tpu.memory_space<vmem>>, vector<16x256xf32>,
    %41 = vector.extract_strided_slice %26 {offsets = [32, 0], sizes = [16, 256], strides = [1, 1]} : vector<144x256xf32> to vector<16x256xf32>
    %cst_15 = arith.constant 0.000000e+00 : f32
    %42 = vector.shape_cast %18 : vector<1x256xi1> to vector<1x256xi1>
    %43 = vector.broadcast %42 : vector<1x256xi1> to vector<16x256xi1>
    %44 = vector.broadcast %cst_15 : f32 to vector<16x256xf32>
    %45 = arith.select %43, %41, %44 : vector<16x256xi1>, vector<16x256xf32>
    %c0_16 = arith.constant 0 : index
    %c143 = arith.constant 143 : index
    %46 = vector.load %arg11[%c0_16, %c143] : memref<16x512xf32, #tpu.memory_space<vmem>>, vector<16x256xf32>
    %47 = arith.addf %46, %45 : vector<16x256xf32>
    %c0_17 = arith.constant 0 : index
    %c143_18 = arith.constant 143 : index
    %48 = vector.load %arg11[%c0_17, %c143_18] : memref<16x512xf32, #tpu.memory_space<vmem>>, vector<16x256xf32>
    tpu.vector_store %arg11[%c0_17, %c143_18], %47 {strides = array<i32>} : memref<16x512xf32, #tpu.memory_space<vmem>>, vector<16x256xf32>,
    %49 = vector.extract_strided_slice %26 {offsets = [48, 0], sizes = [16, 256], strides = [1, 1]} : vector<144x256xf32> to vector<16x256xf32>
    %cst_19 = arith.constant 0.000000e+00 : f32
    %50 = vector.shape_cast %20 : vector<1x256xi1> to vector<1x256xi1>
    %51 = vector.broadcast %50 : vector<1x256xi1> to vector<16x256xi1>
    %52 = vector.broadcast %cst_19 : f32 to vector<16x256xf32>
    %53 = arith.select %51, %49, %52 : vector<16x256xi1>, vector<16x256xf32>
    %c0_20 = arith.constant 0 : index
    %c129 = arith.constant 129 : index
    %54 = vector.load %arg11[%c0_20, %c129] : memref<16x512xf32, #tpu.memory_space<vmem>>, vector<16x256xf32>
    %55 = arith.addf %54, %53 : vector<16x256xf32>
    %c0_21 = arith.constant 0 : index
    %c129_22 = arith.constant 129 : index
    %56 = vector.load %arg11[%c0_21, %c129_22] : memref<16x512xf32, #tpu.memory_space<vmem>>, vector<16x256xf32>
    tpu.vector_store %arg11[%c0_21, %c129_22], %55 {strides = array<i32>} : memref<16x512xf32, #tpu.memory_space<vmem>>, vector<16x256xf32>,
    %57 = vector.extract_strided_slice %26 {offsets = [80, 0], sizes = [16, 256], strides = [1, 1]} : vector<144x256xf32> to vector<16x256xf32>
    %cst_23 = arith.constant 0.000000e+00 : f32
    %58 = vector.shape_cast %18 : vector<1x256xi1> to vector<1x256xi1>
    %59 = vector.broadcast %58 : vector<1x256xi1> to vector<16x256xi1>
    %60 = vector.broadcast %cst_23 : f32 to vector<16x256xf32>
    %61 = arith.select %59, %57, %60 : vector<16x256xi1>, vector<16x256xf32>
    %c0_24 = arith.constant 0 : index
    %c127 = arith.constant 127 : index
    %62 = vector.load %arg11[%c0_24, %c127] : memref<16x512xf32, #tpu.memory_space<vmem>>, vector<16x256xf32>
    %63 = arith.addf %62, %61 : vector<16x256xf32>
    %c0_25 = arith.constant 0 : index
    %c127_26 = arith.constant 127 : index
    %64 = vector.load %arg11[%c0_25, %c127_26] : memref<16x512xf32, #tpu.memory_space<vmem>>, vector<16x256xf32>
    tpu.vector_store %arg11[%c0_25, %c127_26], %63 {strides = array<i32>} : memref<16x512xf32, #tpu.memory_space<vmem>>, vector<16x256xf32>,
    %65 = vector.extract_strided_slice %26 {offsets = [96, 0], sizes = [16, 256], strides = [1, 1]} : vector<144x256xf32> to vector<16x256xf32>
    %cst_27 = arith.constant 0.000000e+00 : f32
    %66 = vector.shape_cast %20 : vector<1x256xi1> to vector<1x256xi1>
    %67 = vector.broadcast %66 : vector<1x256xi1> to vector<16x256xi1>
    %68 = vector.broadcast %cst_27 : f32 to vector<16x256xf32>
    %69 = arith.select %67, %65, %68 : vector<16x256xi1>, vector<16x256xf32>
    %c0_28 = arith.constant 0 : index
    %c113 = arith.constant 113 : index
    %70 = vector.load %arg11[%c0_28, %c113] : memref<16x512xf32, #tpu.memory_space<vmem>>, vector<16x256xf32>
    %71 = arith.addf %70, %69 : vector<16x256xf32>
    %c0_29 = arith.constant 0 : index
    %c113_30 = arith.constant 113 : index
    %72 = vector.load %arg11[%c0_29, %c113_30] : memref<16x512xf32, #tpu.memory_space<vmem>>, vector<16x256xf32>
    tpu.vector_store %arg11[%c0_29, %c113_30], %71 {strides = array<i32>} : memref<16x512xf32, #tpu.memory_space<vmem>>, vector<16x256xf32>,
    %73 = vector.extract_strided_slice %26 {offsets = [112, 0], sizes = [16, 256], strides = [1, 1]} : vector<144x256xf32> to vector<16x256xf32>
    %c0_31 = arith.constant 0 : index
    %c112 = arith.constant 112 : index
    %74 = vector.load %arg11[%c0_31, %c112] : memref<16x512xf32, #tpu.memory_space<vmem>>, vector<16x256xf32>
    %75 = arith.addf %74, %73 : vector<16x256xf32>
    %c0_32 = arith.constant 0 : index
    %c112_33 = arith.constant 112 : index
    %76 = vector.load %arg11[%c0_32, %c112_33] : memref<16x512xf32, #tpu.memory_space<vmem>>, vector<16x256xf32>
    tpu.vector_store %arg11[%c0_32, %c112_33], %75 {strides = array<i32>} : memref<16x512xf32, #tpu.memory_space<vmem>>, vector<16x256xf32>,
    %77 = vector.extract_strided_slice %26 {offsets = [128, 0], sizes = [16, 256], strides = [1, 1]} : vector<144x256xf32> to vector<16x256xf32>
    %cst_34 = arith.constant 0.000000e+00 : f32
    %78 = vector.shape_cast %18 : vector<1x256xi1> to vector<1x256xi1>
    %79 = vector.broadcast %78 : vector<1x256xi1> to vector<16x256xi1>
    %80 = vector.broadcast %cst_34 : f32 to vector<16x256xf32>
    %81 = arith.select %79, %77, %80 : vector<16x256xi1>, vector<16x256xf32>
    %c0_35 = arith.constant 0 : index
    %c111 = arith.constant 111 : index
    %82 = vector.load %arg11[%c0_35, %c111] : memref<16x512xf32, #tpu.memory_space<vmem>>, vector<16x256xf32>
    %83 = arith.addf %82, %81 : vector<16x256xf32>
    %c0_36 = arith.constant 0 : index
    %c111_37 = arith.constant 111 : index
    %84 = vector.load %arg11[%c0_36, %c111_37] : memref<16x512xf32, #tpu.memory_space<vmem>>, vector<16x256xf32>
    tpu.vector_store %arg11[%c0_36, %c111_37], %83 {strides = array<i32>} : memref<16x512xf32, #tpu.memory_space<vmem>>, vector<16x256xf32>,
    %c0_38 = arith.constant 0 : index
    %c128_39 = arith.constant 128 : index
    %85 = vector.load %arg11[%c0_38, %c128_39] : memref<16x512xf32, #tpu.memory_space<vmem>>, vector<16x256xf32>
    %c0_40 = arith.constant 0 : index
    %c0_41 = arith.constant 0 : index
    %86 = vector.load %arg3[%c0_40, %c0_41] : memref<16x1xf32, #tpu.memory_space<vmem>>, vector<16x1xf32>
    %87 = vector.broadcast %86 : vector<16x1xf32> to vector<16x256xf32>
    %88 = arith.addf %85, %87 : vector<16x256xf32>
    %cst_42 = arith.constant 0.000000e+00 : f32
    %89 = vector.broadcast %cst_42 : f32 to vector<16x256xf32>
    %90 = arith.maximumf %88, %89 : vector<16x256xf32>
    %c0_43 = arith.constant 0 : index
    %c0_44 = arith.constant 0 : index
    %c0_45 = arith.constant 0 : index
    %91 = vector.load %arg10[%c0_43, %c0_44, %c0_45] : memref<1x64x256xf32, #tpu.memory_space<vmem>>, vector<1x16x256xf32>
    %92 = vector.shape_cast %91 : vector<1x16x256xf32> to vector<16x256xf32>
    %93 = vector.shape_cast %90 : vector<16x256xf32> to vector<1x16x256xf32>
    tpu.vector_store %arg10[%c0_43, %c0_44, %c0_45], %93 {strides = array<i32>} : memref<1x64x256xf32, #tpu.memory_space<vmem>>, vector<1x16x256xf32>,
    %c0_46 = arith.constant 0 : index
    %c0_47 = arith.constant 0 : index
    %c0_48 = arith.constant 0 : index
    %94 = vector.load %arg10[%c0_46, %c0_47, %c0_48] : memref<1x64x256xf32, #tpu.memory_space<vmem>>, vector<1x16x256xf32>
    %95 = vector.shape_cast %94 : vector<1x16x256xf32> to vector<16x256xf32>
    %c0_49 = arith.constant 0 : index
    %c0_50 = arith.constant 0 : index
    %96 = vector.load %arg4[%c0_49, %c0_50] : memref<144x16xf32, #tpu.memory_space<vmem>>, vector<144x16xf32>
    %cst_51 = arith.constant dense<0.000000e+00> : vector<144x256xf32>
    %97 = tpu.matmul %96, %95, %cst_51 {dimension_numbers = #tpu.dot_dimension_numbers<[1], [0], [0], [1], [0, 0, 1, 1], [], []>} : vector<144x16xf32>, vector<16x256xf32>, vector<144x256xf32> -> vector<144x256xf32>
    %98 = vector.extract_strided_slice %97 {offsets = [64, 0], sizes = [16, 256], strides = [1, 1]} : vector<144x256xf32> to vector<16x256xf32>
    %c0_52 = arith.constant 0 : index
    %c128_53 = arith.constant 128 : index
    %99 = vector.load %arg11[%c0_52, %c128_53] : memref<16x512xf32, #tpu.memory_space<vmem>>, vector<16x256xf32>
    tpu.vector_store %arg11[%c0_52, %c128_53], %98 {strides = array<i32>} : memref<16x512xf32, #tpu.memory_space<vmem>>, vector<16x256xf32>,
    %100 = vector.extract_strided_slice %97 {offsets = [0, 0], sizes = [16, 256], strides = [1, 1]} : vector<144x256xf32> to vector<16x256xf32>
    %cst_54 = arith.constant 0.000000e+00 : f32
    %101 = vector.shape_cast %20 : vector<1x256xi1> to vector<1x256xi1>
    %102 = vector.broadcast %101 : vector<1x256xi1> to vector<16x256xi1>
    %103 = vector.broadcast %cst_54 : f32 to vector<16x256xf32>
    %104 = arith.select %102, %100, %103 : vector<16x256xi1>, vector<16x256xf32>
    %c0_55 = arith.constant 0 : index
    %c145_56 = arith.constant 145 : index
    %105 = vector.load %arg11[%c0_55, %c145_56] : memref<16x512xf32, #tpu.memory_space<vmem>>, vector<16x256xf32>
    %106 = arith.addf %105, %104 : vector<16x256xf32>
    %c0_57 = arith.constant 0 : index
    %c145_58 = arith.constant 145 : index
    %107 = vector.load %arg11[%c0_57, %c145_58] : memref<16x512xf32, #tpu.memory_space<vmem>>, vector<16x256xf32>
    tpu.vector_store %arg11[%c0_57, %c145_58], %106 {strides = array<i32>} : memref<16x512xf32, #tpu.memory_space<vmem>>, vector<16x256xf32>,
    %108 = vector.extract_strided_slice %97 {offsets = [16, 0], sizes = [16, 256], strides = [1, 1]} : vector<144x256xf32> to vector<16x256xf32>
    %c0_59 = arith.constant 0 : index
    %c144_60 = arith.constant 144 : index
    %109 = vector.load %arg11[%c0_59, %c144_60] : memref<16x512xf32, #tpu.memory_space<vmem>>, vector<16x256xf32>
    %110 = arith.addf %109, %108 : vector<16x256xf32>
    %c0_61 = arith.constant 0 : index
    %c144_62 = arith.constant 144 : index
    %111 = vector.load %arg11[%c0_61, %c144_62] : memref<16x512xf32, #tpu.memory_space<vmem>>, vector<16x256xf32>
    tpu.vector_store %arg11[%c0_61, %c144_62], %110 {strides = array<i32>} : memref<16x512xf32, #tpu.memory_space<vmem>>, vector<16x256xf32>,
    %112 = vector.extract_strided_slice %97 {offsets = [32, 0], sizes = [16, 256], strides = [1, 1]} : vector<144x256xf32> to vector<16x256xf32>
    %cst_63 = arith.constant 0.000000e+00 : f32
    %113 = vector.shape_cast %18 : vector<1x256xi1> to vector<1x256xi1>
    %114 = vector.broadcast %113 : vector<1x256xi1> to vector<16x256xi1>
    %115 = vector.broadcast %cst_63 : f32 to vector<16x256xf32>
    %116 = arith.select %114, %112, %115 : vector<16x256xi1>, vector<16x256xf32>
    %c0_64 = arith.constant 0 : index
    %c143_65 = arith.constant 143 : index
    %117 = vector.load %arg11[%c0_64, %c143_65] : memref<16x512xf32, #tpu.memory_space<vmem>>, vector<16x256xf32>
    %118 = arith.addf %117, %116 : vector<16x256xf32>
    %c0_66 = arith.constant 0 : index
    %c143_67 = arith.constant 143 : index
    %119 = vector.load %arg11[%c0_66, %c143_67] : memref<16x512xf32, #tpu.memory_space<vmem>>, vector<16x256xf32>
    tpu.vector_store %arg11[%c0_66, %c143_67], %118 {strides = array<i32>} : memref<16x512xf32, #tpu.memory_space<vmem>>, vector<16x256xf32>,
    %120 = vector.extract_strided_slice %97 {offsets = [48, 0], sizes = [16, 256], strides = [1, 1]} : vector<144x256xf32> to vector<16x256xf32>
    %cst_68 = arith.constant 0.000000e+00 : f32
    %121 = vector.shape_cast %20 : vector<1x256xi1> to vector<1x256xi1>
    %122 = vector.broadcast %121 : vector<1x256xi1> to vector<16x256xi1>
    %123 = vector.broadcast %cst_68 : f32 to vector<16x256xf32>
    %124 = arith.select %122, %120, %123 : vector<16x256xi1>, vector<16x256xf32>
    %c0_69 = arith.constant 0 : index
    %c129_70 = arith.constant 129 : index
    %125 = vector.load %arg11[%c0_69, %c129_70] : memref<16x512xf32, #tpu.memory_space<vmem>>, vector<16x256xf32>
    %126 = arith.addf %125, %124 : vector<16x256xf32>
    %c0_71 = arith.constant 0 : index
    %c129_72 = arith.constant 129 : index
    %127 = vector.load %arg11[%c0_71, %c129_72] : memref<16x512xf32, #tpu.memory_space<vmem>>, vector<16x256xf32>
    tpu.vector_store %arg11[%c0_71, %c129_72], %126 {strides = array<i32>} : memref<16x512xf32, #tpu.memory_space<vmem>>, vector<16x256xf32>,
    %128 = vector.extract_strided_slice %97 {offsets = [80, 0], sizes = [16, 256], strides = [1, 1]} : vector<144x256xf32> to vector<16x256xf32>
    %cst_73 = arith.constant 0.000000e+00 : f32
    %129 = vector.shape_cast %18 : vector<1x256xi1> to vector<1x256xi1>
    %130 = vector.broadcast %129 : vector<1x256xi1> to vector<16x256xi1>
    %131 = vector.broadcast %cst_73 : f32 to vector<16x256xf32>
    %132 = arith.select %130, %128, %131 : vector<16x256xi1>, vector<16x256xf32>
    %c0_74 = arith.constant 0 : index
    %c127_75 = arith.constant 127 : index
    %133 = vector.load %arg11[%c0_74, %c127_75] : memref<16x512xf32, #tpu.memory_space<vmem>>, vector<16x256xf32>
    %134 = arith.addf %133, %132 : vector<16x256xf32>
    %c0_76 = arith.constant 0 : index
    %c127_77 = arith.constant 127 : index
    %135 = vector.load %arg11[%c0_76, %c127_77] : memref<16x512xf32, #tpu.memory_space<vmem>>, vector<16x256xf32>
    tpu.vector_store %arg11[%c0_76, %c127_77], %134 {strides = array<i32>} : memref<16x512xf32, #tpu.memory_space<vmem>>, vector<16x256xf32>,
    %136 = vector.extract_strided_slice %97 {offsets = [96, 0], sizes = [16, 256], strides = [1, 1]} : vector<144x256xf32> to vector<16x256xf32>
    %cst_78 = arith.constant 0.000000e+00 : f32
    %137 = vector.shape_cast %20 : vector<1x256xi1> to vector<1x256xi1>
    %138 = vector.broadcast %137 : vector<1x256xi1> to vector<16x256xi1>
    %139 = vector.broadcast %cst_78 : f32 to vector<16x256xf32>
    %140 = arith.select %138, %136, %139 : vector<16x256xi1>, vector<16x256xf32>
    %c0_79 = arith.constant 0 : index
    %c113_80 = arith.constant 113 : index
    %141 = vector.load %arg11[%c0_79, %c113_80] : memref<16x512xf32, #tpu.memory_space<vmem>>, vector<16x256xf32>
    %142 = arith.addf %141, %140 : vector<16x256xf32>
    %c0_81 = arith.constant 0 : index
    %c113_82 = arith.constant 113 : index
    %143 = vector.load %arg11[%c0_81, %c113_82] : memref<16x512xf32, #tpu.memory_space<vmem>>, vector<16x256xf32>
    tpu.vector_store %arg11[%c0_81, %c113_82], %142 {strides = array<i32>} : memref<16x512xf32, #tpu.memory_space<vmem>>, vector<16x256xf32>,
    %144 = vector.extract_strided_slice %97 {offsets = [112, 0], sizes = [16, 256], strides = [1, 1]} : vector<144x256xf32> to vector<16x256xf32>
    %c0_83 = arith.constant 0 : index
    %c112_84 = arith.constant 112 : index
    %145 = vector.load %arg11[%c0_83, %c112_84] : memref<16x512xf32, #tpu.memory_space<vmem>>, vector<16x256xf32>
    %146 = arith.addf %145, %144 : vector<16x256xf32>
    %c0_85 = arith.constant 0 : index
    %c112_86 = arith.constant 112 : index
    %147 = vector.load %arg11[%c0_85, %c112_86] : memref<16x512xf32, #tpu.memory_space<vmem>>, vector<16x256xf32>
    tpu.vector_store %arg11[%c0_85, %c112_86], %146 {strides = array<i32>} : memref<16x512xf32, #tpu.memory_space<vmem>>, vector<16x256xf32>,
    %148 = vector.extract_strided_slice %97 {offsets = [128, 0], sizes = [16, 256], strides = [1, 1]} : vector<144x256xf32> to vector<16x256xf32>
    %cst_87 = arith.constant 0.000000e+00 : f32
    %149 = vector.shape_cast %18 : vector<1x256xi1> to vector<1x256xi1>
    %150 = vector.broadcast %149 : vector<1x256xi1> to vector<16x256xi1>
    %151 = vector.broadcast %cst_87 : f32 to vector<16x256xf32>
    %152 = arith.select %150, %148, %151 : vector<16x256xi1>, vector<16x256xf32>
    %c0_88 = arith.constant 0 : index
    %c111_89 = arith.constant 111 : index
    %153 = vector.load %arg11[%c0_88, %c111_89] : memref<16x512xf32, #tpu.memory_space<vmem>>, vector<16x256xf32>
    %154 = arith.addf %153, %152 : vector<16x256xf32>
    %c0_90 = arith.constant 0 : index
    %c111_91 = arith.constant 111 : index
    %155 = vector.load %arg11[%c0_90, %c111_91] : memref<16x512xf32, #tpu.memory_space<vmem>>, vector<16x256xf32>
    tpu.vector_store %arg11[%c0_90, %c111_91], %154 {strides = array<i32>} : memref<16x512xf32, #tpu.memory_space<vmem>>, vector<16x256xf32>,
    %c0_92 = arith.constant 0 : index
    %c128_93 = arith.constant 128 : index
    %156 = vector.load %arg11[%c0_92, %c128_93] : memref<16x512xf32, #tpu.memory_space<vmem>>, vector<16x256xf32>
    %c0_94 = arith.constant 0 : index
    %c0_95 = arith.constant 0 : index
    %157 = vector.load %arg5[%c0_94, %c0_95] : memref<16x1xf32, #tpu.memory_space<vmem>>, vector<16x1xf32>
    %158 = vector.broadcast %157 : vector<16x1xf32> to vector<16x256xf32>
    %159 = arith.addf %156, %158 : vector<16x256xf32>
    %c0_96 = arith.constant 0 : index
    %c16 = arith.constant 16 : index
    %c0_97 = arith.constant 0 : index
    %160 = vector.load %arg10[%c0_96, %c16, %c0_97] : memref<1x64x256xf32, #tpu.memory_space<vmem>>, vector<1x16x256xf32>
    %161 = vector.shape_cast %160 : vector<1x16x256xf32> to vector<16x256xf32>
    %162 = vector.shape_cast %159 : vector<16x256xf32> to vector<1x16x256xf32>
    tpu.vector_store %arg10[%c0_96, %c16, %c0_97], %162 {strides = array<i32>} : memref<1x64x256xf32, #tpu.memory_space<vmem>>, vector<1x16x256xf32>,
    %c0_98 = arith.constant 0 : index
    %c0_99 = arith.constant 0 : index
    %c0_100 = arith.constant 0 : index
    %163 = vector.load %arg10[%c0_98, %c0_99, %c0_100] : memref<1x64x256xf32, #tpu.memory_space<vmem>>, vector<1x32x256xf32>
    %164 = vector.shape_cast %163 : vector<1x32x256xf32> to vector<32x256xf32>
    %c0_101 = arith.constant 0 : index
    %c0_102 = arith.constant 0 : index
    %165 = vector.load %arg6[%c0_101, %c0_102] : memref<144x32xf32, #tpu.memory_space<vmem>>, vector<144x32xf32>
    %cst_103 = arith.constant dense<0.000000e+00> : vector<144x256xf32>
    %166 = tpu.matmul %165, %164, %cst_103 {dimension_numbers = #tpu.dot_dimension_numbers<[1], [0], [0], [1], [0, 0, 1, 1], [], []>} : vector<144x32xf32>, vector<32x256xf32>, vector<144x256xf32> -> vector<144x256xf32>
    %167 = vector.extract_strided_slice %166 {offsets = [64, 0], sizes = [16, 256], strides = [1, 1]} : vector<144x256xf32> to vector<16x256xf32>
    %c0_104 = arith.constant 0 : index
    %c128_105 = arith.constant 128 : index
    %168 = vector.load %arg11[%c0_104, %c128_105] : memref<16x512xf32, #tpu.memory_space<vmem>>, vector<16x256xf32>
    tpu.vector_store %arg11[%c0_104, %c128_105], %167 {strides = array<i32>} : memref<16x512xf32, #tpu.memory_space<vmem>>, vector<16x256xf32>,
    %169 = vector.extract_strided_slice %166 {offsets = [0, 0], sizes = [16, 256], strides = [1, 1]} : vector<144x256xf32> to vector<16x256xf32>
    %cst_106 = arith.constant 0.000000e+00 : f32
    %170 = vector.shape_cast %20 : vector<1x256xi1> to vector<1x256xi1>
    %171 = vector.broadcast %170 : vector<1x256xi1> to vector<16x256xi1>
    %172 = vector.broadcast %cst_106 : f32 to vector<16x256xf32>
    %173 = arith.select %171, %169, %172 : vector<16x256xi1>, vector<16x256xf32>
    %c0_107 = arith.constant 0 : index
    %c145_108 = arith.constant 145 : index
    %174 = vector.load %arg11[%c0_107, %c145_108] : memref<16x512xf32, #tpu.memory_space<vmem>>, vector<16x256xf32>
    %175 = arith.addf %174, %173 : vector<16x256xf32>
    %c0_109 = arith.constant 0 : index
    %c145_110 = arith.constant 145 : index
    %176 = vector.load %arg11[%c0_109, %c145_110] : memref<16x512xf32, #tpu.memory_space<vmem>>, vector<16x256xf32>
    tpu.vector_store %arg11[%c0_109, %c145_110], %175 {strides = array<i32>} : memref<16x512xf32, #tpu.memory_space<vmem>>, vector<16x256xf32>,
    %177 = vector.extract_strided_slice %166 {offsets = [16, 0], sizes = [16, 256], strides = [1, 1]} : vector<144x256xf32> to vector<16x256xf32>
    %c0_111 = arith.constant 0 : index
    %c144_112 = arith.constant 144 : index
    %178 = vector.load %arg11[%c0_111, %c144_112] : memref<16x512xf32, #tpu.memory_space<vmem>>, vector<16x256xf32>
    %179 = arith.addf %178, %177 : vector<16x256xf32>
    %c0_113 = arith.constant 0 : index
    %c144_114 = arith.constant 144 : index
    %180 = vector.load %arg11[%c0_113, %c144_114] : memref<16x512xf32, #tpu.memory_space<vmem>>, vector<16x256xf32>
    tpu.vector_store %arg11[%c0_113, %c144_114], %179 {strides = array<i32>} : memref<16x512xf32, #tpu.memory_space<vmem>>, vector<16x256xf32>,
    %181 = vector.extract_strided_slice %166 {offsets = [32, 0], sizes = [16, 256], strides = [1, 1]} : vector<144x256xf32> to vector<16x256xf32>
    %cst_115 = arith.constant 0.000000e+00 : f32
    %182 = vector.shape_cast %18 : vector<1x256xi1> to vector<1x256xi1>
    %183 = vector.broadcast %182 : vector<1x256xi1> to vector<16x256xi1>
    %184 = vector.broadcast %cst_115 : f32 to vector<16x256xf32>
    %185 = arith.select %183, %181, %184 : vector<16x256xi1>, vector<16x256xf32>
    %c0_116 = arith.constant 0 : index
    %c143_117 = arith.constant 143 : index
    %186 = vector.load %arg11[%c0_116, %c143_117] : memref<16x512xf32, #tpu.memory_space<vmem>>, vector<16x256xf32>
    %187 = arith.addf %186, %185 : vector<16x256xf32>
    %c0_118 = arith.constant 0 : index
    %c143_119 = arith.constant 143 : index
    %188 = vector.load %arg11[%c0_118, %c143_119] : memref<16x512xf32, #tpu.memory_space<vmem>>, vector<16x256xf32>
    tpu.vector_store %arg11[%c0_118, %c143_119], %187 {strides = array<i32>} : memref<16x512xf32, #tpu.memory_space<vmem>>, vector<16x256xf32>,
    %189 = vector.extract_strided_slice %166 {offsets = [48, 0], sizes = [16, 256], strides = [1, 1]} : vector<144x256xf32> to vector<16x256xf32>
    %cst_120 = arith.constant 0.000000e+00 : f32
    %190 = vector.shape_cast %20 : vector<1x256xi1> to vector<1x256xi1>
    %191 = vector.broadcast %190 : vector<1x256xi1> to vector<16x256xi1>
    %192 = vector.broadcast %cst_120 : f32 to vector<16x256xf32>
    %193 = arith.select %191, %189, %192 : vector<16x256xi1>, vector<16x256xf32>
    %c0_121 = arith.constant 0 : index
    %c129_122 = arith.constant 129 : index
    %194 = vector.load %arg11[%c0_121, %c129_122] : memref<16x512xf32, #tpu.memory_space<vmem>>, vector<16x256xf32>
    %195 = arith.addf %194, %193 : vector<16x256xf32>
    %c0_123 = arith.constant 0 : index
    %c129_124 = arith.constant 129 : index
    %196 = vector.load %arg11[%c0_123, %c129_124] : memref<16x512xf32, #tpu.memory_space<vmem>>, vector<16x256xf32>
    tpu.vector_store %arg11[%c0_123, %c129_124], %195 {strides = array<i32>} : memref<16x512xf32, #tpu.memory_space<vmem>>, vector<16x256xf32>,
    %197 = vector.extract_strided_slice %166 {offsets = [80, 0], sizes = [16, 256], strides = [1, 1]} : vector<144x256xf32> to vector<16x256xf32>
    %cst_125 = arith.constant 0.000000e+00 : f32
    %198 = vector.shape_cast %18 : vector<1x256xi1> to vector<1x256xi1>
    %199 = vector.broadcast %198 : vector<1x256xi1> to vector<16x256xi1>
    %200 = vector.broadcast %cst_125 : f32 to vector<16x256xf32>
    %201 = arith.select %199, %197, %200 : vector<16x256xi1>, vector<16x256xf32>
    %c0_126 = arith.constant 0 : index
    %c127_127 = arith.constant 127 : index
    %202 = vector.load %arg11[%c0_126, %c127_127] : memref<16x512xf32, #tpu.memory_space<vmem>>, vector<16x256xf32>
    %203 = arith.addf %202, %201 : vector<16x256xf32>
    %c0_128 = arith.constant 0 : index
    %c127_129 = arith.constant 127 : index
    %204 = vector.load %arg11[%c0_128, %c127_129] : memref<16x512xf32, #tpu.memory_space<vmem>>, vector<16x256xf32>
    tpu.vector_store %arg11[%c0_128, %c127_129], %203 {strides = array<i32>} : memref<16x512xf32, #tpu.memory_space<vmem>>, vector<16x256xf32>,
    %205 = vector.extract_strided_slice %166 {offsets = [96, 0], sizes = [16, 256], strides = [1, 1]} : vector<144x256xf32> to vector<16x256xf32>
    %cst_130 = arith.constant 0.000000e+00 : f32
    %206 = vector.shape_cast %20 : vector<1x256xi1> to vector<1x256xi1>
    %207 = vector.broadcast %206 : vector<1x256xi1> to vector<16x256xi1>
    %208 = vector.broadcast %cst_130 : f32 to vector<16x256xf32>
    %209 = arith.select %207, %205, %208 : vector<16x256xi1>, vector<16x256xf32>
    %c0_131 = arith.constant 0 : index
    %c113_132 = arith.constant 113 : index
    %210 = vector.load %arg11[%c0_131, %c113_132] : memref<16x512xf32, #tpu.memory_space<vmem>>, vector<16x256xf32>
    %211 = arith.addf %210, %209 : vector<16x256xf32>
    %c0_133 = arith.constant 0 : index
    %c113_134 = arith.constant 113 : index
    %212 = vector.load %arg11[%c0_133, %c113_134] : memref<16x512xf32, #tpu.memory_space<vmem>>, vector<16x256xf32>
    tpu.vector_store %arg11[%c0_133, %c113_134], %211 {strides = array<i32>} : memref<16x512xf32, #tpu.memory_space<vmem>>, vector<16x256xf32>,
    %213 = vector.extract_strided_slice %166 {offsets = [112, 0], sizes = [16, 256], strides = [1, 1]} : vector<144x256xf32> to vector<16x256xf32>
    %c0_135 = arith.constant 0 : index
    %c112_136 = arith.constant 112 : index
    %214 = vector.load %arg11[%c0_135, %c112_136] : memref<16x512xf32, #tpu.memory_space<vmem>>, vector<16x256xf32>
    %215 = arith.addf %214, %213 : vector<16x256xf32>
    %c0_137 = arith.constant 0 : index
    %c112_138 = arith.constant 112 : index
    %216 = vector.load %arg11[%c0_137, %c112_138] : memref<16x512xf32, #tpu.memory_space<vmem>>, vector<16x256xf32>
    tpu.vector_store %arg11[%c0_137, %c112_138], %215 {strides = array<i32>} : memref<16x512xf32, #tpu.memory_space<vmem>>, vector<16x256xf32>,
    %217 = vector.extract_strided_slice %166 {offsets = [128, 0], sizes = [16, 256], strides = [1, 1]} : vector<144x256xf32> to vector<16x256xf32>
    %cst_139 = arith.constant 0.000000e+00 : f32
    %218 = vector.shape_cast %18 : vector<1x256xi1> to vector<1x256xi1>
    %219 = vector.broadcast %218 : vector<1x256xi1> to vector<16x256xi1>
    %220 = vector.broadcast %cst_139 : f32 to vector<16x256xf32>
    %221 = arith.select %219, %217, %220 : vector<16x256xi1>, vector<16x256xf32>
    %c0_140 = arith.constant 0 : index
    %c111_141 = arith.constant 111 : index
    %222 = vector.load %arg11[%c0_140, %c111_141] : memref<16x512xf32, #tpu.memory_space<vmem>>, vector<16x256xf32>
    %223 = arith.addf %222, %221 : vector<16x256xf32>
    %c0_142 = arith.constant 0 : index
    %c111_143 = arith.constant 111 : index
    %224 = vector.load %arg11[%c0_142, %c111_143] : memref<16x512xf32, #tpu.memory_space<vmem>>, vector<16x256xf32>
    tpu.vector_store %arg11[%c0_142, %c111_143], %223 {strides = array<i32>} : memref<16x512xf32, #tpu.memory_space<vmem>>, vector<16x256xf32>,
    %c0_144 = arith.constant 0 : index
    %c128_145 = arith.constant 128 : index
    %225 = vector.load %arg11[%c0_144, %c128_145] : memref<16x512xf32, #tpu.memory_space<vmem>>, vector<16x256xf32>
    %c0_146 = arith.constant 0 : index
    %c0_147 = arith.constant 0 : index
    %226 = vector.load %arg7[%c0_146, %c0_147] : memref<16x1xf32, #tpu.memory_space<vmem>>, vector<16x1xf32>
    %227 = vector.broadcast %226 : vector<16x1xf32> to vector<16x256xf32>
    %228 = arith.addf %225, %227 : vector<16x256xf32>
    %c0_148 = arith.constant 0 : index
    %c32 = arith.constant 32 : index
    %c0_149 = arith.constant 0 : index
    %229 = vector.load %arg10[%c0_148, %c32, %c0_149] : memref<1x64x256xf32, #tpu.memory_space<vmem>>, vector<1x16x256xf32>
    %230 = vector.shape_cast %229 : vector<1x16x256xf32> to vector<16x256xf32>
    %231 = vector.shape_cast %228 : vector<16x256xf32> to vector<1x16x256xf32>
    tpu.vector_store %arg10[%c0_148, %c32, %c0_149], %231 {strides = array<i32>} : memref<1x64x256xf32, #tpu.memory_space<vmem>>, vector<1x16x256xf32>,
    %c0_150 = arith.constant 0 : index
    %c0_151 = arith.constant 0 : index
    %c0_152 = arith.constant 0 : index
    %232 = vector.load %arg10[%c0_150, %c0_151, %c0_152] : memref<1x64x256xf32, #tpu.memory_space<vmem>>, vector<1x48x256xf32>
    %233 = vector.shape_cast %232 : vector<1x48x256xf32> to vector<48x256xf32>
    %c0_153 = arith.constant 0 : index
    %c0_154 = arith.constant 0 : index
    %234 = vector.load %arg8[%c0_153, %c0_154] : memref<144x48xf32, #tpu.memory_space<vmem>>, vector<144x48xf32>
    %cst_155 = arith.constant dense<0.000000e+00> : vector<144x256xf32>
    %235 = tpu.matmul %234, %233, %cst_155 {dimension_numbers = #tpu.dot_dimension_numbers<[1], [0], [0], [1], [0, 0, 1, 1], [], []>} : vector<144x48xf32>, vector<48x256xf32>, vector<144x256xf32> -> vector<144x256xf32>
    %236 = vector.extract_strided_slice %235 {offsets = [64, 0], sizes = [16, 256], strides = [1, 1]} : vector<144x256xf32> to vector<16x256xf32>
    %c0_156 = arith.constant 0 : index
    %c128_157 = arith.constant 128 : index
    %237 = vector.load %arg11[%c0_156, %c128_157] : memref<16x512xf32, #tpu.memory_space<vmem>>, vector<16x256xf32>
    tpu.vector_store %arg11[%c0_156, %c128_157], %236 {strides = array<i32>} : memref<16x512xf32, #tpu.memory_space<vmem>>, vector<16x256xf32>,
    %238 = vector.extract_strided_slice %235 {offsets = [0, 0], sizes = [16, 256], strides = [1, 1]} : vector<144x256xf32> to vector<16x256xf32>
    %cst_158 = arith.constant 0.000000e+00 : f32
    %239 = vector.shape_cast %20 : vector<1x256xi1> to vector<1x256xi1>
    %240 = vector.broadcast %239 : vector<1x256xi1> to vector<16x256xi1>
    %241 = vector.broadcast %cst_158 : f32 to vector<16x256xf32>
    %242 = arith.select %240, %238, %241 : vector<16x256xi1>, vector<16x256xf32>
    %c0_159 = arith.constant 0 : index
    %c145_160 = arith.constant 145 : index
    %243 = vector.load %arg11[%c0_159, %c145_160] : memref<16x512xf32, #tpu.memory_space<vmem>>, vector<16x256xf32>
    %244 = arith.addf %243, %242 : vector<16x256xf32>
    %c0_161 = arith.constant 0 : index
    %c145_162 = arith.constant 145 : index
    %245 = vector.load %arg11[%c0_161, %c145_162] : memref<16x512xf32, #tpu.memory_space<vmem>>, vector<16x256xf32>
    tpu.vector_store %arg11[%c0_161, %c145_162], %244 {strides = array<i32>} : memref<16x512xf32, #tpu.memory_space<vmem>>, vector<16x256xf32>,
    %246 = vector.extract_strided_slice %235 {offsets = [16, 0], sizes = [16, 256], strides = [1, 1]} : vector<144x256xf32> to vector<16x256xf32>
    %c0_163 = arith.constant 0 : index
    %c144_164 = arith.constant 144 : index
    %247 = vector.load %arg11[%c0_163, %c144_164] : memref<16x512xf32, #tpu.memory_space<vmem>>, vector<16x256xf32>
    %248 = arith.addf %247, %246 : vector<16x256xf32>
    %c0_165 = arith.constant 0 : index
    %c144_166 = arith.constant 144 : index
    %249 = vector.load %arg11[%c0_165, %c144_166] : memref<16x512xf32, #tpu.memory_space<vmem>>, vector<16x256xf32>
    tpu.vector_store %arg11[%c0_165, %c144_166], %248 {strides = array<i32>} : memref<16x512xf32, #tpu.memory_space<vmem>>, vector<16x256xf32>,
    %250 = vector.extract_strided_slice %235 {offsets = [32, 0], sizes = [16, 256], strides = [1, 1]} : vector<144x256xf32> to vector<16x256xf32>
    %cst_167 = arith.constant 0.000000e+00 : f32
    %251 = vector.shape_cast %18 : vector<1x256xi1> to vector<1x256xi1>
    %252 = vector.broadcast %251 : vector<1x256xi1> to vector<16x256xi1>
    %253 = vector.broadcast %cst_167 : f32 to vector<16x256xf32>
    %254 = arith.select %252, %250, %253 : vector<16x256xi1>, vector<16x256xf32>
    %c0_168 = arith.constant 0 : index
    %c143_169 = arith.constant 143 : index
    %255 = vector.load %arg11[%c0_168, %c143_169] : memref<16x512xf32, #tpu.memory_space<vmem>>, vector<16x256xf32>
    %256 = arith.addf %255, %254 : vector<16x256xf32>
    %c0_170 = arith.constant 0 : index
    %c143_171 = arith.constant 143 : index
    %257 = vector.load %arg11[%c0_170, %c143_171] : memref<16x512xf32, #tpu.memory_space<vmem>>, vector<16x256xf32>
    tpu.vector_store %arg11[%c0_170, %c143_171], %256 {strides = array<i32>} : memref<16x512xf32, #tpu.memory_space<vmem>>, vector<16x256xf32>,
    %258 = vector.extract_strided_slice %235 {offsets = [48, 0], sizes = [16, 256], strides = [1, 1]} : vector<144x256xf32> to vector<16x256xf32>
    %cst_172 = arith.constant 0.000000e+00 : f32
    %259 = vector.shape_cast %20 : vector<1x256xi1> to vector<1x256xi1>
    %260 = vector.broadcast %259 : vector<1x256xi1> to vector<16x256xi1>
    %261 = vector.broadcast %cst_172 : f32 to vector<16x256xf32>
    %262 = arith.select %260, %258, %261 : vector<16x256xi1>, vector<16x256xf32>
    %c0_173 = arith.constant 0 : index
    %c129_174 = arith.constant 129 : index
    %263 = vector.load %arg11[%c0_173, %c129_174] : memref<16x512xf32, #tpu.memory_space<vmem>>, vector<16x256xf32>
    %264 = arith.addf %263, %262 : vector<16x256xf32>
    %c0_175 = arith.constant 0 : index
    %c129_176 = arith.constant 129 : index
    %265 = vector.load %arg11[%c0_175, %c129_176] : memref<16x512xf32, #tpu.memory_space<vmem>>, vector<16x256xf32>
    tpu.vector_store %arg11[%c0_175, %c129_176], %264 {strides = array<i32>} : memref<16x512xf32, #tpu.memory_space<vmem>>, vector<16x256xf32>,
    %266 = vector.extract_strided_slice %235 {offsets = [80, 0], sizes = [16, 256], strides = [1, 1]} : vector<144x256xf32> to vector<16x256xf32>
    %cst_177 = arith.constant 0.000000e+00 : f32
    %267 = vector.shape_cast %18 : vector<1x256xi1> to vector<1x256xi1>
    %268 = vector.broadcast %267 : vector<1x256xi1> to vector<16x256xi1>
    %269 = vector.broadcast %cst_177 : f32 to vector<16x256xf32>
    %270 = arith.select %268, %266, %269 : vector<16x256xi1>, vector<16x256xf32>
    %c0_178 = arith.constant 0 : index
    %c127_179 = arith.constant 127 : index
    %271 = vector.load %arg11[%c0_178, %c127_179] : memref<16x512xf32, #tpu.memory_space<vmem>>, vector<16x256xf32>
    %272 = arith.addf %271, %270 : vector<16x256xf32>
    %c0_180 = arith.constant 0 : index
    %c127_181 = arith.constant 127 : index
    %273 = vector.load %arg11[%c0_180, %c127_181] : memref<16x512xf32, #tpu.memory_space<vmem>>, vector<16x256xf32>
    tpu.vector_store %arg11[%c0_180, %c127_181], %272 {strides = array<i32>} : memref<16x512xf32, #tpu.memory_space<vmem>>, vector<16x256xf32>,
    %274 = vector.extract_strided_slice %235 {offsets = [96, 0], sizes = [16, 256], strides = [1, 1]} : vector<144x256xf32> to vector<16x256xf32>
    %cst_182 = arith.constant 0.000000e+00 : f32
    %275 = vector.shape_cast %20 : vector<1x256xi1> to vector<1x256xi1>
    %276 = vector.broadcast %275 : vector<1x256xi1> to vector<16x256xi1>
    %277 = vector.broadcast %cst_182 : f32 to vector<16x256xf32>
    %278 = arith.select %276, %274, %277 : vector<16x256xi1>, vector<16x256xf32>
    %c0_183 = arith.constant 0 : index
    %c113_184 = arith.constant 113 : index
    %279 = vector.load %arg11[%c0_183, %c113_184] : memref<16x512xf32, #tpu.memory_space<vmem>>, vector<16x256xf32>
    %280 = arith.addf %279, %278 : vector<16x256xf32>
    %c0_185 = arith.constant 0 : index
    %c113_186 = arith.constant 113 : index
    %281 = vector.load %arg11[%c0_185, %c113_186] : memref<16x512xf32, #tpu.memory_space<vmem>>, vector<16x256xf32>
    tpu.vector_store %arg11[%c0_185, %c113_186], %280 {strides = array<i32>} : memref<16x512xf32, #tpu.memory_space<vmem>>, vector<16x256xf32>,
    %282 = vector.extract_strided_slice %235 {offsets = [112, 0], sizes = [16, 256], strides = [1, 1]} : vector<144x256xf32> to vector<16x256xf32>
    %c0_187 = arith.constant 0 : index
    %c112_188 = arith.constant 112 : index
    %283 = vector.load %arg11[%c0_187, %c112_188] : memref<16x512xf32, #tpu.memory_space<vmem>>, vector<16x256xf32>
    %284 = arith.addf %283, %282 : vector<16x256xf32>
    %c0_189 = arith.constant 0 : index
    %c112_190 = arith.constant 112 : index
    %285 = vector.load %arg11[%c0_189, %c112_190] : memref<16x512xf32, #tpu.memory_space<vmem>>, vector<16x256xf32>
    tpu.vector_store %arg11[%c0_189, %c112_190], %284 {strides = array<i32>} : memref<16x512xf32, #tpu.memory_space<vmem>>, vector<16x256xf32>,
    %286 = vector.extract_strided_slice %235 {offsets = [128, 0], sizes = [16, 256], strides = [1, 1]} : vector<144x256xf32> to vector<16x256xf32>
    %cst_191 = arith.constant 0.000000e+00 : f32
    %287 = vector.shape_cast %18 : vector<1x256xi1> to vector<1x256xi1>
    %288 = vector.broadcast %287 : vector<1x256xi1> to vector<16x256xi1>
    %289 = vector.broadcast %cst_191 : f32 to vector<16x256xf32>
    %290 = arith.select %288, %286, %289 : vector<16x256xi1>, vector<16x256xf32>
    %c0_192 = arith.constant 0 : index
    %c111_193 = arith.constant 111 : index
    %291 = vector.load %arg11[%c0_192, %c111_193] : memref<16x512xf32, #tpu.memory_space<vmem>>, vector<16x256xf32>
    %292 = arith.addf %291, %290 : vector<16x256xf32>
    %c0_194 = arith.constant 0 : index
    %c111_195 = arith.constant 111 : index
    %293 = vector.load %arg11[%c0_194, %c111_195] : memref<16x512xf32, #tpu.memory_space<vmem>>, vector<16x256xf32>
    tpu.vector_store %arg11[%c0_194, %c111_195], %292 {strides = array<i32>} : memref<16x512xf32, #tpu.memory_space<vmem>>, vector<16x256xf32>,
    %c0_196 = arith.constant 0 : index
    %c128_197 = arith.constant 128 : index
    %294 = vector.load %arg11[%c0_196, %c128_197] : memref<16x512xf32, #tpu.memory_space<vmem>>, vector<16x256xf32>
    %c0_198 = arith.constant 0 : index
    %c0_199 = arith.constant 0 : index
    %295 = vector.load %arg9[%c0_198, %c0_199] : memref<16x1xf32, #tpu.memory_space<vmem>>, vector<16x1xf32>
    %296 = vector.broadcast %295 : vector<16x1xf32> to vector<16x256xf32>
    %297 = arith.addf %294, %296 : vector<16x256xf32>
    %c0_200 = arith.constant 0 : index
    %c48 = arith.constant 48 : index
    %c0_201 = arith.constant 0 : index
    %298 = vector.load %arg10[%c0_200, %c48, %c0_201] : memref<1x64x256xf32, #tpu.memory_space<vmem>>, vector<1x16x256xf32>
    %299 = vector.shape_cast %298 : vector<1x16x256xf32> to vector<16x256xf32>
    %300 = vector.shape_cast %297 : vector<16x256xf32> to vector<1x16x256xf32>
    tpu.vector_store %arg10[%c0_200, %c48, %c0_201], %300 {strides = array<i32>} : memref<1x64x256xf32, #tpu.memory_space<vmem>>, vector<1x16x256xf32>,
    return
  }
  func.func @transform_0(%arg0: i32) -> (i32, i32, i32) {
    %c0_i32 = arith.constant 0 : i32
    %c0_i32_0 = arith.constant 0 : i32
    %c0_i32_1 = arith.constant 0 : i32
    return %arg0, %c0_i32, %c0_i32_0 : i32, i32, i32
  }
  func.func @transform_1(%arg0: i32) -> (i32, i32) {
    %c0_i32 = arith.constant 0 : i32
    %c0_i32_0 = arith.constant 0 : i32
    %c0_i32_1 = arith.constant 0 : i32
    return %c0_i32, %c0_i32_0 : i32, i32
  }
  func.func @transform_2(%arg0: i32) -> (i32, i32) {
    %c0_i32 = arith.constant 0 : i32
    %c0_i32_0 = arith.constant 0 : i32
    %c0_i32_1 = arith.constant 0 : i32
    return %c0_i32, %c0_i32_0 : i32, i32
  }
  func.func @transform_3(%arg0: i32) -> (i32, i32) {
    %c0_i32 = arith.constant 0 : i32
    %c0_i32_0 = arith.constant 0 : i32
    %c0_i32_1 = arith.constant 0 : i32
    return %c0_i32, %c0_i32_0 : i32, i32
  }
  func.func @transform_4(%arg0: i32) -> (i32, i32) {
    %c0_i32 = arith.constant 0 : i32
    %c0_i32_0 = arith.constant 0 : i32
    %c0_i32_1 = arith.constant 0 : i32
    return %c0_i32, %c0_i32_0 : i32, i32
  }
  func.func @transform_5(%arg0: i32) -> (i32, i32) {
    %c0_i32 = arith.constant 0 : i32
    %c0_i32_0 = arith.constant 0 : i32
    %c0_i32_1 = arith.constant 0 : i32
    return %c0_i32, %c0_i32_0 : i32, i32
  }
  func.func @transform_6(%arg0: i32) -> (i32, i32) {
    %c0_i32 = arith.constant 0 : i32
    %c0_i32_0 = arith.constant 0 : i32
    %c0_i32_1 = arith.constant 0 : i32
    return %c0_i32, %c0_i32_0 : i32, i32
  }
  func.func @transform_7(%arg0: i32) -> (i32, i32) {
    %c0_i32 = arith.constant 0 : i32
    %c0_i32_0 = arith.constant 0 : i32
    %c0_i32_1 = arith.constant 0 : i32
    return %c0_i32, %c0_i32_0 : i32, i32
  }
  func.func @transform_8(%arg0: i32) -> (i32, i32) {
    %c0_i32 = arith.constant 0 : i32
    %c0_i32_0 = arith.constant 0 : i32
    %c0_i32_1 = arith.constant 0 : i32
    return %c0_i32, %c0_i32_0 : i32, i32
  }
  func.func @transform_9(%arg0: i32) -> (i32, i32, i32) {
    %c0_i32 = arith.constant 0 : i32
    %c0_i32_0 = arith.constant 0 : i32
    %c0_i32_1 = arith.constant 0 : i32
    return %arg0, %c0_i32, %c0_i32_0 : i32, i32, i32
  }
}

</mosaic_0001>

<llo_original>
// kernel: encoder_forward.1
$region0: #{encoder_forward.1}
  #allocation0 [shape = 'u32[]', space=smem, size = 0x4, offset = 0x4, fixed_abs, tag = 'smem constant byte address 0x4 - core index']
  #allocation1 [shape = 'u32[144,128]{1,0:T(1,128)}', space=vmem, size = 0x12000, scoped, tag = 'internal scratch']
  #allocation2 [shape = 'f32[16,512]{1,0:T(8,128)}', space=vmem, size = 0x8000, scoped, tag = 'scratch operand']
  %s0 = inlined_call_operand.vmem [shape: f32[2,1,256], index: 0, kind: input, shape index: {}]
  %s1 = inlined_call_operand.vmem [shape: f32[144,1], index: 1, kind: input, shape index: {}]
  %s2 = inlined_call_operand.vmem [shape: f32[16,1], index: 2, kind: input, shape index: {}]
  %s3 = inlined_call_operand.vmem [shape: f32[144,16], index: 3, kind: input, shape index: {}]
  %s4 = inlined_call_operand.vmem [shape: f32[16,1], index: 4, kind: input, shape index: {}]
  %s5 = inlined_call_operand.vmem [shape: f32[144,32], index: 5, kind: input, shape index: {}]
  %s6 = inlined_call_operand.vmem [shape: f32[16,1], index: 6, kind: input, shape index: {}]
  %s7 = inlined_call_operand.vmem [shape: f32[144,48], index: 7, kind: input, shape index: {}]
  %s8 = inlined_call_operand.vmem [shape: f32[16,1], index: 8, kind: input, shape index: {}]
  %s9 = inlined_call_operand.vmem [shape: f32[2,64,256], index: 9, kind: output, shape index: {}]
  %s10 = sld [smem:[#allocation0]]
  $region69: #{encoder_forward.1} parent=0
    _
  %s12 = ssub.s32 1, %s10
  %s13 = scalar_select 0, %s12, %s10
  loop: start=0, step=1, limit=4
  $region2: #{encoder_forward.1} parent=0 // loop_pre_header
    _
  $region3: #{encoder_forward.1} parent=0 // loop_header
    %s15 = sphi 0, %s19
    %p16 = scmp.ge.s32.totalorder %s15, 4
    %s25 = sphi 0, %s27
    %s28 = sphi 0, %s25
    %s29 = sphi 0, %s28
    %s45 = sphi 0, %s29
    %s49 = sphi 0, %s49
    %s51 = sphi 0, %s49
    %s52 = sphi 0, %s51
    %s66 = sphi 0, %s52
    %s70 = sphi 0, %s70
    %s72 = sphi 0, %s70
    %s73 = sphi 0, %s72
    %s87 = sphi 0, %s73
    %s91 = sphi 0, %s91
    %s93 = sphi 0, %s91
    %s94 = sphi 0, %s93
    %s108 = sphi 0, %s94
    %s112 = sphi 0, %s112
    %s114 = sphi 0, %s112
    %s115 = sphi 0, %s114
    %s129 = sphi 0, %s115
    %s133 = sphi 0, %s133
    %s135 = sphi 0, %s133
    %s136 = sphi 0, %s135
    %s150 = sphi 0, %s136
    %s154 = sphi 0, %s154
    %s156 = sphi 0, %s154
    %s157 = sphi 0, %s156
    %s171 = sphi 0, %s157
    %s175 = sphi 0, %s175
    %s177 = sphi 0, %s175
    %s178 = sphi 0, %s177
    %s192 = sphi 0, %s178
    %s196 = sphi 0, %s196
    %s198 = sphi 0, %s196
    %s199 = sphi 0, %s198
    %s213 = sphi 0, %s199
    %s219 = sphi 0, %s221
    %s222 = sphi 0, %s219
    %s223 = sphi 0, %s222
    %s239 = sphi 0, %s223
  $region4: #{encoder_forward.1} parent=0 // loop_header_branch
    %18 = sbr.rel (%p16) target = $region8
  $region5: #{encoder_forward.1} parent=0 // loop_body
    %s20 = ssub.s32 %s15, 1
    %s21 = ssub.s32 %s15, 2
    %s22 = sadd.s32 %s15, 1
    %s23 = ssub.s32 %s15, %s22
    %p24 = scmp.eq.s32.totalorder %s23, 0
    %s26 = sadd.s32 %s25, 1
    %s27 = scalar_select %p24, %s25, %s26
    %p30 = pneg %p24
    %p31 = scmp.eq.s32.totalorder %s15, 1
    %p32 = por %p30, %p31
    %p33 = scmp.ne.s32.totalorder %s25, %s28
    %p34 = scmp.eq.s32.totalorder %s15, 0
    %p35 = por %p33, %p34
    %p36 = scmp.ne.s32.totalorder %s25, %s28
    %p37 = scmp.eq.s32.totalorder %s20, 1
    %p38 = por %p36, %p37
    %p39 = scmp.ne.s32.totalorder %s28, %s29
    %p40 = scmp.eq.s32.totalorder %s20, 0
    %p41 = por %p39, %p40
    %p42 = scmp.ne.s32.totalorder %s28, %s29
    %p43 = scmp.eq.s32.totalorder %s21, 1
    %p44 = por %p42, %p43
    %p46 = scmp.ne.s32.totalorder %s29, %s45
    %p47 = scmp.eq.s32.totalorder %s21, 0
    %p48 = por %p46, %p47
    %s50 = sadd.s32 %s49, 1
    %p53 = scmp.eq.s32.totalorder %s15, 1
    %p54 = scmp.ne.s32.totalorder %s49, %s51
    %p55 = scmp.eq.s32.totalorder %s15, 0
    %p56 = por %p54, %p55
    %p57 = scmp.ne.s32.totalorder %s49, %s51
    %p58 = scmp.eq.s32.totalorder %s20, 1
    %p59 = por %p57, %p58
    %p60 = scmp.ne.s32.totalorder %s51, %s52
    %p61 = scmp.eq.s32.totalorder %s20, 0
    %p62 = por %p60, %p61
    %p63 = scmp.ne.s32.totalorder %s51, %s52
    %p64 = scmp.eq.s32.totalorder %s21, 1
    %p65 = por %p63, %p64
    %p67 = scmp.ne.s32.totalorder %s52, %s66
    %p68 = scmp.eq.s32.totalorder %s21, 0
    %p69 = por %p67, %p68
    %s71 = sadd.s32 %s70, 1
    %p74 = scmp.eq.s32.totalorder %s15, 1
    %p75 = scmp.ne.s32.totalorder %s70, %s72
    %p76 = scmp.eq.s32.totalorder %s15, 0
    %p77 = por %p75, %p76
    %p78 = scmp.ne.s32.totalorder %s70, %s72
    %p79 = scmp.eq.s32.totalorder %s20, 1
    %p80 = por %p78, %p79
    %p81 = scmp.ne.s32.totalorder %s72, %s73
    %p82 = scmp.eq.s32.totalorder %s20, 0
    %p83 = por %p81, %p82
    %p84 = scmp.ne.s32.totalorder %s72, %s73
    %p85 = scmp.eq.s32.totalorder %s21, 1
    %p86 = por %p84, %p85
    %p88 = scmp.ne.s32.totalorder %s73, %s87
    %p89 = scmp.eq.s32.totalorder %s21, 0
    %p90 = por %p88, %p89
    %s92 = sadd.s32 %s91, 1
    %p95 = scmp.eq.s32.totalorder %s15, 1
    %p96 = scmp.ne.s32.totalorder %s91, %s93
    %p97 = scmp.eq.s32.totalorder %s15, 0
    %p98 = por %p96, %p97
    %p99 = scmp.ne.s32.totalorder %s91, %s93
    %p100 = scmp.eq.s32.totalorder %s20, 1
    %p101 = por %p99, %p100
    %p102 = scmp.ne.s32.totalorder %s93, %s94
    %p103 = scmp.eq.s32.totalorder %s20, 0
    %p104 = por %p102, %p103
    %p105 = scmp.ne.s32.totalorder %s93, %s94
    %p106 = scmp.eq.s32.totalorder %s21, 1
    %p107 = por %p105, %p106
    %p109 = scmp.ne.s32.totalorder %s94, %s108
    %p110 = scmp.eq.s32.totalorder %s21, 0
    %p111 = por %p109, %p110
    %s113 = sadd.s32 %s112, 1
    %p116 = scmp.eq.s32.totalorder %s15, 1
    %p117 = scmp.ne.s32.totalorder %s112, %s114
    %p118 = scmp.eq.s32.totalorder %s15, 0
    %p119 = por %p117, %p118
    %p120 = scmp.ne.s32.totalorder %s112, %s114
    %p121 = scmp.eq.s32.totalorder %s20, 1
    %p122 = por %p120, %p121
    %p123 = scmp.ne.s32.totalorder %s114, %s115
    %p124 = scmp.eq.s32.totalorder %s20, 0
    %p125 = por %p123, %p124
    %p126 = scmp.ne.s32.totalorder %s114, %s115
    %p127 = scmp.eq.s32.totalorder %s21, 1
    %p128 = por %p126, %p127
    %p130 = scmp.ne.s32.totalorder %s115, %s129
    %p131 = scmp.eq.s32.totalorder %s21, 0
    %p132 = por %p130, %p131
    %s134 = sadd.s32 %s133, 1
    %p137 = scmp.eq.s32.totalorder %s15, 1
    %p138 = scmp.ne.s32.totalorder %s133, %s135
    %p139 = scmp.eq.s32.totalorder %s15, 0
    %p140 = por %p138, %p139
    %p141 = scmp.ne.s32.totalorder %s133, %s135
    %p142 = scmp.eq.s32.totalorder %s20, 1
    %p143 = por %p141, %p142
    %p144 = scmp.ne.s32.totalorder %s135, %s136
    %p145 = scmp.eq.s32.totalorder %s20, 0
    %p146 = por %p144, %p145
    %p147 = scmp.ne.s32.totalorder %s135, %s136
    %p148 = scmp.eq.s32.totalorder %s21, 1
    %p149 = por %p147, %p148
    %p151 = scmp.ne.s32.totalorder %s136, %s150
    %p152 = scmp.eq.s32.totalorder %s21, 0
    %p153 = por %p151, %p152
    %s155 = sadd.s32 %s154, 1
    %p158 = scmp.eq.s32.totalorder %s15, 1
    %p159 = scmp.ne.s32.totalorder %s154, %s156
    %p160 = scmp.eq.s32.totalorder %s15, 0
    %p161 = por %p159, %p160
    %p162 = scmp.ne.s32.totalorder %s154, %s156
    %p163 = scmp.eq.s32.totalorder %s20, 1
    %p164 = por %p162, %p163
    %p165 = scmp.ne.s32.totalorder %s156, %s157
    %p166 = scmp.eq.s32.totalorder %s20, 0
    %p167 = por %p165, %p166
    %p168 = scmp.ne.s32.totalorder %s156, %s157
    %p169 = scmp.eq.s32.totalorder %s21, 1
    %p170 = por %p168, %p169
    %p172 = scmp.ne.s32.totalorder %s157, %s171
    %p173 = scmp.eq.s32.totalorder %s21, 0
    %p174 = por %p172, %p173
    %s176 = sadd.s32 %s175, 1
    %p179 = scmp.eq.s32.totalorder %s15, 1
    %p180 = scmp.ne.s32.totalorder %s175, %s177
    %p181 = scmp.eq.s32.totalorder %s15, 0
    %p182 = por %p180, %p181
    %p183 = scmp.ne.s32.totalorder %s175, %s177
    %p184 = scmp.eq.s32.totalorder %s20, 1
    %p185 = por %p183, %p184
    %p186 = scmp.ne.s32.totalorder %s177, %s178
    %p187 = scmp.eq.s32.totalorder %s20, 0
    %p188 = por %p186, %p187
    %p189 = scmp.ne.s32.totalorder %s177, %s178
    %p190 = scmp.eq.s32.totalorder %s21, 1
    %p191 = por %p189, %p190
    %p193 = scmp.ne.s32.totalorder %s178, %s192
    %p194 = scmp.eq.s32.totalorder %s21, 0
    %p195 = por %p193, %p194
    %s197 = sadd.s32 %s196, 1
    %p200 = scmp.eq.s32.totalorder %s15, 1
    %p201 = scmp.ne.s32.totalorder %s196, %s198
    %p202 = scmp.eq.s32.totalorder %s15, 0
    %p203 = por %p201, %p202
    %p204 = scmp.ne.s32.totalorder %s196, %s198
    %p205 = scmp.eq.s32.totalorder %s20, 1
    %p206 = por %p204, %p205
    %p207 = scmp.ne.s32.totalorder %s198, %s199
    %p208 = scmp.eq.s32.totalorder %s20, 0
    %p209 = por %p207, %p208
    %p210 = scmp.ne.s32.totalorder %s198, %s199
    %p211 = scmp.eq.s32.totalorder %s21, 1
    %p212 = por %p210, %p211
    %p214 = scmp.ne.s32.totalorder %s199, %s213
    %p215 = scmp.eq.s32.totalorder %s21, 0
    %p216 = por %p214, %p215
    %s217 = ssub.s32 %s15, %s22
    %p218 = scmp.eq.s32.totalorder %s217, 0
    %s220 = sadd.s32 %s219, 1
    %s221 = scalar_select %p218, %s219, %s220
    %p224 = pneg %p218
    %p225 = scmp.eq.s32.totalorder %s15, 1
    %p226 = por %p224, %p225
    %p227 = scmp.ne.s32.totalorder %s219, %s222
    %p228 = scmp.eq.s32.totalorder %s15, 0
    %p229 = por %p227, %p228
    %p230 = scmp.ne.s32.totalorder %s219, %s222
    %p231 = scmp.eq.s32.totalorder %s20, 1
    %p232 = por %p230, %p231
    %p233 = scmp.ne.s32.totalorder %s222, %s223
    %p234 = scmp.eq.s32.totalorder %s20, 0
    %p235 = por %p233, %p234
    %p236 = scmp.ne.s32.totalorder %s222, %s223
    %p237 = scmp.eq.s32.totalorder %s21, 1
    %p238 = por %p236, %p237
    %p240 = scmp.ne.s32.totalorder %s223, %s239
    %p241 = scmp.eq.s32.totalorder %s21, 0
    %p242 = por %p240, %p241
    %p243 = scmp.le.s32.totalorder 1, %s15
    %p244 = scmp.lt.s32.totalorder %s15, 3
    %p245 = pnand %p243, %p244
    %p246 = pneg %p245
    // Predicated region
    $region9: #{encoder_forward.1} parent=5 // pred_check
      _
    $region10: #{encoder_forward.1} parent=5 // pred_check_branch
      %248 = sbr.rel (%p245) target = $region12
    $region11: #{encoder_forward.1} parent=5 // pred_region
      %s249 = ssub.s32 %s15, 1
      // Predicated region
      $region13: #{encoder_forward.1} parent=11 // pred_check
        %p250 = pneg %p62
      $region14: #{encoder_forward.1} parent=11 // pred_check_branch
        %252 = sbr.rel (%p250) target = $region16
      $region15: #{encoder_forward.1} parent=11 // pred_region
        _
      $region16: #{encoder_forward.1} parent=11 // pred_fallthru
        _
      // Predicated region
      $region17: #{encoder_forward.1} parent=11 // pred_check
        %p253 = pneg %p83
      $region18: #{encoder_forward.1} parent=11 // pred_check_branch
        %255 = sbr.rel (%p253) target = $region20
      $region19: #{encoder_forward.1} parent=11 // pred_region
        _
      $region20: #{encoder_forward.1} parent=11 // pred_fallthru
        _
      // Predicated region
      $region21: #{encoder_forward.1} parent=11 // pred_check
        %p256 = pneg %p104
      $region22: #{encoder_forward.1} parent=11 // pred_check_branch
        %258 = sbr.rel (%p256) target = $region24
      $region23: #{encoder_forward.1} parent=11 // pred_region
        _
      $region24: #{encoder_forward.1} parent=11 // pred_fallthru
        _
      // Predicated region
      $region25: #{encoder_forward.1} parent=11 // pred_check
        %p259 = pneg %p125
      $region26: #{encoder_forward.1} parent=11 // pred_check_branch
        %261 = sbr.rel (%p259) target = $region28
      $region27: #{encoder_forward.1} parent=11 // pred_region
        _
      $region28: #{encoder_forward.1} parent=11 // pred_fallthru
        _
      // Predicated region
      $region29: #{encoder_forward.1} parent=11 // pred_check
        %p262 = pneg %p146
      $region30: #{encoder_forward.1} parent=11 // pred_check_branch
        %264 = sbr.rel (%p262) target = $region32
      $region31: #{encoder_forward.1} parent=11 // pred_region
        _
      $region32: #{encoder_forward.1} parent=11 // pred_fallthru
        _
      // Predicated region
      $region33: #{encoder_forward.1} parent=11 // pred_check
        %p265 = pneg %p167
      $region34: #{encoder_forward.1} parent=11 // pred_check_branch
        %267 = sbr.rel (%p265) target = $region36
      $region35: #{encoder_forward.1} parent=11 // pred_region
        _
      $region36: #{encoder_forward.1} parent=11 // pred_fallthru
        _
      // Predicated region
      $region37: #{encoder_forward.1} parent=11 // pred_check
        %p268 = pneg %p188
      $region38: #{encoder_forward.1} parent=11 // pred_check_branch
        %270 = sbr.rel (%p268) target = $region40
      $region39: #{encoder_forward.1} parent=11 // pred_region
        _
      $region40: #{encoder_forward.1} parent=11 // pred_fallthru
        _
      // Predicated region
      $region41: #{encoder_forward.1} parent=11 // pred_check
        %p271 = pneg %p209
      $region42: #{encoder_forward.1} parent=11 // pred_check_branch
        %273 = sbr.rel (%p271) target = $region44
      $region43: #{encoder_forward.1} parent=11 // pred_region
        _
      $region44: #{encoder_forward.1} parent=11 // pred_fallthru
        _
    $region12: #{encoder_forward.1} parent=5 // pred_fallthru
      _
    %p274 = scmp.lt.s32.totalorder %s15, 2
    // Predicated region
    $region45: #{encoder_forward.1} parent=5 // pred_check
      %p275 = pneg %p274
    $region46: #{encoder_forward.1} parent=5 // pred_check_branch
      %277 = sbr.rel (%p275) target = $region48
    $region47: #{encoder_forward.1} parent=5 // pred_region
      // Predicated region
      $region49: #{encoder_forward.1} parent=47 // pred_check
        %p278 = pneg %p35
      $region50: #{encoder_forward.1} parent=47 // pred_check_branch
        %280 = sbr.rel (%p278) target = $region52
      $region51: #{encoder_forward.1} parent=47 // pred_region
        %p281 = scmp.lt.s32.totalorder %s15, 1
        %s282 = scalar_select %p281, %s15, 1
        %s283 = smul.addr %s282, 2
        %s284 = scalar_lea.vmem %s0, %s283
      $region52: #{encoder_forward.1} parent=47 // pred_fallthru
        _
    $region48: #{encoder_forward.1} parent=5 // pred_fallthru
      _
    %p285 = scmp.le.s32.totalorder 1, %s15
    %p286 = scmp.lt.s32.totalorder %s15, 3
    %p287 = pnand %p285, %p286
    %p288 = pneg %p287
    // Predicated region
    $region53: #{encoder_forward.1} parent=5 // pred_check
      _
    $region54: #{encoder_forward.1} parent=5 // pred_check_branch
      %290 = sbr.rel (%p287) target = $region56
    $region55: #{encoder_forward.1} parent=5 // pred_region
      %s291 = ssub.s32 %s15, 1
      %p292 = scmp.lt.s32.totalorder %s20, 1
      %s293 = scalar_select %p292, %s20, 1
      %s294 = smul.addr %s293, 2
      %s295 = scalar_lea.vmem %s0, %s294
      %p296 = pneg %p41
      %p297 = pneg %p38
      %p298 = pneg %p62
      %p299 = pneg %p59
      %p300 = pneg %p83
      %p301 = pneg %p80
      %p302 = pneg %p104
      %p303 = pneg %p101
      %p304 = pneg %p125
      %p305 = pneg %p122
      %p306 = pneg %p146
      %p307 = pneg %p143
      %p308 = pneg %p167
      %p309 = pneg %p164
      %p310 = pneg %p188
      %p311 = pneg %p185
      %p312 = pneg %p209
      %p313 = pneg %p206
      %p314 = pneg %p235
      %p315 = pneg %p232
      %p316 = scmp.lt.s32.totalorder %s20, 1
      %s317 = scalar_select %p316, %s20, 1
      %s318 = smul.addr %s317, 16
      %s319 = smul.addr %s318, 8
      %s320 = scalar_lea.vmem %s9, %s319
      %p321 = scmp.lt.s32.totalorder %s20, 1
      %s322 = scalar_select %p321, %s20, 1
      %s323 = smul.addr %s322, 2
      %s324 = scalar_lea.vmem %s0, %s323
      %p325 = scmp.lt.s32.totalorder %s20, 1
      %s326 = scalar_select %p325, %s20, 1
      %s327 = smul.addr %s326, 16
      %s328 = smul.addr %s327, 8
      %s329 = scalar_lea.vmem %s9, %s328
      %v330 = vlaneseq
      %v331 = vand.u32 %v330, 127
      %v332 = vadd.s32 %v331, 128
      %vm333 = vcmp.lt.s32.totalorder %v331, 0
      %v334 = vsub.s32 0, %v331
      %v335 = vsel %vm333, %v334, %v331
      %v336 = vshrl.u32 %v335, 4
      %v337 = vand.u32 %v335, 15
      %v338 = vsub.s32 0, %v337
      %v339 = vsel %vm333, %v338, %v337
      %vm340 = vcmp.lt.s32.totalorder %v332, 0
      %v341 = vsub.s32 0, %v332
      %v342 = vsel %vm340, %v341, %v332
      %v343 = vshrl.u32 %v342, 4
      %v344 = vand.u32 %v342, 15
      %v345 = vsub.s32 0, %v344
      %v346 = vsel %vm340, %v345, %v344
      %vm347 = vcmp.ne.s32.totalorder %v339, 0
      %vm348 = vcmp.ne.s32.totalorder %v346, 0
      %vm349 = vcmp.lt.s32.totalorder %v339, 0
      %vm350 = vcmp.lt.s32.totalorder %v346, 0
      %vm351 = vmand %vm349, %vm347
      %vm352 = vmand %vm350, %vm348
      %v353 = vadd.s32 %v339, 16
      %v354 = vadd.s32 %v346, 16
      %v355 = vsel %vm351, %v353, %v339
      %v356 = vsel %vm352, %v354, %v346
      %vm357 = vcmp.ne.s32.totalorder %v355, 0
      %vm358 = vcmp.ne.s32.totalorder %v356, 0
      %vm359 = vcmp.ne.s32.totalorder %v355, 15
      %vm360 = vcmp.ne.s32.totalorder %v356, 15
      %v361 = vld [vmem:[%s1] sm:$0xff]
      %v362 = vld [vmem:[%s1 + $0x8] sm:$0xff]
      %v363 = vld [vmem:[%s1 + $0x10] sm:$0xff]
      %v364 = vld [vmem:[%s1 + $0x18] sm:$0xff]
      %v365 = vld [vmem:[%s1 + $0x20] sm:$0xff]
      %v366 = vld [vmem:[%s1 + $0x28] sm:$0xff]
      %v367 = vld [vmem:[%s1 + $0x30] sm:$0xff]
      %v368 = vld [vmem:[%s1 + $0x38] sm:$0xff]
      %v369 = vld [vmem:[%s1 + $0x40] sm:$0xff]
      %v370 = vld [vmem:[%s1 + $0x48] sm:$0xff]
      %v371 = vld [vmem:[%s1 + $0x50] sm:$0xff]
      %v372 = vld [vmem:[%s1 + $0x58] sm:$0xff]
      %v373 = vld [vmem:[%s1 + $0x60] sm:$0xff]
      %v374 = vld [vmem:[%s1 + $0x68] sm:$0xff]
      %v375 = vld [vmem:[%s1 + $0x70] sm:$0xff]
      %v376 = vld [vmem:[%s1 + $0x78] sm:$0xff]
      %v377 = vld [vmem:[%s1 + $0x80] sm:$0xff]
      %v378 = vld [vmem:[%s1 + $0x88] sm:$0xff]
      %v379 = vld [vmem:[%s324] sm:$0x3]
      %381 = vset.pattern.permute.xlu0 0
      %382 = vperm.xlu0 %381, %v361
      %v383 = vpop.permute.xlu0 %382
      %386 = vset.pattern.permute.xlu0 0
      %387 = vperm.xlu0 %386, %v362
      %v388 = vpop.permute.xlu0 %387
      %391 = vset.pattern.permute.xlu0 0
      %392 = vperm.xlu0 %391, %v363
      %v393 = vpop.permute.xlu0 %392
      %396 = vset.pattern.permute.xlu0 0
      %397 = vperm.xlu0 %396, %v364
      %v398 = vpop.permute.xlu0 %397
      %401 = vset.pattern.permute.xlu0 0
      %402 = vperm.xlu0 %401, %v365
      %v403 = vpop.permute.xlu0 %402
      %406 = vset.pattern.permute.xlu0 0
      %407 = vperm.xlu0 %406, %v366
      %v408 = vpop.permute.xlu0 %407
      %411 = vset.pattern.permute.xlu0 0
      %412 = vperm.xlu0 %411, %v367
      %v413 = vpop.permute.xlu0 %412
      %416 = vset.pattern.permute.xlu0 0
      %417 = vperm.xlu0 %416, %v368
      %v418 = vpop.permute.xlu0 %417
      %421 = vset.pattern.permute.xlu0 0
      %422 = vperm.xlu0 %421, %v369
      %v423 = vpop.permute.xlu0 %422
      %426 = vset.pattern.permute.xlu0 0
      %427 = vperm.xlu0 %426, %v370
      %v428 = vpop.permute.xlu0 %427
      %431 = vset.pattern.permute.xlu0 0
      %432 = vperm.xlu0 %431, %v371
      %v433 = vpop.permute.xlu0 %432
      %436 = vset.pattern.permute.xlu0 0
      %437 = vperm.xlu0 %436, %v372
      %v438 = vpop.permute.xlu0 %437
      %441 = vset.pattern.permute.xlu0 0
      %442 = vperm.xlu0 %441, %v373
      %v443 = vpop.permute.xlu0 %442
      %446 = vset.pattern.permute.xlu0 0
      %447 = vperm.xlu0 %446, %v374
      %v448 = vpop.permute.xlu0 %447
      %451 = vset.pattern.permute.xlu0 0
      %452 = vperm.xlu0 %451, %v375
      %v453 = vpop.permute.xlu0 %452
      %456 = vset.pattern.permute.xlu0 0
      %457 = vperm.xlu0 %456, %v376
      %v458 = vpop.permute.xlu0 %457
      %461 = vset.pattern.permute.xlu0 0
      %462 = vperm.xlu0 %461, %v377
      %v463 = vpop.permute.xlu0 %462
      %466 = vset.pattern.permute.xlu0 0
      %467 = vperm.xlu0 %466, %v378
      %v468 = vpop.permute.xlu0 %467
      %v471 = vlaneseq
      %v472 = vshrl.u32 %v471, 7
      %v473 = vsub.s32 0, %v472
      %v474 = vrot.slane %v379, %v473
      %v475 = vlaneseq
      %v476 = vshrl.u32 %v475, 7
      %v477 = vsub.s32 1, %v476
      %v478 = vrot.slane %v379, %v477
      %v481 = vmul.f32 %v383, %v474
      %v482 = vmul.f32 %v383, %v478
      %v483 = vmul.f32 %v388, %v474
      %v484 = vmul.f32 %v388, %v478
      %v485 = vmul.f32 %v393, %v474
      %v486 = vmul.f32 %v393, %v478
      %v487 = vmul.f32 %v398, %v474
      %v488 = vmul.f32 %v398, %v478
      %v489 = vmul.f32 %v403, %v474
      %v490 = vmul.f32 %v403, %v478
      %v491 = vmul.f32 %v408, %v474
      %v492 = vmul.f32 %v408, %v478
      %v493 = vmul.f32 %v413, %v474
      %v494 = vmul.f32 %v413, %v478
      %v495 = vmul.f32 %v418, %v474
      %v496 = vmul.f32 %v418, %v478
      %v497 = vmul.f32 %v423, %v474
      %v498 = vmul.f32 %v423, %v478
      %v499 = vmul.f32 %v428, %v474
      %v500 = vmul.f32 %v428, %v478
      %v501 = vmul.f32 %v433, %v474
      %v502 = vmul.f32 %v433, %v478
      %v503 = vmul.f32 %v438, %v474
      %v504 = vmul.f32 %v438, %v478
      %v505 = vmul.f32 %v443, %v474
      %v506 = vmul.f32 %v443, %v478
      %v507 = vmul.f32 %v448, %v474
      %v508 = vmul.f32 %v448, %v478
      %v509 = vmul.f32 %v453, %v474
      %v510 = vmul.f32 %v453, %v478
      %v511 = vmul.f32 %v458, %v474
      %v512 = vmul.f32 %v458, %v478
      %v513 = vmul.f32 %v463, %v474
      %v514 = vmul.f32 %v463, %v478
      %v515 = vmul.f32 %v468, %v474
      %v516 = vmul.f32 %v468, %v478
      %517 = vst [vmem:[#allocation2 + $0x8] sm:$0xff] %v497
      %518 = vst [vmem:[#allocation2 + $0x10] sm:$0xff] %v498
      %519 = vst [vmem:[#allocation2 + $0x28] sm:$0xff] %v499
      %520 = vst [vmem:[#allocation2 + $0x30] sm:$0xff] %v500
      %v521 = vsel %vm359, 1, 0
      %v522 = vsel %vm360, 1, 0
      %vm523 = vcmp.eq.s32.totalorder %v521, 1
      %vm524 = vcmp.eq.s32.totalorder %v522, 1
      %v525 = vsel %vm523, %v481, 0.0
      %v526 = vsel %vm524, %v482, 0.0
      %v527 = vsel %vm523, %v483, 0.0
      %v528 = vsel %vm524, %v484, 0.0
      %v529 = vld [vmem:[#allocation2 + $0x8] sm:$0xff]
      %v530 = vld [vmem:[#allocation2 + $0x10] sm:$0xff]
      %v531 = vld [vmem:[#allocation2 + $0x18] sm:$0xff]
      %v532 = vld [vmem:[#allocation2 + $0x28] sm:$0xff]
      %v533 = vld [vmem:[#allocation2 + $0x30] sm:$0xff]
      %v534 = vld [vmem:[#allocation2 + $0x38] sm:$0xff]
      %539 = vrot.lane.b32.xlu0 %v525, 17
      %v540 = vpop.permute.xlu0 %539
      %541 = vrot.lane.b32.xlu0 %v526, 17
      %v542 = vpop.permute.xlu0 %541
      %543 = vrot.lane.b32.xlu0 %v527, 17
      %v544 = vpop.permute.xlu0 %543
      %545 = vrot.lane.b32.xlu0 %v528, 17
      %v546 = vpop.permute.xlu0 %545
      %vm547 = vcmask 138240
      %v548 = vsel %vm547, %v540, %v542
      %v549 = vsel %vm547, %v544, %v546
      %v556 = vadd.f32 %v529, %v540
      %v557 = vadd.f32 %v530, %v548
      %v558 = vadd.f32 %v531, %v542
      %v559 = vadd.f32 %v532, %v544
      %v560 = vadd.f32 %v533, %v549
      %v561 = vadd.f32 %v534, %v546
      %vm562 = vcmask 1047688
      %563 = vst.msk [vmem:[#allocation2 + $0x8] sm:$0xff] %vm562, %v556
      %564 = vst [vmem:[#allocation2 + $0x10] sm:$0xff] %v557
      %565 = vst.msk [vmem:[#allocation2 + $0x18] sm:$0xff] %vm547, %v558
      %566 = vst.msk [vmem:[#allocation2 + $0x28] sm:$0xff] %vm562, %v559
      %567 = vst [vmem:[#allocation2 + $0x30] sm:$0xff] %v560
      %568 = vst.msk [vmem:[#allocation2 + $0x38] sm:$0xff] %vm547, %v561
      %v569 = vld [vmem:[#allocation2 + $0x8] sm:$0xff]
      %v570 = vld [vmem:[#allocation2 + $0x10] sm:$0xff]
      %v571 = vld [vmem:[#allocation2 + $0x18] sm:$0xff]
      %v572 = vld [vmem:[#allocation2 + $0x28] sm:$0xff]
      %v573 = vld [vmem:[#allocation2 + $0x30] sm:$0xff]
      %v574 = vld [vmem:[#allocation2 + $0x38] sm:$0xff]
      %579 = vrot.lane.b32.xlu0 %v485, 16
      %v580 = vpop.permute.xlu0 %579
      %581 = vrot.lane.b32.xlu0 %v486, 16
      %v582 = vpop.permute.xlu0 %581
      %583 = vrot.lane.b32.xlu0 %v487, 16
      %v584 = vpop.permute.xlu0 %583
      %585 = vrot.lane.b32.xlu0 %v488, 16
      %v586 = vpop.permute.xlu0 %585
      %vm587 = vcmask 130048
      %v588 = vsel %vm587, %v580, %v582
      %v589 = vsel %vm587, %v584, %v586
      %v596 = vadd.f32 %v569, %v580
      %v597 = vadd.f32 %v570, %v588
      %v598 = vadd.f32 %v571, %v582
      %v599 = vadd.f32 %v572, %v584
      %v600 = vadd.f32 %v573, %v589
      %v601 = vadd.f32 %v574, %v586
      %vm602 = vcmask 1047680
      %603 = vst.msk [vmem:[#allocation2 + $0x8] sm:$0xff] %vm602, %v596
      %604 = vst [vmem:[#allocation2 + $0x10] sm:$0xff] %v597
      %605 = vst.msk [vmem:[#allocation2 + $0x18] sm:$0xff] %vm587, %v598
      %606 = vst.msk [vmem:[#allocation2 + $0x28] sm:$0xff] %vm602, %v599
      %607 = vst [vmem:[#allocation2 + $0x30] sm:$0xff] %v600
      %608 = vst.msk [vmem:[#allocation2 + $0x38] sm:$0xff] %vm587, %v601
      %v609 = vsel %vm357, 1, 0
      %v610 = vsel %vm358, 1, 0
      %vm611 = vcmp.eq.s32.totalorder %v609, 1
      %vm612 = vcmp.eq.s32.totalorder %v610, 1
      %v613 = vsel %vm611, %v489, 0.0
      %v614 = vsel %vm612, %v490, 0.0
      %v615 = vsel %vm611, %v491, 0.0
      %v616 = vsel %vm612, %v492, 0.0
      %v617 = vld [vmem:[#allocation2 + $0x8] sm:$0xff]
      %v618 = vld [vmem:[#allocation2 + $0x10] sm:$0xff]
      %v619 = vld [vmem:[#allocation2 + $0x18] sm:$0xff]
      %v620 = vld [vmem:[#allocation2 + $0x28] sm:$0xff]
      %v621 = vld [vmem:[#allocation2 + $0x30] sm:$0xff]
      %v622 = vld [vmem:[#allocation2 + $0x38] sm:$0xff]
      %627 = vrot.lane.b32.xlu0 %v613, 15
      %v628 = vpop.permute.xlu0 %627
      %629 = vrot.lane.b32.xlu0 %v614, 15
      %v630 = vpop.permute.xlu0 %629
      %631 = vrot.lane.b32.xlu0 %v615, 15
      %v632 = vpop.permute.xlu0 %631
      %633 = vrot.lane.b32.xlu0 %v616, 15
      %v634 = vpop.permute.xlu0 %633
      %vm635 = vcmask 121856
      %v636 = vsel %vm635, %v628, %v630
      %v637 = vsel %vm635, %v632, %v634
      %v644 = vadd.f32 %v617, %v628
      %v645 = vadd.f32 %v618, %v636
      %v646 = vadd.f32 %v619, %v630
      %v647 = vadd.f32 %v620, %v632
      %v648 = vadd.f32 %v621, %v637
      %v649 = vadd.f32 %v622, %v634
      %vm650 = vcmask 1047672
      %651 = vst.msk [vmem:[#allocation2 + $0x8] sm:$0xff] %vm650, %v644
      %652 = vst [vmem:[#allocation2 + $0x10] sm:$0xff] %v645
      %653 = vst.msk [vmem:[#allocation2 + $0x18] sm:$0xff] %vm635, %v646
      %654 = vst.msk [vmem:[#allocation2 + $0x28] sm:$0xff] %vm650, %v647
      %655 = vst [vmem:[#allocation2 + $0x30] sm:$0xff] %v648
      %656 = vst.msk [vmem:[#allocation2 + $0x38] sm:$0xff] %vm635, %v649
      %v657 = vsel %vm523, %v493, 0.0
      %v658 = vsel %vm524, %v494, 0.0
      %v659 = vsel %vm523, %v495, 0.0
      %v660 = vsel %vm524, %v496, 0.0
      %v661 = vld [vmem:[#allocation2 + $0x8] sm:$0xff]
      %v662 = vld [vmem:[#allocation2 + $0x10] sm:$0xff]
      %v663 = vld [vmem:[#allocation2 + $0x18] sm:$0xff]
      %v664 = vld [vmem:[#allocation2 + $0x28] sm:$0xff]
      %v665 = vld [vmem:[#allocation2 + $0x30] sm:$0xff]
      %v666 = vld [vmem:[#allocation2 + $0x38] sm:$0xff]
      %671 = vrot.lane.b32.xlu0 %v657, 1
      %v672 = vpop.permute.xlu0 %671
      %673 = vrot.lane.b32.xlu0 %v658, 1
      %v674 = vpop.permute.xlu0 %673
      %675 = vrot.lane.b32.xlu0 %v659, 1
      %v676 = vpop.permute.xlu0 %675
      %677 = vrot.lane.b32.xlu0 %v660, 1
      %v678 = vpop.permute.xlu0 %677
      %vm679 = vcmask 7168
      %v680 = vsel %vm679, %v672, %v674
      %v681 = vsel %vm679, %v676, %v678
      %v688 = vadd.f32 %v661, %v672
      %v689 = vadd.f32 %v662, %v680
      %v690 = vadd.f32 %v663, %v674
      %v691 = vadd.f32 %v664, %v676
      %v692 = vadd.f32 %v665, %v681
      %v693 = vadd.f32 %v666, %v678
      %vm694 = vcmask 1047560
      %695 = vst.msk [vmem:[#allocation2 + $0x8] sm:$0xff] %vm694, %v688
      %696 = vst [vmem:[#allocation2 + $0x10] sm:$0xff] %v689
      %697 = vst.msk [vmem:[#allocation2 + $0x18] sm:$0xff] %vm679, %v690
      %698 = vst.msk [vmem:[#allocation2 + $0x28] sm:$0xff] %vm694, %v691
      %699 = vst [vmem:[#allocation2 + $0x30] sm:$0xff] %v692
      %700 = vst.msk [vmem:[#allocation2 + $0x38] sm:$0xff] %vm679, %v693
      %v701 = vsel %vm611, %v501, 0.0
      %v702 = vsel %vm612, %v502, 0.0
      %v703 = vsel %vm611, %v503, 0.0
      %v704 = vsel %vm612, %v504, 0.0
      %v705 = vld [vmem:[#allocation2] sm:$0xff]
      %v706 = vld [vmem:[#allocation2 + $0x8] sm:$0xff]
      %v707 = vld [vmem:[#allocation2 + $0x10] sm:$0xff]
      %v708 = vld [vmem:[#allocation2 + $0x20] sm:$0xff]
      %v709 = vld [vmem:[#allocation2 + $0x28] sm:$0xff]
      %v710 = vld [vmem:[#allocation2 + $0x30] sm:$0xff]
      %715 = vrot.lane.b32.xlu0 %v701, 127
      %v716 = vpop.permute.xlu0 %715
      %717 = vrot.lane.b32.xlu0 %v702, 127
      %v718 = vpop.permute.xlu0 %717
      %719 = vrot.lane.b32.xlu0 %v703, 127
      %v720 = vpop.permute.xlu0 %719
      %721 = vrot.lane.b32.xlu0 %v704, 127
      %v722 = vpop.permute.xlu0 %721
      %vm723 = vcmask 1039360
      %v724 = vsel %vm723, %v716, %v718
      %v725 = vsel %vm723, %v720, %v722
      %v732 = vadd.f32 %v705, %v716
      %v733 = vadd.f32 %v706, %v724
      %v734 = vadd.f32 %v707, %v718
      %v735 = vadd.f32 %v708, %v720
      %v736 = vadd.f32 %v709, %v725
      %v737 = vadd.f32 %v710, %v722
      %vm738 = vcmask 1048568
      %739 = vst.msk [vmem:[#allocation2] sm:$0xff] %vm738, %v732
      %740 = vst [vmem:[#allocation2 + $0x8] sm:$0xff] %v733
      %741 = vst.msk [vmem:[#allocation2 + $0x10] sm:$0xff] %vm723, %v734
      %742 = vst.msk [vmem:[#allocation2 + $0x20] sm:$0xff] %vm738, %v735
      %743 = vst [vmem:[#allocation2 + $0x28] sm:$0xff] %v736
      %744 = vst.msk [vmem:[#allocation2 + $0x30] sm:$0xff] %vm723, %v737
      %v745 = vsel %vm523, %v505, 0.0
      %v746 = vsel %vm524, %v506, 0.0
      %v747 = vsel %vm523, %v507, 0.0
      %v748 = vsel %vm524, %v508, 0.0
      %v749 = vld [vmem:[#allocation2] sm:$0xff]
      %v750 = vld [vmem:[#allocation2 + $0x8] sm:$0xff]
      %v751 = vld [vmem:[#allocation2 + $0x10] sm:$0xff]
      %v752 = vld [vmem:[#allocation2 + $0x20] sm:$0xff]
      %v753 = vld [vmem:[#allocation2 + $0x28] sm:$0xff]
      %v754 = vld [vmem:[#allocation2 + $0x30] sm:$0xff]
      %759 = vrot.lane.b32.xlu0 %v745, 113
      %v760 = vpop.permute.xlu0 %759
      %761 = vrot.lane.b32.xlu0 %v746, 113
      %v762 = vpop.permute.xlu0 %761
      %763 = vrot.lane.b32.xlu0 %v747, 113
      %v764 = vpop.permute.xlu0 %763
      %765 = vrot.lane.b32.xlu0 %v748, 113
      %v766 = vpop.permute.xlu0 %765
      %vm767 = vcmask 924672
      %v768 = vsel %vm767, %v760, %v762
      %v769 = vsel %vm767, %v764, %v766
      %v776 = vadd.f32 %v749, %v760
      %v777 = vadd.f32 %v750, %v768
      %v778 = vadd.f32 %v751, %v762
      %v779 = vadd.f32 %v752, %v764
      %v780 = vadd.f32 %v753, %v769
      %v781 = vadd.f32 %v754, %v766
      %vm782 = vcmask 1048456
      %783 = vst.msk [vmem:[#allocation2] sm:$0xff] %vm782, %v776
      %784 = vst [vmem:[#allocation2 + $0x8] sm:$0xff] %v777
      %785 = vst.msk [vmem:[#allocation2 + $0x10] sm:$0xff] %vm767, %v778
      %786 = vst.msk [vmem:[#allocation2 + $0x20] sm:$0xff] %vm782, %v779
      %787 = vst [vmem:[#allocation2 + $0x28] sm:$0xff] %v780
      %788 = vst.msk [vmem:[#allocation2 + $0x30] sm:$0xff] %vm767, %v781
      %v789 = vld [vmem:[#allocation2] sm:$0xff]
      %v790 = vld [vmem:[#allocation2 + $0x8] sm:$0xff]
      %v791 = vld [vmem:[#allocation2 + $0x10] sm:$0xff]
      %v792 = vld [vmem:[#allocation2 + $0x20] sm:$0xff]
      %v793 = vld [vmem:[#allocation2 + $0x28] sm:$0xff]
      %v794 = vld [vmem:[#allocation2 + $0x30] sm:$0xff]
      %799 = vrot.lane.b32.xlu0 %v509, 112
      %v800 = vpop.permute.xlu0 %799
      %801 = vrot.lane.b32.xlu0 %v510, 112
      %v802 = vpop.permute.xlu0 %801
      %803 = vrot.lane.b32.xlu0 %v511, 112
      %v804 = vpop.permute.xlu0 %803
      %805 = vrot.lane.b32.xlu0 %v512, 112
      %v806 = vpop.permute.xlu0 %805
      %vm807 = vcmask 916480
      %v808 = vsel %vm807, %v800, %v802
      %v809 = vsel %vm807, %v804, %v806
      %v816 = vadd.f32 %v789, %v800
      %v817 = vadd.f32 %v790, %v808
      %v818 = vadd.f32 %v791, %v802
      %v819 = vadd.f32 %v792, %v804
      %v820 = vadd.f32 %v793, %v809
      %v821 = vadd.f32 %v794, %v806
      %vm822 = vcmask 1048448
      %823 = vst.msk [vmem:[#allocation2] sm:$0xff] %vm822, %v816
      %824 = vst [vmem:[#allocation2 + $0x8] sm:$0xff] %v817
      %825 = vst.msk [vmem:[#allocation2 + $0x10] sm:$0xff] %vm807, %v818
      %826 = vst.msk [vmem:[#allocation2 + $0x20] sm:$0xff] %vm822, %v819
      %827 = vst [vmem:[#allocation2 + $0x28] sm:$0xff] %v820
      %828 = vst.msk [vmem:[#allocation2 + $0x30] sm:$0xff] %vm807, %v821
      %v829 = vsel %vm611, %v513, 0.0
      %v830 = vsel %vm612, %v514, 0.0
      %v831 = vsel %vm611, %v515, 0.0
      %v832 = vsel %vm612, %v516, 0.0
      %v833 = vld [vmem:[#allocation2] sm:$0xff]
      %v834 = vld [vmem:[#allocation2 + $0x8] sm:$0xff]
      %v835 = vld [vmem:[#allocation2 + $0x10] sm:$0xff]
      %v836 = vld [vmem:[#allocation2 + $0x20] sm:$0xff]
      %v837 = vld [vmem:[#allocation2 + $0x28] sm:$0xff]
      %v838 = vld [vmem:[#allocation2 + $0x30] sm:$0xff]
      %843 = vrot.lane.b32.xlu0 %v829, 111
      %v844 = vpop.permute.xlu0 %843
      %845 = vrot.lane.b32.xlu0 %v830, 111
      %v846 = vpop.permute.xlu0 %845
      %847 = vrot.lane.b32.xlu0 %v831, 111
      %v848 = vpop.permute.xlu0 %847
      %849 = vrot.lane.b32.xlu0 %v832, 111
      %v850 = vpop.permute.xlu0 %849
      %vm851 = vcmask 908288
      %v852 = vsel %vm851, %v844, %v846
      %v853 = vsel %vm851, %v848, %v850
      %v860 = vadd.f32 %v833, %v844
      %v861 = vadd.f32 %v834, %v852
      %v862 = vadd.f32 %v835, %v846
      %v863 = vadd.f32 %v836, %v848
      %v864 = vadd.f32 %v837, %v853
      %v865 = vadd.f32 %v838, %v850
      %vm866 = vcmask 1048440
      %867 = vst.msk [vmem:[#allocation2] sm:$0xff] %vm866, %v860
      %868 = vst [vmem:[#allocation2 + $0x8] sm:$0xff] %v861
      %869 = vst.msk [vmem:[#allocation2 + $0x10] sm:$0xff] %vm851, %v862
      %870 = vst.msk [vmem:[#allocation2 + $0x20] sm:$0xff] %vm866, %v863
      %871 = vst [vmem:[#allocation2 + $0x28] sm:$0xff] %v864
      %872 = vst.msk [vmem:[#allocation2 + $0x30] sm:$0xff] %vm851, %v865
      %v873 = vld [vmem:[#allocation2 + $0x8] sm:$0xff]
      %v874 = vld [vmem:[#allocation2 + $0x10] sm:$0xff]
      %v875 = vld [vmem:[#allocation2 + $0x28] sm:$0xff]
      %v876 = vld [vmem:[#allocation2 + $0x30] sm:$0xff]
      %v877 = vld [vmem:[%s2] sm:$0xff]
      %v878 = vld [vmem:[%s2 + $0x8] sm:$0xff]
      %880 = vset.pattern.permute.xlu0 0
      %881 = vperm.xlu0 %880, %v877
      %v882 = vpop.permute.xlu0 %881
      %885 = vset.pattern.permute.xlu0 0
      %886 = vperm.xlu0 %885, %v878
      %v887 = vpop.permute.xlu0 %886
      %v889 = vadd.f32 %v873, %v882
      %v890 = vadd.f32 %v874, %v882
      %v891 = vadd.f32 %v875, %v887
      %v892 = vadd.f32 %v876, %v887
      %v893 = vmax.f32 %v889, 0.0
      %v894 = vmax.f32 %v890, 0.0
      %v895 = vmax.f32 %v891, 0.0
      %v896 = vmax.f32 %v892, 0.0
      %897 = vst [vmem:[%s329] sm:$0xff] %v893
      %898 = vst [vmem:[%s329 + $0x8] sm:$0xff] %v894
      %899 = vst [vmem:[%s329 + $0x10] sm:$0xff] %v895
      %900 = vst [vmem:[%s329 + $0x18] sm:$0xff] %v896
      %v901 = vld [vmem:[%s329] sm:$0xff]
      %v902 = vld [vmem:[%s329 + $0x8] sm:$0xff]
      %v903 = vld [vmem:[%s329 + $0x10] sm:$0xff]
      %v904 = vld [vmem:[%s329 + $0x18] sm:$0xff]
      %v905 = vld [vmem:[%s3] sm:$0xff]
      %v906 = vld [vmem:[%s3 + $0x8] sm:$0xff]
      %v907 = vld [vmem:[%s3 + $0x10] sm:$0xff]
      %v908 = vld [vmem:[%s3 + $0x18] sm:$0xff]
      %v909 = vld [vmem:[%s3 + $0x20] sm:$0xff]
      %v910 = vld [vmem:[%s3 + $0x28] sm:$0xff]
      %v911 = vld [vmem:[%s3 + $0x30] sm:$0xff]
      %v912 = vld [vmem:[%s3 + $0x38] sm:$0xff]
      %v913 = vld [vmem:[%s3 + $0x40] sm:$0xff]
      %v914 = vld [vmem:[%s3 + $0x48] sm:$0xff]
      %v915 = vld [vmem:[%s3 + $0x50] sm:$0xff]
      %v916 = vld [vmem:[%s3 + $0x58] sm:$0xff]
      %v917 = vld [vmem:[%s3 + $0x60] sm:$0xff]
      %v918 = vld [vmem:[%s3 + $0x68] sm:$0xff]
      %v919 = vld [vmem:[%s3 + $0x70] sm:$0xff]
      %v920 = vld [vmem:[%s3 + $0x78] sm:$0xff]
      %v921 = vld [vmem:[%s3 + $0x80] sm:$0xff]
      %v922 = vld [vmem:[%s3 + $0x88] sm:$0xff]
      %v924 = vsel %vm587, %v905, 0
      %v927 = vsel %vm587, %v906, 0
      %v930 = vsel %vm587, %v907, 0
      %v933 = vsel %vm587, %v908, 0
      %v936 = vsel %vm587, %v909, 0
      %v939 = vsel %vm587, %v910, 0
      %v942 = vsel %vm587, %v911, 0
      %v945 = vsel %vm587, %v912, 0
      %v948 = vsel %vm587, %v913, 0
      %v951 = vsel %vm587, %v914, 0
      %v954 = vsel %vm587, %v915, 0
      %v957 = vsel %vm587, %v916, 0
      %v960 = vsel %vm587, %v917, 0
      %v963 = vsel %vm587, %v918, 0
      %v966 = vsel %vm587, %v919, 0
      %v969 = vsel %vm587, %v920, 0
      %v972 = vsel %vm587, %v921, 0
      %v975 = vsel %vm587, %v922, 0
      %977 = vmatprep.subr.mxu0 %v902
      %978 = vmatpush1.msra.mxu0 %v901
      %979 = vmatprep.subr.mxu0 %v904
      %980 = vmatpush1.msra.mxu0 %v903
      %981 = vmatprep.subr.mxu0 0.0
      %982 = vmatpush1.msra.mxu0 0.0
      %983 = vmatprep.subr.mxu0 0.0
      %984 = vmatpush1.msra.mxu0 0.0
      %985 = vmatprep.subr.mxu0 0.0
      %986 = vmatpush1.msra.mxu0 0.0
      %987 = vmatprep.subr.mxu0 0.0
      %988 = vmatpush1.msra.mxu0 0.0
      %989 = vmatprep.subr.mxu0 0.0
      %990 = vmatpush1.msra.mxu0 0.0
      %991 = vmatprep.subr.mxu0 0.0
      %992 = vmatpush1.msra.mxu0 0.0
      %993 = vmatprep.subr.mxu0 0.0
      %994 = vmatpush1.msra.mxu0 0.0
      %995 = vmatprep.subr.mxu0 0.0
      %996 = vmatpush1.msra.mxu0 0.0
      %997 = vmatprep.subr.mxu0 0.0
      %998 = vmatpush1.msra.mxu0 0.0
      %999 = vmatprep.subr.mxu0 0.0
      %1000 = vmatpush1.msra.mxu0 0.0
      %1001 = vmatprep.subr.mxu0 0.0
      %1002 = vmatpush1.msra.mxu0 0.0
      %1003 = vmatprep.subr.mxu0 0.0
      %1004 = vmatpush1.msra.mxu0 0.0
      %1005 = vmatprep.subr.mxu0 0.0
      %1006 = vmatpush1.msra.mxu0 0.0
      %1007 = vmatprep.subr.mxu0 0.0
      %1008 = vmatpush1.msra.mxu0 0.0
      %1009 = vmatprep.subr.mxu0 0.0
      %1010 = vmatpush1.msra.mxu0 0.0
      %1011 = vmatprep.subr.mxu0 0.0
      %1012 = vmatpush1.msra.mxu0 0.0
      %1013 = vmatprep.subr.mxu0 0.0
      %1014 = vmatpush1.msra.mxu0 0.0
      %1015 = vmatprep.subr.mxu0 0.0
      %1016 = vmatpush1.msra.mxu0 0.0
      %1017 = vmatprep.subr.mxu0 0.0
      %1018 = vmatpush1.msra.mxu0 0.0
      %1019 = vmatprep.subr.mxu0 0.0
      %1020 = vmatpush1.msra.mxu0 0.0
      %1021 = vmatprep.subr.mxu0 0.0
      %1022 = vmatpush1.msra.mxu0 0.0
      %1023 = vmatprep.subr.mxu0 0.0
      %1024 = vmatpush1.msra.mxu0 0.0
      %1025 = vmatprep.subr.mxu0 0.0
      %1026 = vmatpush1.msra.mxu0 0.0
      %1027 = vmatprep.subr.mxu0 0.0
      %1028 = vmatpush1.msra.mxu0 0.0
      %1029 = vmatprep.subr.mxu0 0.0
      %1030 = vmatpush1.msra.mxu0 0.0
      %1031 = vmatprep.subr.mxu0 0.0
      %1032 = vmatpush1.msra.mxu0 0.0
      %1033 = vmatprep.subr.mxu0 0.0
      %1034 = vmatpush1.msra.mxu0 0.0
      %1035 = vmatprep.subr.mxu0 0.0
      %1036 = vmatpush1.msra.mxu0 0.0
      %1037 = vmatprep.subr.mxu0 0.0
      %1038 = vmatpush1.msra.mxu0 0.0
      %1039 = vmatprep.subr.mxu0 0.0
      %1040 = vmatpush1.msra.mxu0 0.0
      %1041 = vmatprep.mubr.f32.mxu0 0.0
      %1042 = vmatmul.mubr.f32.gmra.mrb[0].mxu0 %v924
      %v1043 = vpop.f32.mrb[0].mxu0
      %v1044 = vadd.f32 0.0, %v1043
      %v1045 = vpop.f32.mrb[0].mxu0
      %v1046 = vadd.f32 0.0, %v1045
      %1047 = vmatprep.mubr.f32.mxu0 0.0
      %1048 = vmatmul.mubr.f32.gmra.mrb[0].mxu0 %v927
      %v1049 = vpop.f32.mrb[0].mxu0
      %v1050 = vadd.f32 0.0, %v1049
      %v1051 = vpop.f32.mrb[0].mxu0
      %v1052 = vadd.f32 0.0, %v1051
      %1053 = vmatprep.mubr.f32.mxu0 0.0
      %1054 = vmatmul.mubr.f32.gmra.mrb[0].mxu0 %v930
      %v1055 = vpop.f32.mrb[0].mxu0
      %v1056 = vadd.f32 0.0, %v1055
      %v1057 = vpop.f32.mrb[0].mxu0
      %v1058 = vadd.f32 0.0, %v1057
      %1059 = vmatprep.mubr.f32.mxu0 0.0
      %1060 = vmatmul.mubr.f32.gmra.mrb[0].mxu0 %v933
      %v1061 = vpop.f32.mrb[0].mxu0
      %v1062 = vadd.f32 0.0, %v1061
      %v1063 = vpop.f32.mrb[0].mxu0
      %v1064 = vadd.f32 0.0, %v1063
      %1065 = vmatprep.mubr.f32.mxu0 0.0
      %1066 = vmatmul.mubr.f32.gmra.mrb[0].mxu0 %v936
      %v1067 = vpop.f32.mrb[0].mxu0
      %v1068 = vadd.f32 0.0, %v1067
      %v1069 = vpop.f32.mrb[0].mxu0
      %v1070 = vadd.f32 0.0, %v1069
      %1071 = vmatprep.mubr.f32.mxu0 0.0
      %1072 = vmatmul.mubr.f32.gmra.mrb[0].mxu0 %v939
      %v1073 = vpop.f32.mrb[0].mxu0
      %v1074 = vadd.f32 0.0, %v1073
      %v1075 = vpop.f32.mrb[0].mxu0
      %v1076 = vadd.f32 0.0, %v1075
      %1077 = vmatprep.mubr.f32.mxu0 0.0
      %1078 = vmatmul.mubr.f32.gmra.mrb[0].mxu0 %v942
      %v1079 = vpop.f32.mrb[0].mxu0
      %v1080 = vadd.f32 0.0, %v1079
      %v1081 = vpop.f32.mrb[0].mxu0
      %v1082 = vadd.f32 0.0, %v1081
      %1083 = vmatprep.mubr.f32.mxu0 0.0
      %1084 = vmatmul.mubr.f32.gmra.mrb[0].mxu0 %v945
      %v1085 = vpop.f32.mrb[0].mxu0
      %v1086 = vadd.f32 0.0, %v1085
      %v1087 = vpop.f32.mrb[0].mxu0
      %v1088 = vadd.f32 0.0, %v1087
      %1089 = vmatprep.mubr.f32.mxu0 0.0
      %1090 = vmatmul.mubr.f32.gmra.mrb[0].mxu0 %v948
      %v1091 = vpop.f32.mrb[0].mxu0
      %v1092 = vadd.f32 0.0, %v1091
      %v1093 = vpop.f32.mrb[0].mxu0
      %v1094 = vadd.f32 0.0, %v1093
      %1095 = vmatprep.mubr.f32.mxu0 0.0
      %1096 = vmatmul.mubr.f32.gmra.mrb[0].mxu0 %v951
      %v1097 = vpop.f32.mrb[0].mxu0
      %v1098 = vadd.f32 0.0, %v1097
      %v1099 = vpop.f32.mrb[0].mxu0
      %v1100 = vadd.f32 0.0, %v1099
      %1101 = vmatprep.mubr.f32.mxu0 0.0
      %1102 = vmatmul.mubr.f32.gmra.mrb[0].mxu0 %v954
      %v1103 = vpop.f32.mrb[0].mxu0
      %v1104 = vadd.f32 0.0, %v1103
      %v1105 = vpop.f32.mrb[0].mxu0
      %v1106 = vadd.f32 0.0, %v1105
      %1107 = vmatprep.mubr.f32.mxu0 0.0
      %1108 = vmatmul.mubr.f32.gmra.mrb[0].mxu0 %v957
      %v1109 = vpop.f32.mrb[0].mxu0
      %v1110 = vadd.f32 0.0, %v1109
      %v1111 = vpop.f32.mrb[0].mxu0
      %v1112 = vadd.f32 0.0, %v1111
      %1113 = vmatprep.mubr.f32.mxu0 0.0
      %1114 = vmatmul.mubr.f32.gmra.mrb[0].mxu0 %v960
      %v1115 = vpop.f32.mrb[0].mxu0
      %v1116 = vadd.f32 0.0, %v1115
      %v1117 = vpop.f32.mrb[0].mxu0
      %v1118 = vadd.f32 0.0, %v1117
      %1119 = vmatprep.mubr.f32.mxu0 0.0
      %1120 = vmatmul.mubr.f32.gmra.mrb[0].mxu0 %v963
      %v1121 = vpop.f32.mrb[0].mxu0
      %v1122 = vadd.f32 0.0, %v1121
      %v1123 = vpop.f32.mrb[0].mxu0
      %v1124 = vadd.f32 0.0, %v1123
      %1125 = vmatprep.mubr.f32.mxu0 0.0
      %1126 = vmatmul.mubr.f32.gmra.mrb[0].mxu0 %v966
      %v1127 = vpop.f32.mrb[0].mxu0
      %v1128 = vadd.f32 0.0, %v1127
      %v1129 = vpop.f32.mrb[0].mxu0
      %v1130 = vadd.f32 0.0, %v1129
      %1131 = vmatprep.mubr.f32.mxu0 0.0
      %1132 = vmatmul.mubr.f32.gmra.mrb[0].mxu0 %v969
      %v1133 = vpop.f32.mrb[0].mxu0
      %v1134 = vadd.f32 0.0, %v1133
      %v1135 = vpop.f32.mrb[0].mxu0
      %v1136 = vadd.f32 0.0, %v1135
      %1137 = vmatprep.mubr.f32.mxu0 0.0
      %1138 = vmatmul.mubr.f32.gmra.mrb[0].mxu0 %v972
      %v1139 = vpop.f32.mrb[0].mxu0
      %v1140 = vadd.f32 0.0, %v1139
      %v1141 = vpop.f32.mrb[0].mxu0
      %v1142 = vadd.f32 0.0, %v1141
      %1143 = vmatprep.mubr.f32.mxu0 0.0
      %1144 = vmatmul.mubr.f32.gmra.mrb[0].mxu0 %v975
      %v1145 = vpop.f32.mrb[0].mxu0
      %v1146 = vadd.f32 0.0, %v1145
      %v1147 = vpop.f32.mrb[0].mxu0
      %v1148 = vadd.f32 0.0, %v1147
      %1149 = vdwg.mxu0
      %1150 = vst [vmem:[#allocation2 + $0x8] sm:$0xff] %v1092
      %1151 = vst [vmem:[#allocation2 + $0x10] sm:$0xff] %v1094
      %1152 = vst [vmem:[#allocation2 + $0x28] sm:$0xff] %v1098
      %1153 = vst [vmem:[#allocation2 + $0x30] sm:$0xff] %v1100
      %v1154 = vsel %vm523, %v1044, 0.0
      %v1155 = vsel %vm524, %v1046, 0.0
      %v1156 = vsel %vm523, %v1050, 0.0
      %v1157 = vsel %vm524, %v1052, 0.0
      %v1158 = vld [vmem:[#allocation2 + $0x8] sm:$0xff]
      %v1159 = vld [vmem:[#allocation2 + $0x10] sm:$0xff]
      %v1160 = vld [vmem:[#allocation2 + $0x18] sm:$0xff]
      %v1161 = vld [vmem:[#allocation2 + $0x28] sm:$0xff]
      %v1162 = vld [vmem:[#allocation2 + $0x30] sm:$0xff]
      %v1163 = vld [vmem:[#allocation2 + $0x38] sm:$0xff]
      %1168 = vrot.lane.b32.xlu0 %v1154, 17
      %v1169 = vpop.permute.xlu0 %1168
      %1170 = vrot.lane.b32.xlu0 %v1155, 17
      %v1171 = vpop.permute.xlu0 %1170
      %1172 = vrot.lane.b32.xlu0 %v1156, 17
      %v1173 = vpop.permute.xlu0 %1172
      %1174 = vrot.lane.b32.xlu0 %v1157, 17
      %v1175 = vpop.permute.xlu0 %1174
      %v1176 = vsel %vm547, %v1169, %v1171
      %v1177 = vsel %vm547, %v1173, %v1175
      %v1184 = vadd.f32 %v1158, %v1169
      %v1185 = vadd.f32 %v1159, %v1176
      %v1186 = vadd.f32 %v1160, %v1171
      %v1187 = vadd.f32 %v1161, %v1173
      %v1188 = vadd.f32 %v1162, %v1177
      %v1189 = vadd.f32 %v1163, %v1175
      %1190 = vst.msk [vmem:[#allocation2 + $0x8] sm:$0xff] %vm562, %v1184
      %1191 = vst [vmem:[#allocation2 + $0x10] sm:$0xff] %v1185
      %1192 = vst.msk [vmem:[#allocation2 + $0x18] sm:$0xff] %vm547, %v1186
      %1193 = vst.msk [vmem:[#allocation2 + $0x28] sm:$0xff] %vm562, %v1187
      %1194 = vst [vmem:[#allocation2 + $0x30] sm:$0xff] %v1188
      %1195 = vst.msk [vmem:[#allocation2 + $0x38] sm:$0xff] %vm547, %v1189
      %v1196 = vld [vmem:[#allocation2 + $0x8] sm:$0xff]
      %v1197 = vld [vmem:[#allocation2 + $0x10] sm:$0xff]
      %v1198 = vld [vmem:[#allocation2 + $0x18] sm:$0xff]
      %v1199 = vld [vmem:[#allocation2 + $0x28] sm:$0xff]
      %v1200 = vld [vmem:[#allocation2 + $0x30] sm:$0xff]
      %v1201 = vld [vmem:[#allocation2 + $0x38] sm:$0xff]
      %1206 = vrot.lane.b32.xlu0 %v1056, 16
      %v1207 = vpop.permute.xlu0 %1206
      %1208 = vrot.lane.b32.xlu0 %v1058, 16
      %v1209 = vpop.permute.xlu0 %1208
      %1210 = vrot.lane.b32.xlu0 %v1062, 16
      %v1211 = vpop.permute.xlu0 %1210
      %1212 = vrot.lane.b32.xlu0 %v1064, 16
      %v1213 = vpop.permute.xlu0 %1212
      %v1214 = vsel %vm587, %v1207, %v1209
      %v1215 = vsel %vm587, %v1211, %v1213
      %v1222 = vadd.f32 %v1196, %v1207
      %v1223 = vadd.f32 %v1197, %v1214
      %v1224 = vadd.f32 %v1198, %v1209
      %v1225 = vadd.f32 %v1199, %v1211
      %v1226 = vadd.f32 %v1200, %v1215
      %v1227 = vadd.f32 %v1201, %v1213
      %1228 = vst.msk [vmem:[#allocation2 + $0x8] sm:$0xff] %vm602, %v1222
      %1229 = vst [vmem:[#allocation2 + $0x10] sm:$0xff] %v1223
      %1230 = vst.msk [vmem:[#allocation2 + $0x18] sm:$0xff] %vm587, %v1224
      %1231 = vst.msk [vmem:[#allocation2 + $0x28] sm:$0xff] %vm602, %v1225
      %1232 = vst [vmem:[#allocation2 + $0x30] sm:$0xff] %v1226
      %1233 = vst.msk [vmem:[#allocation2 + $0x38] sm:$0xff] %vm587, %v1227
      %v1234 = vsel %vm611, %v1068, 0.0
      %v1235 = vsel %vm612, %v1070, 0.0
      %v1236 = vsel %vm611, %v1074, 0.0
      %v1237 = vsel %vm612, %v1076, 0.0
      %v1238 = vld [vmem:[#allocation2 + $0x8] sm:$0xff]
      %v1239 = vld [vmem:[#allocation2 + $0x10] sm:$0xff]
      %v1240 = vld [vmem:[#allocation2 + $0x18] sm:$0xff]
      %v1241 = vld [vmem:[#allocation2 + $0x28] sm:$0xff]
      %v1242 = vld [vmem:[#allocation2 + $0x30] sm:$0xff]
      %v1243 = vld [vmem:[#allocation2 + $0x38] sm:$0xff]
      %1248 = vrot.lane.b32.xlu0 %v1234, 15
      %v1249 = vpop.permute.xlu0 %1248
      %1250 = vrot.lane.b32.xlu0 %v1235, 15
      %v1251 = vpop.permute.xlu0 %1250
      %1252 = vrot.lane.b32.xlu0 %v1236, 15
      %v1253 = vpop.permute.xlu0 %1252
      %1254 = vrot.lane.b32.xlu0 %v1237, 15
      %v1255 = vpop.permute.xlu0 %1254
      %v1256 = vsel %vm635, %v1249, %v1251
      %v1257 = vsel %vm635, %v1253, %v1255
      %v1264 = vadd.f32 %v1238, %v1249
      %v1265 = vadd.f32 %v1239, %v1256
      %v1266 = vadd.f32 %v1240, %v1251
      %v1267 = vadd.f32 %v1241, %v1253
      %v1268 = vadd.f32 %v1242, %v1257
      %v1269 = vadd.f32 %v1243, %v1255
      %1270 = vst.msk [vmem:[#allocation2 + $0x8] sm:$0xff] %vm650, %v1264
      %1271 = vst [vmem:[#allocation2 + $0x10] sm:$0xff] %v1265
      %1272 = vst.msk [vmem:[#allocation2 + $0x18] sm:$0xff] %vm635, %v1266
      %1273 = vst.msk [vmem:[#allocation2 + $0x28] sm:$0xff] %vm650, %v1267
      %1274 = vst [vmem:[#allocation2 + $0x30] sm:$0xff] %v1268
      %1275 = vst.msk [vmem:[#allocation2 + $0x38] sm:$0xff] %vm635, %v1269
      %v1276 = vsel %vm523, %v1080, 0.0
      %v1277 = vsel %vm524, %v1082, 0.0
      %v1278 = vsel %vm523, %v1086, 0.0
      %v1279 = vsel %vm524, %v1088, 0.0
      %v1280 = vld [vmem:[#allocation2 + $0x8] sm:$0xff]
      %v1281 = vld [vmem:[#allocation2 + $0x10] sm:$0xff]
      %v1282 = vld [vmem:[#allocation2 + $0x18] sm:$0xff]
      %v1283 = vld [vmem:[#allocation2 + $0x28] sm:$0xff]
      %v1284 = vld [vmem:[#allocation2 + $0x30] sm:$0xff]
      %v1285 = vld [vmem:[#allocation2 + $0x38] sm:$0xff]
      %1290 = vrot.lane.b32.xlu0 %v1276, 1
      %v1291 = vpop.permute.xlu0 %1290
      %1292 = vrot.lane.b32.xlu0 %v1277, 1
      %v1293 = vpop.permute.xlu0 %1292
      %1294 = vrot.lane.b32.xlu0 %v1278, 1
      %v1295 = vpop.permute.xlu0 %1294
      %1296 = vrot.lane.b32.xlu0 %v1279, 1
      %v1297 = vpop.permute.xlu0 %1296
      %v1298 = vsel %vm679, %v1291, %v1293
      %v1299 = vsel %vm679, %v1295, %v1297
      %v1306 = vadd.f32 %v1280, %v1291
      %v1307 = vadd.f32 %v1281, %v1298
      %v1308 = vadd.f32 %v1282, %v1293
      %v1309 = vadd.f32 %v1283, %v1295
      %v1310 = vadd.f32 %v1284, %v1299
      %v1311 = vadd.f32 %v1285, %v1297
      %1312 = vst.msk [vmem:[#allocation2 + $0x8] sm:$0xff] %vm694, %v1306
      %1313 = vst [vmem:[#allocation2 + $0x10] sm:$0xff] %v1307
      %1314 = vst.msk [vmem:[#allocation2 + $0x18] sm:$0xff] %vm679, %v1308
      %1315 = vst.msk [vmem:[#allocation2 + $0x28] sm:$0xff] %vm694, %v1309
      %1316 = vst [vmem:[#allocation2 + $0x30] sm:$0xff] %v1310
      %1317 = vst.msk [vmem:[#allocation2 + $0x38] sm:$0xff] %vm679, %v1311
      %v1318 = vsel %vm611, %v1104, 0.0
      %v1319 = vsel %vm612, %v1106, 0.0
      %v1320 = vsel %vm611, %v1110, 0.0
      %v1321 = vsel %vm612, %v1112, 0.0
      %v1322 = vld [vmem:[#allocation2] sm:$0xff]
      %v1323 = vld [vmem:[#allocation2 + $0x8] sm:$0xff]
      %v1324 = vld [vmem:[#allocation2 + $0x10] sm:$0xff]
      %v1325 = vld [vmem:[#allocation2 + $0x20] sm:$0xff]
      %v1326 = vld [vmem:[#allocation2 + $0x28] sm:$0xff]
      %v1327 = vld [vmem:[#allocation2 + $0x30] sm:$0xff]
      %1332 = vrot.lane.b32.xlu0 %v1318, 127
      %v1333 = vpop.permute.xlu0 %1332
      %1334 = vrot.lane.b32.xlu0 %v1319, 127
      %v1335 = vpop.permute.xlu0 %1334
      %1336 = vrot.lane.b32.xlu0 %v1320, 127
      %v1337 = vpop.permute.xlu0 %1336
      %1338 = vrot.lane.b32.xlu0 %v1321, 127
      %v1339 = vpop.permute.xlu0 %1338
      %v1340 = vsel %vm723, %v1333, %v1335
      %v1341 = vsel %vm723, %v1337, %v1339
      %v1348 = vadd.f32 %v1322, %v1333
      %v1349 = vadd.f32 %v1323, %v1340
      %v1350 = vadd.f32 %v1324, %v1335
      %v1351 = vadd.f32 %v1325, %v1337
      %v1352 = vadd.f32 %v1326, %v1341
      %v1353 = vadd.f32 %v1327, %v1339
      %1354 = vst.msk [vmem:[#allocation2] sm:$0xff] %vm738, %v1348
      %1355 = vst [vmem:[#allocation2 + $0x8] sm:$0xff] %v1349
      %1356 = vst.msk [vmem:[#allocation2 + $0x10] sm:$0xff] %vm723, %v1350
      %1357 = vst.msk [vmem:[#allocation2 + $0x20] sm:$0xff] %vm738, %v1351
      %1358 = vst [vmem:[#allocation2 + $0x28] sm:$0xff] %v1352
      %1359 = vst.msk [vmem:[#allocation2 + $0x30] sm:$0xff] %vm723, %v1353
      %v1360 = vsel %vm523, %v1116, 0.0
      %v1361 = vsel %vm524, %v1118, 0.0
      %v1362 = vsel %vm523, %v1122, 0.0
      %v1363 = vsel %vm524, %v1124, 0.0
      %v1364 = vld [vmem:[#allocation2] sm:$0xff]
      %v1365 = vld [vmem:[#allocation2 + $0x8] sm:$0xff]
      %v1366 = vld [vmem:[#allocation2 + $0x10] sm:$0xff]
      %v1367 = vld [vmem:[#allocation2 + $0x20] sm:$0xff]
      %v1368 = vld [vmem:[#allocation2 + $0x28] sm:$0xff]
      %v1369 = vld [vmem:[#allocation2 + $0x30] sm:$0xff]
      %1374 = vrot.lane.b32.xlu0 %v1360, 113
      %v1375 = vpop.permute.xlu0 %1374
      %1376 = vrot.lane.b32.xlu0 %v1361, 113
      %v1377 = vpop.permute.xlu0 %1376
      %1378 = vrot.lane.b32.xlu0 %v1362, 113
      %v1379 = vpop.permute.xlu0 %1378
      %1380 = vrot.lane.b32.xlu0 %v1363, 113
      %v1381 = vpop.permute.xlu0 %1380
      %v1382 = vsel %vm767, %v1375, %v1377
      %v1383 = vsel %vm767, %v1379, %v1381
      %v1390 = vadd.f32 %v1364, %v1375
      %v1391 = vadd.f32 %v1365, %v1382
      %v1392 = vadd.f32 %v1366, %v1377
      %v1393 = vadd.f32 %v1367, %v1379
      %v1394 = vadd.f32 %v1368, %v1383
      %v1395 = vadd.f32 %v1369, %v1381
      %1396 = vst.msk [vmem:[#allocation2] sm:$0xff] %vm782, %v1390
      %1397 = vst [vmem:[#allocation2 + $0x8] sm:$0xff] %v1391
      %1398 = vst.msk [vmem:[#allocation2 + $0x10] sm:$0xff] %vm767, %v1392
      %1399 = vst.msk [vmem:[#allocation2 + $0x20] sm:$0xff] %vm782, %v1393
      %1400 = vst [vmem:[#allocation2 + $0x28] sm:$0xff] %v1394
      %1401 = vst.msk [vmem:[#allocation2 + $0x30] sm:$0xff] %vm767, %v1395
      %v1402 = vld [vmem:[#allocation2] sm:$0xff]
      %v1403 = vld [vmem:[#allocation2 + $0x8] sm:$0xff]
      %v1404 = vld [vmem:[#allocation2 + $0x10] sm:$0xff]
      %v1405 = vld [vmem:[#allocation2 + $0x20] sm:$0xff]
      %v1406 = vld [vmem:[#allocation2 + $0x28] sm:$0xff]
      %v1407 = vld [vmem:[#allocation2 + $0x30] sm:$0xff]
      %1412 = vrot.lane.b32.xlu0 %v1128, 112
      %v1413 = vpop.permute.xlu0 %1412
      %1414 = vrot.lane.b32.xlu0 %v1130, 112
      %v1415 = vpop.permute.xlu0 %1414
      %1416 = vrot.lane.b32.xlu0 %v1134, 112
      %v1417 = vpop.permute.xlu0 %1416
      %1418 = vrot.lane.b32.xlu0 %v1136, 112
      %v1419 = vpop.permute.xlu0 %1418
      %v1420 = vsel %vm807, %v1413, %v1415
      %v1421 = vsel %vm807, %v1417, %v1419
      %v1428 = vadd.f32 %v1402, %v1413
      %v1429 = vadd.f32 %v1403, %v1420
      %v1430 = vadd.f32 %v1404, %v1415
      %v1431 = vadd.f32 %v1405, %v1417
      %v1432 = vadd.f32 %v1406, %v1421
      %v1433 = vadd.f32 %v1407, %v1419
      %1434 = vst.msk [vmem:[#allocation2] sm:$0xff] %vm822, %v1428
      %1435 = vst [vmem:[#allocation2 + $0x8] sm:$0xff] %v1429
      %1436 = vst.msk [vmem:[#allocation2 + $0x10] sm:$0xff] %vm807, %v1430
      %1437 = vst.msk [vmem:[#allocation2 + $0x20] sm:$0xff] %vm822, %v1431
      %1438 = vst [vmem:[#allocation2 + $0x28] sm:$0xff] %v1432
      %1439 = vst.msk [vmem:[#allocation2 + $0x30] sm:$0xff] %vm807, %v1433
      %v1440 = vsel %vm611, %v1140, 0.0
      %v1441 = vsel %vm612, %v1142, 0.0
      %v1442 = vsel %vm611, %v1146, 0.0
      %v1443 = vsel %vm612, %v1148, 0.0
      %v1444 = vld [vmem:[#allocation2] sm:$0xff]
      %v1445 = vld [vmem:[#allocation2 + $0x8] sm:$0xff]
      %v1446 = vld [vmem:[#allocation2 + $0x10] sm:$0xff]
      %v1447 = vld [vmem:[#allocation2 + $0x20] sm:$0xff]
      %v1448 = vld [vmem:[#allocation2 + $0x28] sm:$0xff]
      %v1449 = vld [vmem:[#allocation2 + $0x30] sm:$0xff]
      %1454 = vrot.lane.b32.xlu0 %v1440, 111
      %v1455 = vpop.permute.xlu0 %1454
      %1456 = vrot.lane.b32.xlu0 %v1441, 111
      %v1457 = vpop.permute.xlu0 %1456
      %1458 = vrot.lane.b32.xlu0 %v1442, 111
      %v1459 = vpop.permute.xlu0 %1458
      %1460 = vrot.lane.b32.xlu0 %v1443, 111
      %v1461 = vpop.permute.xlu0 %1460
      %v1462 = vsel %vm851, %v1455, %v1457
      %v1463 = vsel %vm851, %v1459, %v1461
      %v1470 = vadd.f32 %v1444, %v1455
      %v1471 = vadd.f32 %v1445, %v1462
      %v1472 = vadd.f32 %v1446, %v1457
      %v1473 = vadd.f32 %v1447, %v1459
      %v1474 = vadd.f32 %v1448, %v1463
      %v1475 = vadd.f32 %v1449, %v1461
      %1476 = vst.msk [vmem:[#allocation2] sm:$0xff] %vm866, %v1470
      %1477 = vst [vmem:[#allocation2 + $0x8] sm:$0xff] %v1471
      %1478 = vst.msk [vmem:[#allocation2 + $0x10] sm:$0xff] %vm851, %v1472
      %1479 = vst.msk [vmem:[#allocation2 + $0x20] sm:$0xff] %vm866, %v1473
      %1480 = vst [vmem:[#allocation2 + $0x28] sm:$0xff] %v1474
      %1481 = vst.msk [vmem:[#allocation2 + $0x30] sm:$0xff] %vm851, %v1475
      %v1482 = vld [vmem:[#allocation2 + $0x8] sm:$0xff]
      %v1483 = vld [vmem:[#allocation2 + $0x10] sm:$0xff]
      %v1484 = vld [vmem:[#allocation2 + $0x28] sm:$0xff]
      %v1485 = vld [vmem:[#allocation2 + $0x30] sm:$0xff]
      %v1486 = vld [vmem:[%s4] sm:$0xff]
      %v1487 = vld [vmem:[%s4 + $0x8] sm:$0xff]
      %1489 = vset.pattern.permute.xlu0 0
      %1490 = vperm.xlu0 %1489, %v1486
      %v1491 = vpop.permute.xlu0 %1490
      %1494 = vset.pattern.permute.xlu0 0
      %1495 = vperm.xlu0 %1494, %v1487
      %v1496 = vpop.permute.xlu0 %1495
      %v1498 = vadd.f32 %v1482, %v1491
      %v1499 = vadd.f32 %v1483, %v1491
      %v1500 = vadd.f32 %v1484, %v1496
      %v1501 = vadd.f32 %v1485, %v1496
      %1502 = vst [vmem:[%s329 + $0x20] sm:$0xff] %v1498
      %1503 = vst [vmem:[%s329 + $0x28] sm:$0xff] %v1499
      %1504 = vst [vmem:[%s329 + $0x30] sm:$0xff] %v1500
      %1505 = vst [vmem:[%s329 + $0x38] sm:$0xff] %v1501
      %v1506 = vld [vmem:[%s329] sm:$0xff]
      %v1507 = vld [vmem:[%s329 + $0x8] sm:$0xff]
      %v1508 = vld [vmem:[%s329 + $0x10] sm:$0xff]
      %v1509 = vld [vmem:[%s329 + $0x18] sm:$0xff]
      %v1510 = vld [vmem:[%s329 + $0x20] sm:$0xff]
      %v1511 = vld [vmem:[%s329 + $0x28] sm:$0xff]
      %v1512 = vld [vmem:[%s329 + $0x30] sm:$0xff]
      %v1513 = vld [vmem:[%s329 + $0x38] sm:$0xff]
      %v1514 = vld [vmem:[%s5] sm:$0xff]
      %v1515 = vld [vmem:[%s5 + $0x8] sm:$0xff]
      %v1516 = vld [vmem:[%s5 + $0x10] sm:$0xff]
      %v1517 = vld [vmem:[%s5 + $0x18] sm:$0xff]
      %v1518 = vld [vmem:[%s5 + $0x20] sm:$0xff]
      %v1519 = vld [vmem:[%s5 + $0x28] sm:$0xff]
      %v1520 = vld [vmem:[%s5 + $0x30] sm:$0xff]
      %v1521 = vld [vmem:[%s5 + $0x38] sm:$0xff]
      %v1522 = vld [vmem:[%s5 + $0x40] sm:$0xff]
      %v1523 = vld [vmem:[%s5 + $0x48] sm:$0xff]
      %v1524 = vld [vmem:[%s5 + $0x50] sm:$0xff]
      %v1525 = vld [vmem:[%s5 + $0x58] sm:$0xff]
      %v1526 = vld [vmem:[%s5 + $0x60] sm:$0xff]
      %v1527 = vld [vmem:[%s5 + $0x68] sm:$0xff]
      %v1528 = vld [vmem:[%s5 + $0x70] sm:$0xff]
      %v1529 = vld [vmem:[%s5 + $0x78] sm:$0xff]
      %v1530 = vld [vmem:[%s5 + $0x80] sm:$0xff]
      %v1531 = vld [vmem:[%s5 + $0x88] sm:$0xff]
      %vm1532 = vcmask 261120
      %v1534 = vsel %vm1532, %v1514, 0
      %v1537 = vsel %vm1532, %v1515, 0
      %v1540 = vsel %vm1532, %v1516, 0
      %v1543 = vsel %vm1532, %v1517, 0
      %v1546 = vsel %vm1532, %v1518, 0
      %v1549 = vsel %vm1532, %v1519, 0
      %v1552 = vsel %vm1532, %v1520, 0
      %v1555 = vsel %vm1532, %v1521, 0
      %v1558 = vsel %vm1532, %v1522, 0
      %v1561 = vsel %vm1532, %v1523, 0
      %v1564 = vsel %vm1532, %v1524, 0
      %v1567 = vsel %vm1532, %v1525, 0
      %v1570 = vsel %vm1532, %v1526, 0
      %v1573 = vsel %vm1532, %v1527, 0
      %v1576 = vsel %vm1532, %v1528, 0
      %v1579 = vsel %vm1532, %v1529, 0
      %v1582 = vsel %vm1532, %v1530, 0
      %v1585 = vsel %vm1532, %v1531, 0
      %1587 = vmatprep.subr.mxu0 %v1507
      %1588 = vmatpush1.msra.mxu0 %v1506
      %1589 = vmatprep.subr.mxu0 %v1509
      %1590 = vmatpush1.msra.mxu0 %v1508
      %1591 = vmatprep.subr.mxu0 %v1511
      %1592 = vmatpush1.msra.mxu0 %v1510
      %1593 = vmatprep.subr.mxu0 %v1513
      %1594 = vmatpush1.msra.mxu0 %v1512
      %1595 = vmatprep.subr.mxu0 0.0
      %1596 = vmatpush1.msra.mxu0 0.0
      %1597 = vmatprep.subr.mxu0 0.0
      %1598 = vmatpush1.msra.mxu0 0.0
      %1599 = vmatprep.subr.mxu0 0.0
      %1600 = vmatpush1.msra.mxu0 0.0
      %1601 = vmatprep.subr.mxu0 0.0
      %1602 = vmatpush1.msra.mxu0 0.0
      %1603 = vmatprep.subr.mxu0 0.0
      %1604 = vmatpush1.msra.mxu0 0.0
      %1605 = vmatprep.subr.mxu0 0.0
      %1606 = vmatpush1.msra.mxu0 0.0
      %1607 = vmatprep.subr.mxu0 0.0
      %1608 = vmatpush1.msra.mxu0 0.0
      %1609 = vmatprep.subr.mxu0 0.0
      %1610 = vmatpush1.msra.mxu0 0.0
      %1611 = vmatprep.subr.mxu0 0.0
      %1612 = vmatpush1.msra.mxu0 0.0
      %1613 = vmatprep.subr.mxu0 0.0
      %1614 = vmatpush1.msra.mxu0 0.0
      %1615 = vmatprep.subr.mxu0 0.0
      %1616 = vmatpush1.msra.mxu0 0.0
      %1617 = vmatprep.subr.mxu0 0.0
      %1618 = vmatpush1.msra.mxu0 0.0
      %1619 = vmatprep.subr.mxu0 0.0
      %1620 = vmatpush1.msra.mxu0 0.0
      %1621 = vmatprep.subr.mxu0 0.0
      %1622 = vmatpush1.msra.mxu0 0.0
      %1623 = vmatprep.subr.mxu0 0.0
      %1624 = vmatpush1.msra.mxu0 0.0
      %1625 = vmatprep.subr.mxu0 0.0
      %1626 = vmatpush1.msra.mxu0 0.0
      %1627 = vmatprep.subr.mxu0 0.0
      %1628 = vmatpush1.msra.mxu0 0.0
      %1629 = vmatprep.subr.mxu0 0.0
      %1630 = vmatpush1.msra.mxu0 0.0
      %1631 = vmatprep.subr.mxu0 0.0
      %1632 = vmatpush1.msra.mxu0 0.0
      %1633 = vmatprep.subr.mxu0 0.0
      %1634 = vmatpush1.msra.mxu0 0.0
      %1635 = vmatprep.subr.mxu0 0.0
      %1636 = vmatpush1.msra.mxu0 0.0
      %1637 = vmatprep.subr.mxu0 0.0
      %1638 = vmatpush1.msra.mxu0 0.0
      %1639 = vmatprep.subr.mxu0 0.0
      %1640 = vmatpush1.msra.mxu0 0.0
      %1641 = vmatprep.subr.mxu0 0.0
      %1642 = vmatpush1.msra.mxu0 0.0
      %1643 = vmatprep.subr.mxu0 0.0
      %1644 = vmatpush1.msra.mxu0 0.0
      %1645 = vmatprep.subr.mxu0 0.0
      %1646 = vmatpush1.msra.mxu0 0.0
      %1647 = vmatprep.subr.mxu0 0.0
      %1648 = vmatpush1.msra.mxu0 0.0
      %1649 = vmatprep.subr.mxu0 0.0
      %1650 = vmatpush1.msra.mxu0 0.0
      %1651 = vmatprep.mubr.f32.mxu0 0.0
      %1652 = vmatmul.mubr.f32.gmra.mrb[0].mxu0 %v1534
      %v1653 = vpop.f32.mrb[0].mxu0
      %v1654 = vadd.f32 0.0, %v1653
      %v1655 = vpop.f32.mrb[0].mxu0
      %v1656 = vadd.f32 0.0, %v1655
      %1657 = vmatprep.mubr.f32.mxu0 0.0
      %1658 = vmatmul.mubr.f32.gmra.mrb[0].mxu0 %v1537
      %v1659 = vpop.f32.mrb[0].mxu0
      %v1660 = vadd.f32 0.0, %v1659
      %v1661 = vpop.f32.mrb[0].mxu0
      %v1662 = vadd.f32 0.0, %v1661
      %1663 = vmatprep.mubr.f32.mxu0 0.0
      %1664 = vmatmul.mubr.f32.gmra.mrb[0].mxu0 %v1540
      %v1665 = vpop.f32.mrb[0].mxu0
      %v1666 = vadd.f32 0.0, %v1665
      %v1667 = vpop.f32.mrb[0].mxu0
      %v1668 = vadd.f32 0.0, %v1667
      %1669 = vmatprep.mubr.f32.mxu0 0.0
      %1670 = vmatmul.mubr.f32.gmra.mrb[0].mxu0 %v1543
      %v1671 = vpop.f32.mrb[0].mxu0
      %v1672 = vadd.f32 0.0, %v1671
      %v1673 = vpop.f32.mrb[0].mxu0
      %v1674 = vadd.f32 0.0, %v1673
      %1675 = vmatprep.mubr.f32.mxu0 0.0
      %1676 = vmatmul.mubr.f32.gmra.mrb[0].mxu0 %v1546
      %v1677 = vpop.f32.mrb[0].mxu0
      %v1678 = vadd.f32 0.0, %v1677
      %v1679 = vpop.f32.mrb[0].mxu0
      %v1680 = vadd.f32 0.0, %v1679
      %1681 = vmatprep.mubr.f32.mxu0 0.0
      %1682 = vmatmul.mubr.f32.gmra.mrb[0].mxu0 %v1549
      %v1683 = vpop.f32.mrb[0].mxu0
      %v1684 = vadd.f32 0.0, %v1683
      %v1685 = vpop.f32.mrb[0].mxu0
      %v1686 = vadd.f32 0.0, %v1685
      %1687 = vmatprep.mubr.f32.mxu0 0.0
      %1688 = vmatmul.mubr.f32.gmra.mrb[0].mxu0 %v1552
      %v1689 = vpop.f32.mrb[0].mxu0
      %v1690 = vadd.f32 0.0, %v1689
      %v1691 = vpop.f32.mrb[0].mxu0
      %v1692 = vadd.f32 0.0, %v1691
      %1693 = vmatprep.mubr.f32.mxu0 0.0
      %1694 = vmatmul.mubr.f32.gmra.mrb[0].mxu0 %v1555
      %v1695 = vpop.f32.mrb[0].mxu0
      %v1696 = vadd.f32 0.0, %v1695
      %v1697 = vpop.f32.mrb[0].mxu0
      %v1698 = vadd.f32 0.0, %v1697
      %1699 = vmatprep.mubr.f32.mxu0 0.0
      %1700 = vmatmul.mubr.f32.gmra.mrb[0].mxu0 %v1558
      %v1701 = vpop.f32.mrb[0].mxu0
      %v1702 = vadd.f32 0.0, %v1701
      %v1703 = vpop.f32.mrb[0].mxu0
      %v1704 = vadd.f32 0.0, %v1703
      %1705 = vmatprep.mubr.f32.mxu0 0.0
      %1706 = vmatmul.mubr.f32.gmra.mrb[0].mxu0 %v1561
      %v1707 = vpop.f32.mrb[0].mxu0
      %v1708 = vadd.f32 0.0, %v1707
      %v1709 = vpop.f32.mrb[0].mxu0
      %v1710 = vadd.f32 0.0, %v1709
      %1711 = vmatprep.mubr.f32.mxu0 0.0
      %1712 = vmatmul.mubr.f32.gmra.mrb[0].mxu0 %v1564
      %v1713 = vpop.f32.mrb[0].mxu0
      %v1714 = vadd.f32 0.0, %v1713
      %v1715 = vpop.f32.mrb[0].mxu0
      %v1716 = vadd.f32 0.0, %v1715
      %1717 = vmatprep.mubr.f32.mxu0 0.0
      %1718 = vmatmul.mubr.f32.gmra.mrb[0].mxu0 %v1567
      %v1719 = vpop.f32.mrb[0].mxu0
      %v1720 = vadd.f32 0.0, %v1719
      %v1721 = vpop.f32.mrb[0].mxu0
      %v1722 = vadd.f32 0.0, %v1721
      %1723 = vmatprep.mubr.f32.mxu0 0.0
      %1724 = vmatmul.mubr.f32.gmra.mrb[0].mxu0 %v1570
      %v1725 = vpop.f32.mrb[0].mxu0
      %v1726 = vadd.f32 0.0, %v1725
      %v1727 = vpop.f32.mrb[0].mxu0
      %v1728 = vadd.f32 0.0, %v1727
      %1729 = vmatprep.mubr.f32.mxu0 0.0
      %1730 = vmatmul.mubr.f32.gmra.mrb[0].mxu0 %v1573
      %v1731 = vpop.f32.mrb[0].mxu0
      %v1732 = vadd.f32 0.0, %v1731
      %v1733 = vpop.f32.mrb[0].mxu0
      %v1734 = vadd.f32 0.0, %v1733
      %1735 = vmatprep.mubr.f32.mxu0 0.0
      %1736 = vmatmul.mubr.f32.gmra.mrb[0].mxu0 %v1576
      %v1737 = vpop.f32.mrb[0].mxu0
      %v1738 = vadd.f32 0.0, %v1737
      %v1739 = vpop.f32.mrb[0].mxu0
      %v1740 = vadd.f32 0.0, %v1739
      %1741 = vmatprep.mubr.f32.mxu0 0.0
      %1742 = vmatmul.mubr.f32.gmra.mrb[0].mxu0 %v1579
      %v1743 = vpop.f32.mrb[0].mxu0
      %v1744 = vadd.f32 0.0, %v1743
      %v1745 = vpop.f32.mrb[0].mxu0
      %v1746 = vadd.f32 0.0, %v1745
      %1747 = vmatprep.mubr.f32.mxu0 0.0
      %1748 = vmatmul.mubr.f32.gmra.mrb[0].mxu0 %v1582
      %v1749 = vpop.f32.mrb[0].mxu0
      %v1750 = vadd.f32 0.0, %v1749
      %v1751 = vpop.f32.mrb[0].mxu0
      %v1752 = vadd.f32 0.0, %v1751
      %1753 = vmatprep.mubr.f32.mxu0 0.0
      %1754 = vmatmul.mubr.f32.gmra.mrb[0].mxu0 %v1585
      %v1755 = vpop.f32.mrb[0].mxu0
      %v1756 = vadd.f32 0.0, %v1755
      %v1757 = vpop.f32.mrb[0].mxu0
      %v1758 = vadd.f32 0.0, %v1757
      %1759 = vdwg.mxu0
      %1760 = vst [vmem:[#allocation2 + $0x8] sm:$0xff] %v1702
      %1761 = vst [vmem:[#allocation2 + $0x10] sm:$0xff] %v1704
      %1762 = vst [vmem:[#allocation2 + $0x28] sm:$0xff] %v1708
      %1763 = vst [vmem:[#allocation2 + $0x30] sm:$0xff] %v1710
      %v1764 = vsel %vm523, %v1654, 0.0
      %v1765 = vsel %vm524, %v1656, 0.0
      %v1766 = vsel %vm523, %v1660, 0.0
      %v1767 = vsel %vm524, %v1662, 0.0
      %v1768 = vld [vmem:[#allocation2 + $0x8] sm:$0xff]
      %v1769 = vld [vmem:[#allocation2 + $0x10] sm:$0xff]
      %v1770 = vld [vmem:[#allocation2 + $0x18] sm:$0xff]
      %v1771 = vld [vmem:[#allocation2 + $0x28] sm:$0xff]
      %v1772 = vld [vmem:[#allocation2 + $0x30] sm:$0xff]
      %v1773 = vld [vmem:[#allocation2 + $0x38] sm:$0xff]
      %1778 = vrot.lane.b32.xlu0 %v1764, 17
      %v1779 = vpop.permute.xlu0 %1778
      %1780 = vrot.lane.b32.xlu0 %v1765, 17
      %v1781 = vpop.permute.xlu0 %1780
      %1782 = vrot.lane.b32.xlu0 %v1766, 17
      %v1783 = vpop.permute.xlu0 %1782
      %1784 = vrot.lane.b32.xlu0 %v1767, 17
      %v1785 = vpop.permute.xlu0 %1784
      %v1786 = vsel %vm547, %v1779, %v1781
      %v1787 = vsel %vm547, %v1783, %v1785
      %v1794 = vadd.f32 %v1768, %v1779
      %v1795 = vadd.f32 %v1769, %v1786
      %v1796 = vadd.f32 %v1770, %v1781
      %v1797 = vadd.f32 %v1771, %v1783
      %v1798 = vadd.f32 %v1772, %v1787
      %v1799 = vadd.f32 %v1773, %v1785
      %1800 = vst.msk [vmem:[#allocation2 + $0x8] sm:$0xff] %vm562, %v1794
      %1801 = vst [vmem:[#allocation2 + $0x10] sm:$0xff] %v1795
      %1802 = vst.msk [vmem:[#allocation2 + $0x18] sm:$0xff] %vm547, %v1796
      %1803 = vst.msk [vmem:[#allocation2 + $0x28] sm:$0xff] %vm562, %v1797
      %1804 = vst [vmem:[#allocation2 + $0x30] sm:$0xff] %v1798
      %1805 = vst.msk [vmem:[#allocation2 + $0x38] sm:$0xff] %vm547, %v1799
      %v1806 = vld [vmem:[#allocation2 + $0x8] sm:$0xff]
      %v1807 = vld [vmem:[#allocation2 + $0x10] sm:$0xff]
      %v1808 = vld [vmem:[#allocation2 + $0x18] sm:$0xff]
      %v1809 = vld [vmem:[#allocation2 + $0x28] sm:$0xff]
      %v1810 = vld [vmem:[#allocation2 + $0x30] sm:$0xff]
      %v1811 = vld [vmem:[#allocation2 + $0x38] sm:$0xff]
      %1816 = vrot.lane.b32.xlu0 %v1666, 16
      %v1817 = vpop.permute.xlu0 %1816
      %1818 = vrot.lane.b32.xlu0 %v1668, 16
      %v1819 = vpop.permute.xlu0 %1818
      %1820 = vrot.lane.b32.xlu0 %v1672, 16
      %v1821 = vpop.permute.xlu0 %1820
      %1822 = vrot.lane.b32.xlu0 %v1674, 16
      %v1823 = vpop.permute.xlu0 %1822
      %v1824 = vsel %vm587, %v1817, %v1819
      %v1825 = vsel %vm587, %v1821, %v1823
      %v1832 = vadd.f32 %v1806, %v1817
      %v1833 = vadd.f32 %v1807, %v1824
      %v1834 = vadd.f32 %v1808, %v1819
      %v1835 = vadd.f32 %v1809, %v1821
      %v1836 = vadd.f32 %v1810, %v1825
      %v1837 = vadd.f32 %v1811, %v1823
      %1838 = vst.msk [vmem:[#allocation2 + $0x8] sm:$0xff] %vm602, %v1832
      %1839 = vst [vmem:[#allocation2 + $0x10] sm:$0xff] %v1833
      %1840 = vst.msk [vmem:[#allocation2 + $0x18] sm:$0xff] %vm587, %v1834
      %1841 = vst.msk [vmem:[#allocation2 + $0x28] sm:$0xff] %vm602, %v1835
      %1842 = vst [vmem:[#allocation2 + $0x30] sm:$0xff] %v1836
      %1843 = vst.msk [vmem:[#allocation2 + $0x38] sm:$0xff] %vm587, %v1837
      %v1844 = vsel %vm611, %v1678, 0.0
      %v1845 = vsel %vm612, %v1680, 0.0
      %v1846 = vsel %vm611, %v1684, 0.0
      %v1847 = vsel %vm612, %v1686, 0.0
      %v1848 = vld [vmem:[#allocation2 + $0x8] sm:$0xff]
      %v1849 = vld [vmem:[#allocation2 + $0x10] sm:$0xff]
      %v1850 = vld [vmem:[#allocation2 + $0x18] sm:$0xff]
      %v1851 = vld [vmem:[#allocation2 + $0x28] sm:$0xff]
      %v1852 = vld [vmem:[#allocation2 + $0x30] sm:$0xff]
      %v1853 = vld [vmem:[#allocation2 + $0x38] sm:$0xff]
      %1858 = vrot.lane.b32.xlu0 %v1844, 15
      %v1859 = vpop.permute.xlu0 %1858
      %1860 = vrot.lane.b32.xlu0 %v1845, 15
      %v1861 = vpop.permute.xlu0 %1860
      %1862 = vrot.lane.b32.xlu0 %v1846, 15
      %v1863 = vpop.permute.xlu0 %1862
      %1864 = vrot.lane.b32.xlu0 %v1847, 15
      %v1865 = vpop.permute.xlu0 %1864
      %v1866 = vsel %vm635, %v1859, %v1861
      %v1867 = vsel %vm635, %v1863, %v1865
      %v1874 = vadd.f32 %v1848, %v1859
      %v1875 = vadd.f32 %v1849, %v1866
      %v1876 = vadd.f32 %v1850, %v1861
      %v1877 = vadd.f32 %v1851, %v1863
      %v1878 = vadd.f32 %v1852, %v1867
      %v1879 = vadd.f32 %v1853, %v1865
      %1880 = vst.msk [vmem:[#allocation2 + $0x8] sm:$0xff] %vm650, %v1874
      %1881 = vst [vmem:[#allocation2 + $0x10] sm:$0xff] %v1875
      %1882 = vst.msk [vmem:[#allocation2 + $0x18] sm:$0xff] %vm635, %v1876
      %1883 = vst.msk [vmem:[#allocation2 + $0x28] sm:$0xff] %vm650, %v1877
      %1884 = vst [vmem:[#allocation2 + $0x30] sm:$0xff] %v1878
      %1885 = vst.msk [vmem:[#allocation2 + $0x38] sm:$0xff] %vm635, %v1879
      %v1886 = vsel %vm523, %v1690, 0.0
      %v1887 = vsel %vm524, %v1692, 0.0
      %v1888 = vsel %vm523, %v1696, 0.0
      %v1889 = vsel %vm524, %v1698, 0.0
      %v1890 = vld [vmem:[#allocation2 + $0x8] sm:$0xff]
      %v1891 = vld [vmem:[#allocation2 + $0x10] sm:$0xff]
      %v1892 = vld [vmem:[#allocation2 + $0x18] sm:$0xff]
      %v1893 = vld [vmem:[#allocation2 + $0x28] sm:$0xff]
      %v1894 = vld [vmem:[#allocation2 + $0x30] sm:$0xff]
      %v1895 = vld [vmem:[#allocation2 + $0x38] sm:$0xff]
      %1900 = vrot.lane.b32.xlu0 %v1886, 1
      %v1901 = vpop.permute.xlu0 %1900
      %1902 = vrot.lane.b32.xlu0 %v1887, 1
      %v1903 = vpop.permute.xlu0 %1902
      %1904 = vrot.lane.b32.xlu0 %v1888, 1
      %v1905 = vpop.permute.xlu0 %1904
      %1906 = vrot.lane.b32.xlu0 %v1889, 1
      %v1907 = vpop.permute.xlu0 %1906
      %v1908 = vsel %vm679, %v1901, %v1903
      %v1909 = vsel %vm679, %v1905, %v1907
      %v1916 = vadd.f32 %v1890, %v1901
      %v1917 = vadd.f32 %v1891, %v1908
      %v1918 = vadd.f32 %v1892, %v1903
      %v1919 = vadd.f32 %v1893, %v1905
      %v1920 = vadd.f32 %v1894, %v1909
      %v1921 = vadd.f32 %v1895, %v1907
      %1922 = vst.msk [vmem:[#allocation2 + $0x8] sm:$0xff] %vm694, %v1916
      %1923 = vst [vmem:[#allocation2 + $0x10] sm:$0xff] %v1917
      %1924 = vst.msk [vmem:[#allocation2 + $0x18] sm:$0xff] %vm679, %v1918
      %1925 = vst.msk [vmem:[#allocation2 + $0x28] sm:$0xff] %vm694, %v1919
      %1926 = vst [vmem:[#allocation2 + $0x30] sm:$0xff] %v1920
      %1927 = vst.msk [vmem:[#allocation2 + $0x38] sm:$0xff] %vm679, %v1921
      %v1928 = vsel %vm611, %v1714, 0.0
      %v1929 = vsel %vm612, %v1716, 0.0
      %v1930 = vsel %vm611, %v1720, 0.0
      %v1931 = vsel %vm612, %v1722, 0.0
      %v1932 = vld [vmem:[#allocation2] sm:$0xff]
      %v1933 = vld [vmem:[#allocation2 + $0x8] sm:$0xff]
      %v1934 = vld [vmem:[#allocation2 + $0x10] sm:$0xff]
      %v1935 = vld [vmem:[#allocation2 + $0x20] sm:$0xff]
      %v1936 = vld [vmem:[#allocation2 + $0x28] sm:$0xff]
      %v1937 = vld [vmem:[#allocation2 + $0x30] sm:$0xff]
      %1942 = vrot.lane.b32.xlu0 %v1928, 127
      %v1943 = vpop.permute.xlu0 %1942
      %1944 = vrot.lane.b32.xlu0 %v1929, 127
      %v1945 = vpop.permute.xlu0 %1944
      %1946 = vrot.lane.b32.xlu0 %v1930, 127
      %v1947 = vpop.permute.xlu0 %1946
      %1948 = vrot.lane.b32.xlu0 %v1931, 127
      %v1949 = vpop.permute.xlu0 %1948
      %v1950 = vsel %vm723, %v1943, %v1945
      %v1951 = vsel %vm723, %v1947, %v1949
      %v1958 = vadd.f32 %v1932, %v1943
      %v1959 = vadd.f32 %v1933, %v1950
      %v1960 = vadd.f32 %v1934, %v1945
      %v1961 = vadd.f32 %v1935, %v1947
      %v1962 = vadd.f32 %v1936, %v1951
      %v1963 = vadd.f32 %v1937, %v1949
      %1964 = vst.msk [vmem:[#allocation2] sm:$0xff] %vm738, %v1958
      %1965 = vst [vmem:[#allocation2 + $0x8] sm:$0xff] %v1959
      %1966 = vst.msk [vmem:[#allocation2 + $0x10] sm:$0xff] %vm723, %v1960
      %1967 = vst.msk [vmem:[#allocation2 + $0x20] sm:$0xff] %vm738, %v1961
      %1968 = vst [vmem:[#allocation2 + $0x28] sm:$0xff] %v1962
      %1969 = vst.msk [vmem:[#allocation2 + $0x30] sm:$0xff] %vm723, %v1963
      %v1970 = vsel %vm523, %v1726, 0.0
      %v1971 = vsel %vm524, %v1728, 0.0
      %v1972 = vsel %vm523, %v1732, 0.0
      %v1973 = vsel %vm524, %v1734, 0.0
      %v1974 = vld [vmem:[#allocation2] sm:$0xff]
      %v1975 = vld [vmem:[#allocation2 + $0x8] sm:$0xff]
      %v1976 = vld [vmem:[#allocation2 + $0x10] sm:$0xff]
      %v1977 = vld [vmem:[#allocation2 + $0x20] sm:$0xff]
      %v1978 = vld [vmem:[#allocation2 + $0x28] sm:$0xff]
      %v1979 = vld [vmem:[#allocation2 + $0x30] sm:$0xff]
      %1984 = vrot.lane.b32.xlu0 %v1970, 113
      %v1985 = vpop.permute.xlu0 %1984
      %1986 = vrot.lane.b32.xlu0 %v1971, 113
      %v1987 = vpop.permute.xlu0 %1986
      %1988 = vrot.lane.b32.xlu0 %v1972, 113
      %v1989 = vpop.permute.xlu0 %1988
      %1990 = vrot.lane.b32.xlu0 %v1973, 113
      %v1991 = vpop.permute.xlu0 %1990
      %v1992 = vsel %vm767, %v1985, %v1987
      %v1993 = vsel %vm767, %v1989, %v1991
      %v2000 = vadd.f32 %v1974, %v1985
      %v2001 = vadd.f32 %v1975, %v1992
      %v2002 = vadd.f32 %v1976, %v1987
      %v2003 = vadd.f32 %v1977, %v1989
      %v2004 = vadd.f32 %v1978, %v1993
      %v2005 = vadd.f32 %v1979, %v1991
      %2006 = vst.msk [vmem:[#allocation2] sm:$0xff] %vm782, %v2000
      %2007 = vst [vmem:[#allocation2 + $0x8] sm:$0xff] %v2001
      %2008 = vst.msk [vmem:[#allocation2 + $0x10] sm:$0xff] %vm767, %v2002
      %2009 = vst.msk [vmem:[#allocation2 + $0x20] sm:$0xff] %vm782, %v2003
      %2010 = vst [vmem:[#allocation2 + $0x28] sm:$0xff] %v2004
      %2011 = vst.msk [vmem:[#allocation2 + $0x30] sm:$0xff] %vm767, %v2005
      %v2012 = vld [vmem:[#allocation2] sm:$0xff]
      %v2013 = vld [vmem:[#allocation2 + $0x8] sm:$0xff]
      %v2014 = vld [vmem:[#allocation2 + $0x10] sm:$0xff]
      %v2015 = vld [vmem:[#allocation2 + $0x20] sm:$0xff]
      %v2016 = vld [vmem:[#allocation2 + $0x28] sm:$0xff]
      %v2017 = vld [vmem:[#allocation2 + $0x30] sm:$0xff]
      %2022 = vrot.lane.b32.xlu0 %v1738, 112
      %v2023 = vpop.permute.xlu0 %2022
      %2024 = vrot.lane.b32.xlu0 %v1740, 112
      %v2025 = vpop.permute.xlu0 %2024
      %2026 = vrot.lane.b32.xlu0 %v1744, 112
      %v2027 = vpop.permute.xlu0 %2026
      %2028 = vrot.lane.b32.xlu0 %v1746, 112
      %v2029 = vpop.permute.xlu0 %2028
      %v2030 = vsel %vm807, %v2023, %v2025
      %v2031 = vsel %vm807, %v2027, %v2029
      %v2038 = vadd.f32 %v2012, %v2023
      %v2039 = vadd.f32 %v2013, %v2030
      %v2040 = vadd.f32 %v2014, %v2025
      %v2041 = vadd.f32 %v2015, %v2027
      %v2042 = vadd.f32 %v2016, %v2031
      %v2043 = vadd.f32 %v2017, %v2029
      %2044 = vst.msk [vmem:[#allocation2] sm:$0xff] %vm822, %v2038
      %2045 = vst [vmem:[#allocation2 + $0x8] sm:$0xff] %v2039
      %2046 = vst.msk [vmem:[#allocation2 + $0x10] sm:$0xff] %vm807, %v2040
      %2047 = vst.msk [vmem:[#allocation2 + $0x20] sm:$0xff] %vm822, %v2041
      %2048 = vst [vmem:[#allocation2 + $0x28] sm:$0xff] %v2042
      %2049 = vst.msk [vmem:[#allocation2 + $0x30] sm:$0xff] %vm807, %v2043
      %v2050 = vsel %vm611, %v1750, 0.0
      %v2051 = vsel %vm612, %v1752, 0.0
      %v2052 = vsel %vm611, %v1756, 0.0
      %v2053 = vsel %vm612, %v1758, 0.0
      %v2054 = vld [vmem:[#allocation2] sm:$0xff]
      %v2055 = vld [vmem:[#allocation2 + $0x8] sm:$0xff]
      %v2056 = vld [vmem:[#allocation2 + $0x10] sm:$0xff]
      %v2057 = vld [vmem:[#allocation2 + $0x20] sm:$0xff]
      %v2058 = vld [vmem:[#allocation2 + $0x28] sm:$0xff]
      %v2059 = vld [vmem:[#allocation2 + $0x30] sm:$0xff]
      %2064 = vrot.lane.b32.xlu0 %v2050, 111
      %v2065 = vpop.permute.xlu0 %2064
      %2066 = vrot.lane.b32.xlu0 %v2051, 111
      %v2067 = vpop.permute.xlu0 %2066
      %2068 = vrot.lane.b32.xlu0 %v2052, 111
      %v2069 = vpop.permute.xlu0 %2068
      %2070 = vrot.lane.b32.xlu0 %v2053, 111
      %v2071 = vpop.permute.xlu0 %2070
      %v2072 = vsel %vm851, %v2065, %v2067
      %v2073 = vsel %vm851, %v2069, %v2071
      %v2080 = vadd.f32 %v2054, %v2065
      %v2081 = vadd.f32 %v2055, %v2072
      %v2082 = vadd.f32 %v2056, %v2067
      %v2083 = vadd.f32 %v2057, %v2069
      %v2084 = vadd.f32 %v2058, %v2073
      %v2085 = vadd.f32 %v2059, %v2071
      %2086 = vst.msk [vmem:[#allocation2] sm:$0xff] %vm866, %v2080
      %2087 = vst [vmem:[#allocation2 + $0x8] sm:$0xff] %v2081
      %2088 = vst.msk [vmem:[#allocation2 + $0x10] sm:$0xff] %vm851, %v2082
      %2089 = vst.msk [vmem:[#allocation2 + $0x20] sm:$0xff] %vm866, %v2083
      %2090 = vst [vmem:[#allocation2 + $0x28] sm:$0xff] %v2084
      %2091 = vst.msk [vmem:[#allocation2 + $0x30] sm:$0xff] %vm851, %v2085
      %v2092 = vld [vmem:[#allocation2 + $0x8] sm:$0xff]
      %v2093 = vld [vmem:[#allocation2 + $0x10] sm:$0xff]
      %v2094 = vld [vmem:[#allocation2 + $0x28] sm:$0xff]
      %v2095 = vld [vmem:[#allocation2 + $0x30] sm:$0xff]
      %v2096 = vld [vmem:[%s6] sm:$0xff]
      %v2097 = vld [vmem:[%s6 + $0x8] sm:$0xff]
      %2099 = vset.pattern.permute.xlu0 0
      %2100 = vperm.xlu0 %2099, %v2096
      %v2101 = vpop.permute.xlu0 %2100
      %2104 = vset.pattern.permute.xlu0 0
      %2105 = vperm.xlu0 %2104, %v2097
      %v2106 = vpop.permute.xlu0 %2105
      %v2108 = vadd.f32 %v2092, %v2101
      %v2109 = vadd.f32 %v2093, %v2101
      %v2110 = vadd.f32 %v2094, %v2106
      %v2111 = vadd.f32 %v2095, %v2106
      %2112 = vst [vmem:[%s329 + $0x40] sm:$0xff] %v2108
      %2113 = vst [vmem:[%s329 + $0x48] sm:$0xff] %v2109
      %2114 = vst [vmem:[%s329 + $0x50] sm:$0xff] %v2110
      %2115 = vst [vmem:[%s329 + $0x58] sm:$0xff] %v2111
      %v2116 = vld [vmem:[%s329] sm:$0xff]
      %v2117 = vld [vmem:[%s329 + $0x8] sm:$0xff]
      %v2118 = vld [vmem:[%s329 + $0x10] sm:$0xff]
      %v2119 = vld [vmem:[%s329 + $0x18] sm:$0xff]
      %v2120 = vld [vmem:[%s329 + $0x20] sm:$0xff]
      %v2121 = vld [vmem:[%s329 + $0x28] sm:$0xff]
      %v2122 = vld [vmem:[%s329 + $0x30] sm:$0xff]
      %v2123 = vld [vmem:[%s329 + $0x38] sm:$0xff]
      %v2124 = vld [vmem:[%s329 + $0x40] sm:$0xff]
      %v2125 = vld [vmem:[%s329 + $0x48] sm:$0xff]
      %v2126 = vld [vmem:[%s329 + $0x50] sm:$0xff]
      %v2127 = vld [vmem:[%s329 + $0x58] sm:$0xff]
      %v2128 = vld [vmem:[%s7] sm:$0xff]
      %v2129 = vld [vmem:[%s7 + $0x8] sm:$0xff]
      %v2130 = vld [vmem:[%s7 + $0x10] sm:$0xff]
      %v2131 = vld [vmem:[%s7 + $0x18] sm:$0xff]
      %v2132 = vld [vmem:[%s7 + $0x20] sm:$0xff]
      %v2133 = vld [vmem:[%s7 + $0x28] sm:$0xff]
      %v2134 = vld [vmem:[%s7 + $0x30] sm:$0xff]
      %v2135 = vld [vmem:[%s7 + $0x38] sm:$0xff]
      %v2136 = vld [vmem:[%s7 + $0x40] sm:$0xff]
      %v2137 = vld [vmem:[%s7 + $0x48] sm:$0xff]
      %v2138 = vld [vmem:[%s7 + $0x50] sm:$0xff]
      %v2139 = vld [vmem:[%s7 + $0x58] sm:$0xff]
      %v2140 = vld [vmem:[%s7 + $0x60] sm:$0xff]
      %v2141 = vld [vmem:[%s7 + $0x68] sm:$0xff]
      %v2142 = vld [vmem:[%s7 + $0x70] sm:$0xff]
      %v2143 = vld [vmem:[%s7 + $0x78] sm:$0xff]
      %v2144 = vld [vmem:[%s7 + $0x80] sm:$0xff]
      %v2145 = vld [vmem:[%s7 + $0x88] sm:$0xff]
      %vm2146 = vcmask 392192
      %v2148 = vsel %vm2146, %v2128, 0
      %v2151 = vsel %vm2146, %v2129, 0
      %v2154 = vsel %vm2146, %v2130, 0
      %v2157 = vsel %vm2146, %v2131, 0
      %v2160 = vsel %vm2146, %v2132, 0
      %v2163 = vsel %vm2146, %v2133, 0
      %v2166 = vsel %vm2146, %v2134, 0
      %v2169 = vsel %vm2146, %v2135, 0
      %v2172 = vsel %vm2146, %v2136, 0
      %v2175 = vsel %vm2146, %v2137, 0
      %v2178 = vsel %vm2146, %v2138, 0
      %v2181 = vsel %vm2146, %v2139, 0
      %v2184 = vsel %vm2146, %v2140, 0
      %v2187 = vsel %vm2146, %v2141, 0
      %v2190 = vsel %vm2146, %v2142, 0
      %v2193 = vsel %vm2146, %v2143, 0
      %v2196 = vsel %vm2146, %v2144, 0
      %v2199 = vsel %vm2146, %v2145, 0
      %2201 = vmatprep.subr.mxu0 %v2117
      %2202 = vmatpush1.msra.mxu0 %v2116
      %2203 = vmatprep.subr.mxu0 %v2119
      %2204 = vmatpush1.msra.mxu0 %v2118
      %2205 = vmatprep.subr.mxu0 %v2121
      %2206 = vmatpush1.msra.mxu0 %v2120
      %2207 = vmatprep.subr.mxu0 %v2123
      %2208 = vmatpush1.msra.mxu0 %v2122
      %2209 = vmatprep.subr.mxu0 %v2125
      %2210 = vmatpush1.msra.mxu0 %v2124
      %2211 = vmatprep.subr.mxu0 %v2127
      %2212 = vmatpush1.msra.mxu0 %v2126
      %2213 = vmatprep.subr.mxu0 0.0
      %2214 = vmatpush1.msra.mxu0 0.0
      %2215 = vmatprep.subr.mxu0 0.0
      %2216 = vmatpush1.msra.mxu0 0.0
      %2217 = vmatprep.subr.mxu0 0.0
      %2218 = vmatpush1.msra.mxu0 0.0
      %2219 = vmatprep.subr.mxu0 0.0
      %2220 = vmatpush1.msra.mxu0 0.0
      %2221 = vmatprep.subr.mxu0 0.0
      %2222 = vmatpush1.msra.mxu0 0.0
      %2223 = vmatprep.subr.mxu0 0.0
      %2224 = vmatpush1.msra.mxu0 0.0
      %2225 = vmatprep.subr.mxu0 0.0
      %2226 = vmatpush1.msra.mxu0 0.0
      %2227 = vmatprep.subr.mxu0 0.0
      %2228 = vmatpush1.msra.mxu0 0.0
      %2229 = vmatprep.subr.mxu0 0.0
      %2230 = vmatpush1.msra.mxu0 0.0
      %2231 = vmatprep.subr.mxu0 0.0
      %2232 = vmatpush1.msra.mxu0 0.0
      %2233 = vmatprep.subr.mxu0 0.0
      %2234 = vmatpush1.msra.mxu0 0.0
      %2235 = vmatprep.subr.mxu0 0.0
      %2236 = vmatpush1.msra.mxu0 0.0
      %2237 = vmatprep.subr.mxu0 0.0
      %2238 = vmatpush1.msra.mxu0 0.0
      %2239 = vmatprep.subr.mxu0 0.0
      %2240 = vmatpush1.msra.mxu0 0.0
      %2241 = vmatprep.subr.mxu0 0.0
      %2242 = vmatpush1.msra.mxu0 0.0
      %2243 = vmatprep.subr.mxu0 0.0
      %2244 = vmatpush1.msra.mxu0 0.0
      %2245 = vmatprep.subr.mxu0 0.0
      %2246 = vmatpush1.msra.mxu0 0.0
      %2247 = vmatprep.subr.mxu0 0.0
      %2248 = vmatpush1.msra.mxu0 0.0
      %2249 = vmatprep.subr.mxu0 0.0
      %2250 = vmatpush1.msra.mxu0 0.0
      %2251 = vmatprep.subr.mxu0 0.0
      %2252 = vmatpush1.msra.mxu0 0.0
      %2253 = vmatprep.subr.mxu0 0.0
      %2254 = vmatpush1.msra.mxu0 0.0
      %2255 = vmatprep.subr.mxu0 0.0
      %2256 = vmatpush1.msra.mxu0 0.0
      %2257 = vmatprep.subr.mxu0 0.0
      %2258 = vmatpush1.msra.mxu0 0.0
      %2259 = vmatprep.subr.mxu0 0.0
      %2260 = vmatpush1.msra.mxu0 0.0
      %2261 = vmatprep.subr.mxu0 0.0
      %2262 = vmatpush1.msra.mxu0 0.0
      %2263 = vmatprep.subr.mxu0 0.0
      %2264 = vmatpush1.msra.mxu0 0.0
      %2265 = vmatprep.mubr.f32.mxu0 0.0
      %2266 = vmatmul.mubr.f32.gmra.mrb[0].mxu0 %v2148
      %v2267 = vpop.f32.mrb[0].mxu0
      %v2268 = vadd.f32 0.0, %v2267
      %v2269 = vpop.f32.mrb[0].mxu0
      %v2270 = vadd.f32 0.0, %v2269
      %2271 = vmatprep.mubr.f32.mxu0 0.0
      %2272 = vmatmul.mubr.f32.gmra.mrb[0].mxu0 %v2151
      %v2273 = vpop.f32.mrb[0].mxu0
      %v2274 = vadd.f32 0.0, %v2273
      %v2275 = vpop.f32.mrb[0].mxu0
      %v2276 = vadd.f32 0.0, %v2275
      %2277 = vmatprep.mubr.f32.mxu0 0.0
      %2278 = vmatmul.mubr.f32.gmra.mrb[0].mxu0 %v2154
      %v2279 = vpop.f32.mrb[0].mxu0
      %v2280 = vadd.f32 0.0, %v2279
      %v2281 = vpop.f32.mrb[0].mxu0
      %v2282 = vadd.f32 0.0, %v2281
      %2283 = vmatprep.mubr.f32.mxu0 0.0
      %2284 = vmatmul.mubr.f32.gmra.mrb[0].mxu0 %v2157
      %v2285 = vpop.f32.mrb[0].mxu0
      %v2286 = vadd.f32 0.0, %v2285
      %v2287 = vpop.f32.mrb[0].mxu0
      %v2288 = vadd.f32 0.0, %v2287
      %2289 = vmatprep.mubr.f32.mxu0 0.0
      %2290 = vmatmul.mubr.f32.gmra.mrb[0].mxu0 %v2160
      %v2291 = vpop.f32.mrb[0].mxu0
      %v2292 = vadd.f32 0.0, %v2291
      %v2293 = vpop.f32.mrb[0].mxu0
      %v2294 = vadd.f32 0.0, %v2293
      %2295 = vmatprep.mubr.f32.mxu0 0.0
      %2296 = vmatmul.mubr.f32.gmra.mrb[0].mxu0 %v2163
      %v2297 = vpop.f32.mrb[0].mxu0
      %v2298 = vadd.f32 0.0, %v2297
      %v2299 = vpop.f32.mrb[0].mxu0
      %v2300 = vadd.f32 0.0, %v2299
      %2301 = vmatprep.mubr.f32.mxu0 0.0
      %2302 = vmatmul.mubr.f32.gmra.mrb[0].mxu0 %v2166
      %v2303 = vpop.f32.mrb[0].mxu0
      %v2304 = vadd.f32 0.0, %v2303
      %v2305 = vpop.f32.mrb[0].mxu0
      %v2306 = vadd.f32 0.0, %v2305
      %2307 = vmatprep.mubr.f32.mxu0 0.0
      %2308 = vmatmul.mubr.f32.gmra.mrb[0].mxu0 %v2169
      %v2309 = vpop.f32.mrb[0].mxu0
      %v2310 = vadd.f32 0.0, %v2309
      %v2311 = vpop.f32.mrb[0].mxu0
      %v2312 = vadd.f32 0.0, %v2311
      %2313 = vmatprep.mubr.f32.mxu0 0.0
      %2314 = vmatmul.mubr.f32.gmra.mrb[0].mxu0 %v2172
      %v2315 = vpop.f32.mrb[0].mxu0
      %v2316 = vadd.f32 0.0, %v2315
      %v2317 = vpop.f32.mrb[0].mxu0
      %v2318 = vadd.f32 0.0, %v2317
      %2319 = vmatprep.mubr.f32.mxu0 0.0
      %2320 = vmatmul.mubr.f32.gmra.mrb[0].mxu0 %v2175
      %v2321 = vpop.f32.mrb[0].mxu0
      %v2322 = vadd.f32 0.0, %v2321
      %v2323 = vpop.f32.mrb[0].mxu0
      %v2324 = vadd.f32 0.0, %v2323
      %2325 = vmatprep.mubr.f32.mxu0 0.0
      %2326 = vmatmul.mubr.f32.gmra.mrb[0].mxu0 %v2178
      %v2327 = vpop.f32.mrb[0].mxu0
      %v2328 = vadd.f32 0.0, %v2327
      %v2329 = vpop.f32.mrb[0].mxu0
      %v2330 = vadd.f32 0.0, %v2329
      %2331 = vmatprep.mubr.f32.mxu0 0.0
      %2332 = vmatmul.mubr.f32.gmra.mrb[0].mxu0 %v2181
      %v2333 = vpop.f32.mrb[0].mxu0
      %v2334 = vadd.f32 0.0, %v2333
      %v2335 = vpop.f32.mrb[0].mxu0
      %v2336 = vadd.f32 0.0, %v2335
      %2337 = vmatprep.mubr.f32.mxu0 0.0
      %2338 = vmatmul.mubr.f32.gmra.mrb[0].mxu0 %v2184
      %v2339 = vpop.f32.mrb[0].mxu0
      %v2340 = vadd.f32 0.0, %v2339
      %v2341 = vpop.f32.mrb[0].mxu0
      %v2342 = vadd.f32 0.0, %v2341
      %2343 = vmatprep.mubr.f32.mxu0 0.0
      %2344 = vmatmul.mubr.f32.gmra.mrb[0].mxu0 %v2187
      %v2345 = vpop.f32.mrb[0].mxu0
      %v2346 = vadd.f32 0.0, %v2345
      %v2347 = vpop.f32.mrb[0].mxu0
      %v2348 = vadd.f32 0.0, %v2347
      %2349 = vmatprep.mubr.f32.mxu0 0.0
      %2350 = vmatmul.mubr.f32.gmra.mrb[0].mxu0 %v2190
      %v2351 = vpop.f32.mrb[0].mxu0
      %v2352 = vadd.f32 0.0, %v2351
      %v2353 = vpop.f32.mrb[0].mxu0
      %v2354 = vadd.f32 0.0, %v2353
      %2355 = vmatprep.mubr.f32.mxu0 0.0
      %2356 = vmatmul.mubr.f32.gmra.mrb[0].mxu0 %v2193
      %v2357 = vpop.f32.mrb[0].mxu0
      %v2358 = vadd.f32 0.0, %v2357
      %v2359 = vpop.f32.mrb[0].mxu0
      %v2360 = vadd.f32 0.0, %v2359
      %2361 = vmatprep.mubr.f32.mxu0 0.0
      %2362 = vmatmul.mubr.f32.gmra.mrb[0].mxu0 %v2196
      %v2363 = vpop.f32.mrb[0].mxu0
      %v2364 = vadd.f32 0.0, %v2363
      %v2365 = vpop.f32.mrb[0].mxu0
      %v2366 = vadd.f32 0.0, %v2365
      %2367 = vmatprep.mubr.f32.mxu0 0.0
      %2368 = vmatmul.mubr.f32.gmra.mrb[0].mxu0 %v2199
      %v2369 = vpop.f32.mrb[0].mxu0
      %v2370 = vadd.f32 0.0, %v2369
      %v2371 = vpop.f32.mrb[0].mxu0
      %v2372 = vadd.f32 0.0, %v2371
      %2373 = vdwg.mxu0
      %2374 = vst [vmem:[#allocation2 + $0x8] sm:$0xff] %v2316
      %2375 = vst [vmem:[#allocation2 + $0x10] sm:$0xff] %v2318
      %2376 = vst [vmem:[#allocation2 + $0x28] sm:$0xff] %v2322
      %2377 = vst [vmem:[#allocation2 + $0x30] sm:$0xff] %v2324
      %v2378 = vsel %vm523, %v2268, 0.0
      %v2379 = vsel %vm524, %v2270, 0.0
      %v2380 = vsel %vm523, %v2274, 0.0
      %v2381 = vsel %vm524, %v2276, 0.0
      %v2382 = vld [vmem:[#allocation2 + $0x8] sm:$0xff]
      %v2383 = vld [vmem:[#allocation2 + $0x10] sm:$0xff]
      %v2384 = vld [vmem:[#allocation2 + $0x18] sm:$0xff]
      %v2385 = vld [vmem:[#allocation2 + $0x28] sm:$0xff]
      %v2386 = vld [vmem:[#allocation2 + $0x30] sm:$0xff]
      %v2387 = vld [vmem:[#allocation2 + $0x38] sm:$0xff]
      %2392 = vrot.lane.b32.xlu0 %v2378, 17
      %v2393 = vpop.permute.xlu0 %2392
      %2394 = vrot.lane.b32.xlu0 %v2379, 17
      %v2395 = vpop.permute.xlu0 %2394
      %2396 = vrot.lane.b32.xlu0 %v2380, 17
      %v2397 = vpop.permute.xlu0 %2396
      %2398 = vrot.lane.b32.xlu0 %v2381, 17
      %v2399 = vpop.permute.xlu0 %2398
      %v2400 = vsel %vm547, %v2393, %v2395
      %v2401 = vsel %vm547, %v2397, %v2399
      %v2408 = vadd.f32 %v2382, %v2393
      %v2409 = vadd.f32 %v2383, %v2400
      %v2410 = vadd.f32 %v2384, %v2395
      %v2411 = vadd.f32 %v2385, %v2397
      %v2412 = vadd.f32 %v2386, %v2401
      %v2413 = vadd.f32 %v2387, %v2399
      %2414 = vst.msk [vmem:[#allocation2 + $0x8] sm:$0xff] %vm562, %v2408
      %2415 = vst [vmem:[#allocation2 + $0x10] sm:$0xff] %v2409
      %2416 = vst.msk [vmem:[#allocation2 + $0x18] sm:$0xff] %vm547, %v2410
      %2417 = vst.msk [vmem:[#allocation2 + $0x28] sm:$0xff] %vm562, %v2411
      %2418 = vst [vmem:[#allocation2 + $0x30] sm:$0xff] %v2412
      %2419 = vst.msk [vmem:[#allocation2 + $0x38] sm:$0xff] %vm547, %v2413
      %v2420 = vld [vmem:[#allocation2 + $0x8] sm:$0xff]
      %v2421 = vld [vmem:[#allocation2 + $0x10] sm:$0xff]
      %v2422 = vld [vmem:[#allocation2 + $0x18] sm:$0xff]
      %v2423 = vld [vmem:[#allocation2 + $0x28] sm:$0xff]
      %v2424 = vld [vmem:[#allocation2 + $0x30] sm:$0xff]
      %v2425 = vld [vmem:[#allocation2 + $0x38] sm:$0xff]
      %2430 = vrot.lane.b32.xlu0 %v2280, 16
      %v2431 = vpop.permute.xlu0 %2430
      %2432 = vrot.lane.b32.xlu0 %v2282, 16
      %v2433 = vpop.permute.xlu0 %2432
      %2434 = vrot.lane.b32.xlu0 %v2286, 16
      %v2435 = vpop.permute.xlu0 %2434
      %2436 = vrot.lane.b32.xlu0 %v2288, 16
      %v2437 = vpop.permute.xlu0 %2436
      %v2438 = vsel %vm587, %v2431, %v2433
      %v2439 = vsel %vm587, %v2435, %v2437
      %v2446 = vadd.f32 %v2420, %v2431
      %v2447 = vadd.f32 %v2421, %v2438
      %v2448 = vadd.f32 %v2422, %v2433
      %v2449 = vadd.f32 %v2423, %v2435
      %v2450 = vadd.f32 %v2424, %v2439
      %v2451 = vadd.f32 %v2425, %v2437
      %2452 = vst.msk [vmem:[#allocation2 + $0x8] sm:$0xff] %vm602, %v2446
      %2453 = vst [vmem:[#allocation2 + $0x10] sm:$0xff] %v2447
      %2454 = vst.msk [vmem:[#allocation2 + $0x18] sm:$0xff] %vm587, %v2448
      %2455 = vst.msk [vmem:[#allocation2 + $0x28] sm:$0xff] %vm602, %v2449
      %2456 = vst [vmem:[#allocation2 + $0x30] sm:$0xff] %v2450
      %2457 = vst.msk [vmem:[#allocation2 + $0x38] sm:$0xff] %vm587, %v2451
      %v2458 = vsel %vm611, %v2292, 0.0
      %v2459 = vsel %vm612, %v2294, 0.0
      %v2460 = vsel %vm611, %v2298, 0.0
      %v2461 = vsel %vm612, %v2300, 0.0
      %v2462 = vld [vmem:[#allocation2 + $0x8] sm:$0xff]
      %v2463 = vld [vmem:[#allocation2 + $0x10] sm:$0xff]
      %v2464 = vld [vmem:[#allocation2 + $0x18] sm:$0xff]
      %v2465 = vld [vmem:[#allocation2 + $0x28] sm:$0xff]
      %v2466 = vld [vmem:[#allocation2 + $0x30] sm:$0xff]
      %v2467 = vld [vmem:[#allocation2 + $0x38] sm:$0xff]
      %2472 = vrot.lane.b32.xlu0 %v2458, 15
      %v2473 = vpop.permute.xlu0 %2472
      %2474 = vrot.lane.b32.xlu0 %v2459, 15
      %v2475 = vpop.permute.xlu0 %2474
      %2476 = vrot.lane.b32.xlu0 %v2460, 15
      %v2477 = vpop.permute.xlu0 %2476
      %2478 = vrot.lane.b32.xlu0 %v2461, 15
      %v2479 = vpop.permute.xlu0 %2478
      %v2480 = vsel %vm635, %v2473, %v2475
      %v2481 = vsel %vm635, %v2477, %v2479
      %v2488 = vadd.f32 %v2462, %v2473
      %v2489 = vadd.f32 %v2463, %v2480
      %v2490 = vadd.f32 %v2464, %v2475
      %v2491 = vadd.f32 %v2465, %v2477
      %v2492 = vadd.f32 %v2466, %v2481
      %v2493 = vadd.f32 %v2467, %v2479
      %2494 = vst.msk [vmem:[#allocation2 + $0x8] sm:$0xff] %vm650, %v2488
      %2495 = vst [vmem:[#allocation2 + $0x10] sm:$0xff] %v2489
      %2496 = vst.msk [vmem:[#allocation2 + $0x18] sm:$0xff] %vm635, %v2490
      %2497 = vst.msk [vmem:[#allocation2 + $0x28] sm:$0xff] %vm650, %v2491
      %2498 = vst [vmem:[#allocation2 + $0x30] sm:$0xff] %v2492
      %2499 = vst.msk [vmem:[#allocation2 + $0x38] sm:$0xff] %vm635, %v2493
      %v2500 = vsel %vm523, %v2304, 0.0
      %v2501 = vsel %vm524, %v2306, 0.0
      %v2502 = vsel %vm523, %v2310, 0.0
      %v2503 = vsel %vm524, %v2312, 0.0
      %v2504 = vld [vmem:[#allocation2 + $0x8] sm:$0xff]
      %v2505 = vld [vmem:[#allocation2 + $0x10] sm:$0xff]
      %v2506 = vld [vmem:[#allocation2 + $0x18] sm:$0xff]
      %v2507 = vld [vmem:[#allocation2 + $0x28] sm:$0xff]
      %v2508 = vld [vmem:[#allocation2 + $0x30] sm:$0xff]
      %v2509 = vld [vmem:[#allocation2 + $0x38] sm:$0xff]
      %2514 = vrot.lane.b32.xlu0 %v2500, 1
      %v2515 = vpop.permute.xlu0 %2514
      %2516 = vrot.lane.b32.xlu0 %v2501, 1
      %v2517 = vpop.permute.xlu0 %2516
      %2518 = vrot.lane.b32.xlu0 %v2502, 1
      %v2519 = vpop.permute.xlu0 %2518
      %2520 = vrot.lane.b32.xlu0 %v2503, 1
      %v2521 = vpop.permute.xlu0 %2520
      %v2522 = vsel %vm679, %v2515, %v2517
      %v2523 = vsel %vm679, %v2519, %v2521
      %v2530 = vadd.f32 %v2504, %v2515
      %v2531 = vadd.f32 %v2505, %v2522
      %v2532 = vadd.f32 %v2506, %v2517
      %v2533 = vadd.f32 %v2507, %v2519
      %v2534 = vadd.f32 %v2508, %v2523
      %v2535 = vadd.f32 %v2509, %v2521
      %2536 = vst.msk [vmem:[#allocation2 + $0x8] sm:$0xff] %vm694, %v2530
      %2537 = vst [vmem:[#allocation2 + $0x10] sm:$0xff] %v2531
      %2538 = vst.msk [vmem:[#allocation2 + $0x18] sm:$0xff] %vm679, %v2532
      %2539 = vst.msk [vmem:[#allocation2 + $0x28] sm:$0xff] %vm694, %v2533
      %2540 = vst [vmem:[#allocation2 + $0x30] sm:$0xff] %v2534
      %2541 = vst.msk [vmem:[#allocation2 + $0x38] sm:$0xff] %vm679, %v2535
      %v2542 = vsel %vm611, %v2328, 0.0
      %v2543 = vsel %vm612, %v2330, 0.0
      %v2544 = vsel %vm611, %v2334, 0.0
      %v2545 = vsel %vm612, %v2336, 0.0
      %v2546 = vld [vmem:[#allocation2] sm:$0xff]
      %v2547 = vld [vmem:[#allocation2 + $0x8] sm:$0xff]
      %v2548 = vld [vmem:[#allocation2 + $0x10] sm:$0xff]
      %v2549 = vld [vmem:[#allocation2 + $0x20] sm:$0xff]
      %v2550 = vld [vmem:[#allocation2 + $0x28] sm:$0xff]
      %v2551 = vld [vmem:[#allocation2 + $0x30] sm:$0xff]
      %2556 = vrot.lane.b32.xlu0 %v2542, 127
      %v2557 = vpop.permute.xlu0 %2556
      %2558 = vrot.lane.b32.xlu0 %v2543, 127
      %v2559 = vpop.permute.xlu0 %2558
      %2560 = vrot.lane.b32.xlu0 %v2544, 127
      %v2561 = vpop.permute.xlu0 %2560
      %2562 = vrot.lane.b32.xlu0 %v2545, 127
      %v2563 = vpop.permute.xlu0 %2562
      %v2564 = vsel %vm723, %v2557, %v2559
      %v2565 = vsel %vm723, %v2561, %v2563
      %v2572 = vadd.f32 %v2546, %v2557
      %v2573 = vadd.f32 %v2547, %v2564
      %v2574 = vadd.f32 %v2548, %v2559
      %v2575 = vadd.f32 %v2549, %v2561
      %v2576 = vadd.f32 %v2550, %v2565
      %v2577 = vadd.f32 %v2551, %v2563
      %2578 = vst.msk [vmem:[#allocation2] sm:$0xff] %vm738, %v2572
      %2579 = vst [vmem:[#allocation2 + $0x8] sm:$0xff] %v2573
      %2580 = vst.msk [vmem:[#allocation2 + $0x10] sm:$0xff] %vm723, %v2574
      %2581 = vst.msk [vmem:[#allocation2 + $0x20] sm:$0xff] %vm738, %v2575
      %2582 = vst [vmem:[#allocation2 + $0x28] sm:$0xff] %v2576
      %2583 = vst.msk [vmem:[#allocation2 + $0x30] sm:$0xff] %vm723, %v2577
      %v2584 = vsel %vm523, %v2340, 0.0
      %v2585 = vsel %vm524, %v2342, 0.0
      %v2586 = vsel %vm523, %v2346, 0.0
      %v2587 = vsel %vm524, %v2348, 0.0
      %v2588 = vld [vmem:[#allocation2] sm:$0xff]
      %v2589 = vld [vmem:[#allocation2 + $0x8] sm:$0xff]
      %v2590 = vld [vmem:[#allocation2 + $0x10] sm:$0xff]
      %v2591 = vld [vmem:[#allocation2 + $0x20] sm:$0xff]
      %v2592 = vld [vmem:[#allocation2 + $0x28] sm:$0xff]
      %v2593 = vld [vmem:[#allocation2 + $0x30] sm:$0xff]
      %2598 = vrot.lane.b32.xlu0 %v2584, 113
      %v2599 = vpop.permute.xlu0 %2598
      %2600 = vrot.lane.b32.xlu0 %v2585, 113
      %v2601 = vpop.permute.xlu0 %2600
      %2602 = vrot.lane.b32.xlu0 %v2586, 113
      %v2603 = vpop.permute.xlu0 %2602
      %2604 = vrot.lane.b32.xlu0 %v2587, 113
      %v2605 = vpop.permute.xlu0 %2604
      %v2606 = vsel %vm767, %v2599, %v2601
      %v2607 = vsel %vm767, %v2603, %v2605
      %v2614 = vadd.f32 %v2588, %v2599
      %v2615 = vadd.f32 %v2589, %v2606
      %v2616 = vadd.f32 %v2590, %v2601
      %v2617 = vadd.f32 %v2591, %v2603
      %v2618 = vadd.f32 %v2592, %v2607
      %v2619 = vadd.f32 %v2593, %v2605
      %2620 = vst.msk [vmem:[#allocation2] sm:$0xff] %vm782, %v2614
      %2621 = vst [vmem:[#allocation2 + $0x8] sm:$0xff] %v2615
      %2622 = vst.msk [vmem:[#allocation2 + $0x10] sm:$0xff] %vm767, %v2616
      %2623 = vst.msk [vmem:[#allocation2 + $0x20] sm:$0xff] %vm782, %v2617
      %2624 = vst [vmem:[#allocation2 + $0x28] sm:$0xff] %v2618
      %2625 = vst.msk [vmem:[#allocation2 + $0x30] sm:$0xff] %vm767, %v2619
      %v2626 = vld [vmem:[#allocation2] sm:$0xff]
      %v2627 = vld [vmem:[#allocation2 + $0x8] sm:$0xff]
      %v2628 = vld [vmem:[#allocation2 + $0x10] sm:$0xff]
      %v2629 = vld [vmem:[#allocation2 + $0x20] sm:$0xff]
      %v2630 = vld [vmem:[#allocation2 + $0x28] sm:$0xff]
      %v2631 = vld [vmem:[#allocation2 + $0x30] sm:$0xff]
      %2636 = vrot.lane.b32.xlu0 %v2352, 112
      %v2637 = vpop.permute.xlu0 %2636
      %2638 = vrot.lane.b32.xlu0 %v2354, 112
      %v2639 = vpop.permute.xlu0 %2638
      %2640 = vrot.lane.b32.xlu0 %v2358, 112
      %v2641 = vpop.permute.xlu0 %2640
      %2642 = vrot.lane.b32.xlu0 %v2360, 112
      %v2643 = vpop.permute.xlu0 %2642
      %v2644 = vsel %vm807, %v2637, %v2639
      %v2645 = vsel %vm807, %v2641, %v2643
      %v2652 = vadd.f32 %v2626, %v2637
      %v2653 = vadd.f32 %v2627, %v2644
      %v2654 = vadd.f32 %v2628, %v2639
      %v2655 = vadd.f32 %v2629, %v2641
      %v2656 = vadd.f32 %v2630, %v2645
      %v2657 = vadd.f32 %v2631, %v2643
      %2658 = vst.msk [vmem:[#allocation2] sm:$0xff] %vm822, %v2652
      %2659 = vst [vmem:[#allocation2 + $0x8] sm:$0xff] %v2653
      %2660 = vst.msk [vmem:[#allocation2 + $0x10] sm:$0xff] %vm807, %v2654
      %2661 = vst.msk [vmem:[#allocation2 + $0x20] sm:$0xff] %vm822, %v2655
      %2662 = vst [vmem:[#allocation2 + $0x28] sm:$0xff] %v2656
      %2663 = vst.msk [vmem:[#allocation2 + $0x30] sm:$0xff] %vm807, %v2657
      %v2664 = vsel %vm611, %v2364, 0.0
      %v2665 = vsel %vm612, %v2366, 0.0
      %v2666 = vsel %vm611, %v2370, 0.0
      %v2667 = vsel %vm612, %v2372, 0.0
      %v2668 = vld [vmem:[#allocation2] sm:$0xff]
      %v2669 = vld [vmem:[#allocation2 + $0x8] sm:$0xff]
      %v2670 = vld [vmem:[#allocation2 + $0x10] sm:$0xff]
      %v2671 = vld [vmem:[#allocation2 + $0x20] sm:$0xff]
      %v2672 = vld [vmem:[#allocation2 + $0x28] sm:$0xff]
      %v2673 = vld [vmem:[#allocation2 + $0x30] sm:$0xff]
      %2678 = vrot.lane.b32.xlu0 %v2664, 111
      %v2679 = vpop.permute.xlu0 %2678
      %2680 = vrot.lane.b32.xlu0 %v2665, 111
      %v2681 = vpop.permute.xlu0 %2680
      %2682 = vrot.lane.b32.xlu0 %v2666, 111
      %v2683 = vpop.permute.xlu0 %2682
      %2684 = vrot.lane.b32.xlu0 %v2667, 111
      %v2685 = vpop.permute.xlu0 %2684
      %v2686 = vsel %vm851, %v2679, %v2681
      %v2687 = vsel %vm851, %v2683, %v2685
      %v2694 = vadd.f32 %v2668, %v2679
      %v2695 = vadd.f32 %v2669, %v2686
      %v2696 = vadd.f32 %v2670, %v2681
      %v2697 = vadd.f32 %v2671, %v2683
      %v2698 = vadd.f32 %v2672, %v2687
      %v2699 = vadd.f32 %v2673, %v2685
      %2700 = vst.msk [vmem:[#allocation2] sm:$0xff] %vm866, %v2694
      %2701 = vst [vmem:[#allocation2 + $0x8] sm:$0xff] %v2695
      %2702 = vst.msk [vmem:[#allocation2 + $0x10] sm:$0xff] %vm851, %v2696
      %2703 = vst.msk [vmem:[#allocation2 + $0x20] sm:$0xff] %vm866, %v2697
      %2704 = vst [vmem:[#allocation2 + $0x28] sm:$0xff] %v2698
      %2705 = vst.msk [vmem:[#allocation2 + $0x30] sm:$0xff] %vm851, %v2699
      %v2706 = vld [vmem:[#allocation2 + $0x8] sm:$0xff]
      %v2707 = vld [vmem:[#allocation2 + $0x10] sm:$0xff]
      %v2708 = vld [vmem:[#allocation2 + $0x28] sm:$0xff]
      %v2709 = vld [vmem:[#allocation2 + $0x30] sm:$0xff]
      %v2710 = vld [vmem:[%s8] sm:$0xff]
      %v2711 = vld [vmem:[%s8 + $0x8] sm:$0xff]
      %2713 = vset.pattern.permute.xlu0 0
      %2714 = vperm.xlu0 %2713, %v2710
      %v2715 = vpop.permute.xlu0 %2714
      %2718 = vset.pattern.permute.xlu0 0
      %2719 = vperm.xlu0 %2718, %v2711
      %v2720 = vpop.permute.xlu0 %2719
      %v2722 = vadd.f32 %v2706, %v2715
      %v2723 = vadd.f32 %v2707, %v2715
      %v2724 = vadd.f32 %v2708, %v2720
      %v2725 = vadd.f32 %v2709, %v2720
      %2726 = vst [vmem:[%s329 + $0x60] sm:$0xff] %v2722
      %2727 = vst [vmem:[%s329 + $0x68] sm:$0xff] %v2723
      %2728 = vst [vmem:[%s329 + $0x70] sm:$0xff] %v2724
      %2729 = vst [vmem:[%s329 + $0x78] sm:$0xff] %v2725
      %p2730 = scmp.lt.s32.totalorder %s20, 1
      %s2731 = scalar_select %p2730, %s20, 1
      %s2732 = smul.addr %s2731, 16
      %s2733 = smul.addr %s2732, 8
      %s2734 = scalar_lea.vmem %s9, %s2733
      // Predicated region
      $region57: #{encoder_forward.1} parent=55 // pred_check
        %p2735 = pneg %p232
      $region58: #{encoder_forward.1} parent=55 // pred_check_branch
        %2737 = sbr.rel (%p2735) target = $region60
      $region59: #{encoder_forward.1} parent=55 // pred_region
        _
      $region60: #{encoder_forward.1} parent=55 // pred_fallthru
        _
    $region56: #{encoder_forward.1} parent=5 // pred_fallthru
      _
    %p2738 = scmp.le.s32.totalorder 2, %s15
    // Predicated region
    $region61: #{encoder_forward.1} parent=5 // pred_check
      %p2739 = pneg %p2738
    $region62: #{encoder_forward.1} parent=5 // pred_check_branch
      %2741 = sbr.rel (%p2739) target = $region64
    $region63: #{encoder_forward.1} parent=5 // pred_region
      %s2742 = ssub.s32 %s15, 2
      // Predicated region
      $region65: #{encoder_forward.1} parent=63 // pred_check
        %p2743 = pneg %p238
      $region66: #{encoder_forward.1} parent=63 // pred_check_branch
        %2745 = sbr.rel (%p2743) target = $region68
      $region67: #{encoder_forward.1} parent=63 // pred_region
        %p2746 = scmp.lt.s32.totalorder %s21, 1
        %s2747 = scalar_select %p2746, %s21, 1
        %s2748 = smul.addr %s2747, 16
        %s2749 = smul.addr %s2748, 8
        %s2750 = scalar_lea.vmem %s9, %s2749
      $region68: #{encoder_forward.1} parent=63 // pred_fallthru
        _
    $region64: #{encoder_forward.1} parent=5 // pred_fallthru
      _
  $region6: #{encoder_forward.1} parent=0 // loop_footer
    %s19 = sadd.s32 1, %s15
  $region7: #{encoder_forward.1} parent=0 // loop_footer_branch
    %14 = sbr.rel target = $region3
  $region8: #{encoder_forward.1} parent=0 // loop_exit
    _

</llo_original>
